<compile_context>
chip_gen: v7x
topology: tpu7x:2x2x1
jax: 0.10.0
libtpu: 0.0.40
codegen_flags: <defaults>
</compile_context>

<pallas_src>
import functools
import math

import jax
import jax.numpy as jnp
import numpy as np
from jax.experimental import pallas as pl
from jax.experimental.pallas import tpu as pltpu

# ------------------------------------------------------------------ config --
N_FILTERS = 4            # n_filters
N_RES = 1                # n_residual_layers
RATIOS_DECODER = [2, 2]
RATIOS = list(reversed(RATIOS_DECODER))   # encoder uses reversed order
KERNEL = 3               # kernel_size
LAST_KERNEL = 3          # last_kernel_size
RES_KERNEL = 3           # residual_kernel_size
DIL_BASE = 2
DIM = 16                 # dimension
FREQ_BINS = 8            # frequency_bins
COMPRESS = 2
ALPHA = 1.0              # ELU alpha  (causal=False, pad_mode='reflect')

# pltpu.CompilerParams is the current name; keep a shim for older jax.
_CompilerParams = getattr(pltpu, "CompilerParams", None) or getattr(
    pltpu, "TPUCompilerParams")


def _round_up(x, m):
    return -(-x // m) * m


# ------------------------------------------------------------ host geometry --
def _same_pad(n, k, stride, dilation):
    """audiocraft StreamableConv 'same-ish' asymmetric padding (non-causal)."""
    eff = (k - 1) * dilation + 1
    pt = eff - stride
    n_frames = (n - eff + pt) / stride + 1
    ideal = (math.ceil(n_frames) - 1) * stride + (eff - pt)
    extra = int(ideal - n)
    pr = pt // 2
    return pt - pr, pr + extra


def _reflect(i, n):
    """PyTorch / numpy 'reflect' (edge not repeated) index mapping."""
    if n == 1:
        return 0
    p = 2 * (n - 1)
    i = i % p
    return i if i < n else p - i


class _Layout:
    """Layout of a conv's dense output (or the raw input): channels on
    sublanes, flat spatial index h*wrow + w on lanes, valid for h<H, w<W."""

    def __init__(self, h, w, wrow, length):
        self.H, self.W, self.wrow, self.L = h, w, wrow, length


class _ConvGeom:
    """Geometry of one StreamableConv{1,2}d layer.

    The layer's padded input is laid out phase-grouped (space-to-depth by the
    stride), so every tap (i, j) reads ONE contiguous lane window and strided
    convs only ever compute ~Ho*(Wo+1) output lanes instead of Hp*Wp."""

    def __init__(self, prev, kh, kw, stride, dilation):
        H, W = prev.H, prev.W
        plh, prh = _same_pad(H, kh, stride, dilation)
        plw, prw = _same_pad(W, kw, stride, dilation)
        assert 0 <= plh <= H - 1 and 0 <= prh <= H - 1, "reflect pad too large"
        assert 0 <= plw <= W - 1 and 0 <= prw <= W - 1, "reflect pad too large"
        s = stride
        Hp, Wp = H + plh + prh, W + plw + prw
        eff_h, eff_w = (kh - 1) * dilation + 1, (kw - 1) * dilation + 1
        Ho, Wo = (Hp - eff_h) // s + 1, (Wp - eff_w) // s + 1
        Hg = ((Ho - 1) * s + (kh - 1) * dilation) // s + 1
        Wg = ((Wo - 1) * s + (kw - 1) * dilation) // s + 1
        self.s, self.d = s, dilation
        self.plh, self.plw, self.Hp, self.Wp = plh, plw, Hp, Wp
        self.Ho, self.Wo, self.Hg, self.Wg = Ho, Wo, Hg, Wg
        self.ldense = Ho * Wg                 # lanes carried by the conv matmul
        shifts = []
        for i in range(kh):
            for j in range(kw):
                pi, bi = (i * dilation) % s, (i * dilation) // s
                pj, bj = (j * dilation) % s, (j * dilation) // s
                shifts.append(((pi * s + pj) * Hg + bi) * Wg + bj)
        self.shifts = tuple(shifts)
        self.ext = max(s * s * Hg * Wg, max(shifts) + self.ldense)
        self.out_layout = _Layout(Ho, Wo, Wg, self.ldense)
        # valid output (oh, ow) sits at padded pos (oh+plh, ow+plw) -> skip add
        self.skip_off = plh * Wg + plw if s == 1 else None

    def repack(self, prev, h_sel=None):
        """One-hot (prev.L, ext) matrix: `prev_dense @ P` builds this layer's
        phase-grouped reflect-padded input.  `h_sel` pins the source frequency
        row (used for the Flatten(1,2) -> 1-d transition).  Unmapped columns
        stay zero (only read by discarded dense anchors)."""
        P = np.zeros((prev.L, self.ext), np.float32)
        s = self.s
        for ph in range(s):
            for pw in range(s):
                for hg in range(self.Hg):
                    r = hg * s + ph
                    if r >= self.Hp:
                        continue
                    hsrc = (h_sel if h_sel is not None
                            else _reflect(r - self.plh, prev.H))
                    for wg in range(self.Wg):
                        c = wg * s + pw
                        if c >= self.Wp:
                            continue
                        wsrc = _reflect(c - self.plw, prev.W)
                        P[hsrc * prev.wrow + wsrc,
                          ((ph * s + pw) * self.Hg + hg) * self.Wg + wg] = 1.0
        return P


# -------------------------------------------------------------- parameters --
def init_params(key):
    keys = iter(jax.random.split(key, 64))
    params = {}

    def conv2d_p(cin, cout, k):
        w = jax.random.normal(next(keys), (cout, cin, k, k), jnp.float32) / np.sqrt(
            cin * k * k)
        b = 0.01 * jax.random.normal(next(keys), (cout,), jnp.float32)
        return (w, b)

    def conv1d_p(cin, cout, k):
        w = jax.random.normal(next(keys), (cout, cin, k), jnp.float32) / np.sqrt(
            cin * k)
        b = 0.01 * jax.random.normal(next(keys), (cout,), jnp.float32)
        return (w, b)

    params["conv0"] = conv2d_p(2, N_FILTERS, KERNEL)      # first conv: Cin=2
    mult = 1
    for i, ratio in enumerate(RATIOS):
        dim = mult * N_FILTERS
        hidden = dim // COMPRESS
        for j in range(N_RES):
            params[f"res_{i}_{j}_c1"] = conv2d_p(dim, hidden, RES_KERNEL)
            params[f"res_{i}_{j}_c2"] = conv2d_p(hidden, dim, 1)
        params[f"down_{i}"] = conv2d_p(dim, dim * 2, ratio * 2)
        mult *= 2
    hop = int(np.prod(RATIOS))
    freq_channels = FREQ_BINS // hop
    params["post1"] = conv1d_p(mult * N_FILTERS * freq_channels,
                               mult * N_FILTERS, LAST_KERNEL)
    params["post2"] = conv1d_p(mult * N_FILTERS, DIM, LAST_KERNEL)
    return params


# ------------------------------------------------------- plan / pre-packing --
def build_plan(params, h0, w0):
    """Pre-pack weights/biases/repack matrices into 3 aligned slabs and build
    the static per-layer schedule executed by the fused kernel."""
    w_blocks, b_blocks, p_blocks = [], [], []
    offs = {"w": 0, "b": 0, "p": 0}

    def add_w(mat):                                   # rows aligned to 16 (bf16)
        r0 = offs["w"]
        w_blocks.append((r0, np.asarray(mat, np.float32)))
        offs["w"] = r0 + _round_up(mat.shape[0], 16)
        return r0

    def add_b(vec):                                   # rows aligned to 8 (f32)
        r0 = offs["b"]
        v = np.asarray(vec, np.float32).reshape(-1, 1)
        b_blocks.append((r0, v))
        offs["b"] = r0 + _round_up(v.shape[0], 8)
        return r0

    def add_p(mat):                                   # cols aligned to 128
        c0 = offs["p"]
        p_blocks.append((c0, np.asarray(mat, np.float32)))
        offs["p"] = c0 + _round_up(mat.shape[1], 128)
        return c0

    def pack_w2d(w, cin_pad):       # (Cout,Cin,kh,kw) -> (Cout, kh*kw*cin_pad)
        w = np.asarray(w, np.float32)
        co, ci, kh, kw = w.shape
        out = np.zeros((co, kh * kw * cin_pad), np.float32)
        for i in range(kh):
            for j in range(kw):
                t = i * kw + j
                out[:, t * cin_pad:t * cin_pad + ci] = w[:, :, i, j]
        return out

    def pack_w1d(w, cin_pad, perm=None):   # (Cout,Cin,k) -> (Cout, k*cin_pad)
        w = np.asarray(w, np.float32)
        if perm is not None:
            w = w[:, perm, :]
        co, ci, k = w.shape
        out = np.zeros((co, k * cin_pad), np.float32)
        for t in range(k):
            out[:, t * cin_pad:t * cin_pad + ci] = w[:, :, t]
        return out

    plan = []
    mx = {"cin": 8, "ext": 128, "K": 16, "ld": 128, "prow": 16, "res": 8}

    def conv_step(g, w_packed, bias, parts, cin, cin_pad, elu, save_skip):
        K = len(g.shifts) * cin_pad
        r0, b0 = add_w(w_packed), add_b(bias)
        mx["cin"] = max(mx["cin"], cin)
        mx["ext"] = max(mx["ext"], g.ext)
        mx["K"] = max(mx["K"], K)
        mx["ld"] = max(mx["ld"], g.ldense)
        for (_, prows, _, _, _) in parts:
            mx["prow"] = max(mx["prow"], prows)
        if save_skip:
            mx["res"] = max(mx["res"], cin)
        plan.append(("conv", dict(
            elu=elu, parts=tuple(parts), shifts=g.shifts, cin=cin,
            cin_pad=cin_pad, ldense=g.ldense, w_row=r0,
            cout=w_packed.shape[0], K=K, b_row=b0, save_skip=save_skip)))

    # ---- first conv (no activation in front) --------------------------------
    lay = _Layout(h0, w0, w0, h0 * w0)
    g = _ConvGeom(lay, KERNEL, KERNEL, 1, 1)
    cp = _round_up(2, 8)
    parts = [(add_p(g.repack(lay)), lay.L, g.ext, 0, 2)]
    w, b = params["conv0"]
    conv_step(g, pack_w2d(w, cp), b, parts, 2, cp, elu=False, save_skip=False)
    lay = g.out_layout

    # ---- residual stages + downsampling --------------------------------------
    mult = 1
    for i, ratio in enumerate(RATIOS):
        dim = mult * N_FILTERS
        hidden = dim // COMPRESS
        for j in range(N_RES):
            g = _ConvGeom(lay, RES_KERNEL, RES_KERNEL, 1, DIL_BASE ** j)
            cp = _round_up(dim, 8)
            parts = [(add_p(g.repack(lay)), lay.L, g.ext, 0, dim)]
            w1, b1 = params[f"res_{i}_{j}_c1"]
            conv_step(g, pack_w2d(w1, cp), b1, parts, dim, cp,
                      elu=True, save_skip=True)
            w2, b2 = params[f"res_{i}_{j}_c2"]
            plan.append(("res1x1", dict(
                w_row=add_w(pack_w2d(w2, hidden)), cout=dim, k=hidden,
                b_row=add_b(b2), skip_off=g.skip_off, ldense=g.ldense)))
            lay = g.out_layout
        g = _ConvGeom(lay, ratio * 2, ratio * 2, ratio, 1)
        cp = _round_up(dim, 8)
        parts = [(add_p(g.repack(lay)), lay.L, g.ext, 0, dim)]
        wd, bd = params[f"down_{i}"]
        conv_step(g, pack_w2d(wd, cp), bd, parts, dim, cp,
                  elu=True, save_skip=False)
        lay = g.out_layout
        mult *= 2

    # ---- Flatten(1, 2): torch flattened channel index = c*H + h --------------
    c2 = mult * N_FILTERS
    hc = lay.H
    g = _ConvGeom(_Layout(1, lay.W, lay.wrow, lay.L), 1, LAST_KERNEL, 1, 1)
    parts = [(add_p(g.repack(lay, h_sel=h)), lay.L, g.ext, h * c2, c2)
             for h in range(hc)]
    cin = c2 * hc
    cp = _round_up(cin, 8)
    # buffer row r = h*c2 + c  <->  torch flattened channel c*hc + h
    perm = [(r % c2) * hc + (r // c2) for r in range(cin)]
    w, b = params["post1"]
    conv_step(g, pack_w1d(w, cp, perm), b, parts, cin, cp,
              elu=True, save_skip=False)
    lay = g.out_layout

    # ---- final 1-d conv -------------------------------------------------------
    g = _ConvGeom(_Layout(1, lay.W, lay.wrow, lay.L), 1, LAST_KERNEL, 1, 1)
    cp = _round_up(c2, 8)
    parts = [(add_p(g.repack(lay)), lay.L, g.ext, 0, c2)]
    w, b = params["post2"]
    conv_step(g, pack_w1d(w, cp), b, parts, c2, cp, elu=True, save_skip=False)
    lay = g.out_layout

    plan.append(("output", lay.W))

    # ---- assemble the three packed operand slabs -----------------------------
    w_width = _round_up(max(m.shape[1] for _, m in w_blocks), 128)
    wslab = np.zeros((_round_up(offs["w"], 16), w_width), np.float32)
    for r0, m in w_blocks:
        wslab[r0:r0 + m.shape[0], 0:m.shape[1]] = m
    bslab = np.zeros((_round_up(offs["b"], 8), 1), np.float32)
    for r0, m in b_blocks:
        bslab[r0:r0 + m.shape[0], :] = m
    pslab = np.zeros((_round_up(mx["prow"], 16), max(offs["p"], 128)),
                     np.float32)
    for c0, m in p_blocks:
        pslab[0:m.shape[0], c0:c0 + m.shape[1]] = m

    meta = dict(
        t_out=lay.W,
        act_shape=(_round_up(mx["cin"], 16), _round_up(mx["ext"], 128)),
        stage_shape=(_round_up(mx["K"], 16), _round_up(mx["ld"], 128)),
        res_shape=(_round_up(mx["res"], 8), _round_up(mx["ext"], 128)),
    )
    operands = (jnp.asarray(wslab, jnp.bfloat16),   # packed conv weights
                jnp.asarray(bslab, jnp.float32),    # packed biases
                jnp.asarray(pslab, jnp.bfloat16))   # packed one-hot repacks
    return tuple(plan), operands, meta


# --------------------------------------------------------------- the kernel --
def _elu(v):
    # ELU; exp(min(x, 0)) keeps the untaken branch from overflowing.
    return jnp.where(v > 0, v, ALPHA * (jnp.exp(jnp.minimum(v, 0.0)) - 1.0))


def _encoder_kernel(x_ref, w_ref, b_ref, p_ref, out_ref,
                    act_ref, stage_ref, res_ref, *, plan):
    # Pad rows of the staging buffer are multiplied by zero weight columns,
    # but they must hold *finite* data -> zero the buffer once per grid step.
    stage_ref[...] = jnp.zeros_like(stage_ref)

    cur = x_ref[0]                      # (C_in0, H0*W0) f32, flat lane layout
    for kind, cfg in plan:
        if kind == "conv":
            lhs = cur.astype(jnp.bfloat16)
            # reflect-pad / stride (space-to-depth) / flatten glue: bf16 one-hot
            # matmul(s); activations are ELU'd and cast to bf16 exactly once.
            for (pc, prows, ext, coff, crows) in cfg["parts"]:
                pr = jnp.dot(lhs, p_ref[0:prows, pc:pc + ext],
                             preferred_element_type=jnp.float32)
                if cfg["save_skip"]:
                    res_ref[0:crows, 0:ext] = pr        # pre-ELU skip value
                a = _elu(pr) if cfg["elu"] else pr
                act_ref[coff:coff + crows, 0:ext] = a.astype(jnp.bfloat16)
            # stack all taps along sublanes -> ONE MXU matmul for the conv
            cin, cp, ld = cfg["cin"], cfg["cin_pad"], cfg["ldense"]
            for t, sh in enumerate(cfg["shifts"]):
                stage_ref[t * cp:t * cp + cin, 0:ld] = \
                    act_ref[0:cin, sh:sh + ld]
            r0, co, K = cfg["w_row"], cfg["cout"], cfg["K"]
            acc = jnp.dot(w_ref[r0:r0 + co, 0:K], stage_ref[0:K, 0:ld],
                          preferred_element_type=jnp.float32)
            cur = acc + b_ref[cfg["b_row"]:cfg["b_row"] + co, 0:1]
        elif kind == "res1x1":          # residual block: ELU -> 1x1 conv -> +skip
            r0, co, k = cfg["w_row"], cfg["cout"], cfg["k"]
            z = _elu(cur).astype(jnp.bfloat16)
            y = jnp.dot(w_ref[r0:r0 + co, 0:k], z,
                        preferred_element_type=jnp.float32)
            y = y + b_ref[cfg["b_row"]:cfg["b_row"] + co, 0:1]
            off, ld = cfg["skip_off"], cfg["ldense"]
            cur = y + res_ref[0:co, off:off + ld]
        elif kind == "output":
            out_ref[0] = cur[:, 0:cfg].astype(out_ref.dtype)
        else:
            raise ValueError(f"unknown plan step {kind}")


# ------------------------------------------------------------------ wrapper --
def make_encoder(params, freq_bins, time_steps):
    plan, (wslab, bslab, pslab), meta = build_plan(params, freq_bins, time_steps)
    kernel = functools.partial(_encoder_kernel, plan=plan)
    t_out = meta["t_out"]
    l0 = freq_bins * time_steps

    def forward(x_nchw):
        b, c0 = x_nchw.shape[0], x_nchw.shape[1]
        x_flat = x_nchw.reshape(b, c0, l0).astype(jnp.float32)
        return pl.pallas_call(
            kernel,
            grid=(b,),
            in_specs=[
                pl.BlockSpec((1, c0, l0), lambda i: (i, 0, 0)),
                pl.BlockSpec(wslab.shape, lambda i: (0, 0)),
                pl.BlockSpec(bslab.shape, lambda i: (0, 0)),
                pl.BlockSpec(pslab.shape, lambda i: (0, 0)),
            ],
            out_specs=pl.BlockSpec((1, DIM, t_out), lambda i: (i, 0, 0)),
            out_shape=jax.ShapeDtypeStruct((b, DIM, t_out), jnp.float32),
            scratch_shapes=[
                pltpu.VMEM(meta["act_shape"], jnp.bfloat16),    # padded acts
                pltpu.VMEM(meta["stage_shape"], jnp.bfloat16),  # tap staging
                pltpu.VMEM(meta["res_shape"], jnp.float32),     # skip values
            ],
            compiler_params=_CompilerParams(
                dimension_semantics=("parallel",)),
        )(x_flat, wslab, bslab, pslab)

    return jax.jit(forward)


# --------------------------------------------------------------------- main --
if __name__ == "__main__":
    key = jax.random.PRNGKey(0)
    k_in, k_par = jax.random.split(key)

    B, CIN, F, T = 2, 2, FREQ_BINS, 16
    x = jax.random.normal(k_in, (B, CIN, F, T), jnp.float32)
    params = init_params(k_par)

    forward = make_encoder(params, F, T)
    out = jax.block_until_ready(forward(x))      # (B, DIM, T // hop)

    hop = int(np.prod(RATIOS))
    assert out.shape == (B, DIM, T // hop), out.shape
    assert bool(jnp.all(jnp.isfinite(out)))
    print("KERNEL_OK")
</pallas_src>

<mosaic_0001>
module attributes {stable_mosaic.version = 11 : i64} {
  func.func @_encoder_kernel(%arg0: i32, %arg1: memref<1x2x128xf32, #tpu.memory_space<vmem>>, %arg2: memref<144x128xbf16, #tpu.memory_space<vmem>>, %arg3: memref<96x1xf32, #tpu.memory_space<vmem>>, %arg4: memref<144x1408xbf16, #tpu.memory_space<vmem>>, %arg5: memref<1x16x4xf32, #tpu.memory_space<vmem>>, %arg6: memref<32x256xbf16, #tpu.memory_space<vmem>>, %arg7: memref<128x256xbf16, #tpu.memory_space<vmem>>, %arg8: memref<8x256xf32, #tpu.memory_space<vmem>>) attributes {dimension_semantics = [#tpu.dimension_semantics<parallel>], iteration_bounds = array<i64: 2>, scalar_prefetch = 0 : i64, scratch_operands = 3 : i64, tpu.core_type = #tpu.core_type<tc>, window_params = [{transform_indices = @transform_0, window_bounds = array<i64: 1, 2, 128>}, {pipeline_mode = #tpu.pipeline_mode<synchronous>, transform_indices = @transform_1, window_bounds = array<i64: 144, 128>}, {pipeline_mode = #tpu.pipeline_mode<synchronous>, transform_indices = @transform_2, window_bounds = array<i64: 96, 1>}, {pipeline_mode = #tpu.pipeline_mode<synchronous>, transform_indices = @transform_3, window_bounds = array<i64: 144, 1408>}, {transform_indices = @transform_4, window_bounds = array<i64: 1, 16, 4>}]} {
    %cst = arith.constant 0.000000e+00 : bf16
    %0 = vector.broadcast %cst : bf16 to vector<128x256xbf16>
    %c0 = arith.constant 0 : index
    %c0_0 = arith.constant 0 : index
    %1 = vector.load %arg7[%c0, %c0_0] : memref<128x256xbf16, #tpu.memory_space<vmem>>, vector<128x256xbf16>
    tpu.vector_store %arg7[%c0, %c0_0], %0 {strides = array<i32>} : memref<128x256xbf16, #tpu.memory_space<vmem>>, vector<128x256xbf16>,
    %c0_1 = arith.constant 0 : index
    %c0_2 = arith.constant 0 : index
    %c0_3 = arith.constant 0 : index
    %2 = vector.load %arg1[%c0_1, %c0_2, %c0_3] : memref<1x2x128xf32, #tpu.memory_space<vmem>>, vector<1x2x128xf32>
    %3 = vector.shape_cast %2 : vector<1x2x128xf32> to vector<2x128xf32>
    %4 = arith.truncf %3 : vector<2x128xf32> to vector<2x128xbf16>
    %c0_4 = arith.constant 0 : index
    %c0_5 = arith.constant 0 : index
    %5 = vector.load %arg4[%c0_4, %c0_5] : memref<144x1408xbf16, #tpu.memory_space<vmem>>, vector<128x182xbf16>
    %cst_6 = arith.constant dense<0.000000e+00> : vector<2x182xf32>
    %6 = tpu.matmul %4, %5, %cst_6 {dimension_numbers = #tpu.dot_dimension_numbers<[1], [0], [0], [1], [0, 0, 1, 1], [], []>} : vector<2x128xbf16>, vector<128x182xbf16>, vector<2x182xf32> -> vector<2x182xf32>
    %7 = arith.truncf %6 : vector<2x182xf32> to vector<2x182xbf16>
    %c0_7 = arith.constant 0 : index
    %c0_8 = arith.constant 0 : index
    %8 = vector.load %arg6[%c0_7, %c0_8] : memref<32x256xbf16, #tpu.memory_space<vmem>>, vector<2x182xbf16>
    tpu.vector_store %arg6[%c0_7, %c0_8], %7 {strides = array<i32>} : memref<32x256xbf16, #tpu.memory_space<vmem>>, vector<2x182xbf16>,
    %c0_9 = arith.constant 0 : index
    %c0_10 = arith.constant 0 : index
    %9 = vector.load %arg6[%c0_9, %c0_10] : memref<32x256xbf16, #tpu.memory_space<vmem>>, vector<2x144xbf16>
    %c0_11 = arith.constant 0 : index
    %c0_12 = arith.constant 0 : index
    %10 = vector.load %arg7[%c0_11, %c0_12] : memref<128x256xbf16, #tpu.memory_space<vmem>>, vector<2x144xbf16>
    tpu.vector_store %arg7[%c0_11, %c0_12], %9 {strides = array<i32>} : memref<128x256xbf16, #tpu.memory_space<vmem>>, vector<2x144xbf16>,
    %c0_13 = arith.constant 0 : index
    %c1 = arith.constant 1 : index
    %11 = vector.load %arg6[%c0_13, %c1] : memref<32x256xbf16, #tpu.memory_space<vmem>>, vector<2x144xbf16>
    %c8 = arith.constant 8 : index
    %c0_14 = arith.constant 0 : index
    %12 = vector.load %arg7[%c8, %c0_14] : memref<128x256xbf16, #tpu.memory_space<vmem>>, vector<2x144xbf16>
    tpu.vector_store %arg7[%c8, %c0_14], %11 {strides = array<i32>} : memref<128x256xbf16, #tpu.memory_space<vmem>>, vector<2x144xbf16>,
    %c0_15 = arith.constant 0 : index
    %c2 = arith.constant 2 : index
    %13 = vector.load %arg6[%c0_15, %c2] : memref<32x256xbf16, #tpu.memory_space<vmem>>, vector<2x144xbf16>
    %c16 = arith.constant 16 : index
    %c0_16 = arith.constant 0 : index
    %14 = vector.load %arg7[%c16, %c0_16] : memref<128x256xbf16, #tpu.memory_space<vmem>>, vector<2x144xbf16>
    tpu.vector_store %arg7[%c16, %c0_16], %13 {strides = array<i32>} : memref<128x256xbf16, #tpu.memory_space<vmem>>, vector<2x144xbf16>,
    %c0_17 = arith.constant 0 : index
    %c18 = arith.constant 18 : index
    %15 = vector.load %arg6[%c0_17, %c18] : memref<32x256xbf16, #tpu.memory_space<vmem>>, vector<2x144xbf16>
    %c24 = arith.constant 24 : index
    %c0_18 = arith.constant 0 : index
    %16 = vector.load %arg7[%c24, %c0_18] : memref<128x256xbf16, #tpu.memory_space<vmem>>, vector<2x144xbf16>
    tpu.vector_store %arg7[%c24, %c0_18], %15 {strides = array<i32>} : memref<128x256xbf16, #tpu.memory_space<vmem>>, vector<2x144xbf16>,
    %c0_19 = arith.constant 0 : index
    %c19 = arith.constant 19 : index
    %17 = vector.load %arg6[%c0_19, %c19] : memref<32x256xbf16, #tpu.memory_space<vmem>>, vector<2x144xbf16>
    %c32 = arith.constant 32 : index
    %c0_20 = arith.constant 0 : index
    %18 = vector.load %arg7[%c32, %c0_20] : memref<128x256xbf16, #tpu.memory_space<vmem>>, vector<2x144xbf16>
    tpu.vector_store %arg7[%c32, %c0_20], %17 {strides = array<i32>} : memref<128x256xbf16, #tpu.memory_space<vmem>>, vector<2x144xbf16>,
    %c0_21 = arith.constant 0 : index
    %c20 = arith.constant 20 : index
    %19 = vector.load %arg6[%c0_21, %c20] : memref<32x256xbf16, #tpu.memory_space<vmem>>, vector<2x144xbf16>
    %c40 = arith.constant 40 : index
    %c0_22 = arith.constant 0 : index
    %20 = vector.load %arg7[%c40, %c0_22] : memref<128x256xbf16, #tpu.memory_space<vmem>>, vector<2x144xbf16>
    tpu.vector_store %arg7[%c40, %c0_22], %19 {strides = array<i32>} : memref<128x256xbf16, #tpu.memory_space<vmem>>, vector<2x144xbf16>,
    %c0_23 = arith.constant 0 : index
    %c36 = arith.constant 36 : index
    %21 = vector.load %arg6[%c0_23, %c36] : memref<32x256xbf16, #tpu.memory_space<vmem>>, vector<2x144xbf16>
    %c48 = arith.constant 48 : index
    %c0_24 = arith.constant 0 : index
    %22 = vector.load %arg7[%c48, %c0_24] : memref<128x256xbf16, #tpu.memory_space<vmem>>, vector<2x144xbf16>
    tpu.vector_store %arg7[%c48, %c0_24], %21 {strides = array<i32>} : memref<128x256xbf16, #tpu.memory_space<vmem>>, vector<2x144xbf16>,
    %c0_25 = arith.constant 0 : index
    %c37 = arith.constant 37 : index
    %23 = vector.load %arg6[%c0_25, %c37] : memref<32x256xbf16, #tpu.memory_space<vmem>>, vector<2x144xbf16>
    %c56 = arith.constant 56 : index
    %c0_26 = arith.constant 0 : index
    %24 = vector.load %arg7[%c56, %c0_26] : memref<128x256xbf16, #tpu.memory_space<vmem>>, vector<2x144xbf16>
    tpu.vector_store %arg7[%c56, %c0_26], %23 {strides = array<i32>} : memref<128x256xbf16, #tpu.memory_space<vmem>>, vector<2x144xbf16>,
    %c0_27 = arith.constant 0 : index
    %c38 = arith.constant 38 : index
    %25 = vector.load %arg6[%c0_27, %c38] : memref<32x256xbf16, #tpu.memory_space<vmem>>, vector<2x144xbf16>
    %c64 = arith.constant 64 : index
    %c0_28 = arith.constant 0 : index
    %26 = vector.load %arg7[%c64, %c0_28] : memref<128x256xbf16, #tpu.memory_space<vmem>>, vector<2x144xbf16>
    tpu.vector_store %arg7[%c64, %c0_28], %25 {strides = array<i32>} : memref<128x256xbf16, #tpu.memory_space<vmem>>, vector<2x144xbf16>,
    %c0_29 = arith.constant 0 : index
    %c0_30 = arith.constant 0 : index
    %27 = vector.load %arg2[%c0_29, %c0_30] : memref<144x128xbf16, #tpu.memory_space<vmem>>, vector<4x72xbf16>
    %c0_31 = arith.constant 0 : index
    %c0_32 = arith.constant 0 : index
    %28 = vector.load %arg7[%c0_31, %c0_32] : memref<128x256xbf16, #tpu.memory_space<vmem>>, vector<72x144xbf16>
    %cst_33 = arith.constant dense<0.000000e+00> : vector<4x144xf32>
    %29 = tpu.matmul %27, %28, %cst_33 {dimension_numbers = #tpu.dot_dimension_numbers<[1], [0], [0], [1], [0, 0, 1, 1], [], []>} : vector<4x72xbf16>, vector<72x144xbf16>, vector<4x144xf32> -> vector<4x144xf32>
    %c0_34 = arith.constant 0 : index
    %c0_35 = arith.constant 0 : index
    %30 = vector.load %arg3[%c0_34, %c0_35] : memref<96x1xf32, #tpu.memory_space<vmem>>, vector<4x1xf32>
    %31 = vector.broadcast %30 : vector<4x1xf32> to vector<4x144xf32>
    %32 = arith.addf %29, %31 : vector<4x144xf32>
    %33 = arith.truncf %32 : vector<4x144xf32> to vector<4x144xbf16>
    %c0_36 = arith.constant 0 : index
    %c256 = arith.constant 256 : index
    %34 = vector.load %arg4[%c0_36, %c256] : memref<144x1408xbf16, #tpu.memory_space<vmem>>, vector<144x182xbf16>
    %cst_37 = arith.constant dense<0.000000e+00> : vector<4x182xf32>
    %35 = tpu.matmul %33, %34, %cst_37 {dimension_numbers = #tpu.dot_dimension_numbers<[1], [0], [0], [1], [0, 0, 1, 1], [], []>} : vector<4x144xbf16>, vector<144x182xbf16>, vector<4x182xf32> -> vector<4x182xf32>
    %c0_38 = arith.constant 0 : index
    %c0_39 = arith.constant 0 : index
    %36 = vector.load %arg8[%c0_38, %c0_39] : memref<8x256xf32, #tpu.memory_space<vmem>>, vector<4x182xf32>
    tpu.vector_store %arg8[%c0_38, %c0_39], %35 {strides = array<i32>} : memref<8x256xf32, #tpu.memory_space<vmem>>, vector<4x182xf32>,
    %cst_40 = arith.constant 0.000000e+00 : f32
    %37 = vector.broadcast %cst_40 : f32 to vector<4x182xf32>
    %38 = arith.cmpf ogt, %35, %37 : vector<4x182xf32>
    %cst_41 = arith.constant 0.000000e+00 : f32
    %39 = vector.broadcast %cst_41 : f32 to vector<4x182xf32>
    %40 = arith.minimumf %35, %39 : vector<4x182xf32>
    %41 = math.exp %40 : vector<4x182xf32>
    %cst_42 = arith.constant 1.000000e+00 : f32
    %42 = vector.broadcast %cst_42 : f32 to vector<4x182xf32>
    %43 = arith.subf %41, %42 : vector<4x182xf32>
    %cst_43 = arith.constant 1.000000e+00 : f32
    %44 = vector.broadcast %cst_43 : f32 to vector<4x182xf32>
    %45 = arith.mulf %44, %43 : vector<4x182xf32>
    %46 = arith.select %38, %35, %45 : vector<4x182xi1>, vector<4x182xf32>
    %47 = arith.truncf %46 : vector<4x182xf32> to vector<4x182xbf16>
    %c0_44 = arith.constant 0 : index
    %c0_45 = arith.constant 0 : index
    %48 = vector.load %arg6[%c0_44, %c0_45] : memref<32x256xbf16, #tpu.memory_space<vmem>>, vector<4x182xbf16>
    tpu.vector_store %arg6[%c0_44, %c0_45], %47 {strides = array<i32>} : memref<32x256xbf16, #tpu.memory_space<vmem>>, vector<4x182xbf16>,
    %c0_46 = arith.constant 0 : index
    %c0_47 = arith.constant 0 : index
    %49 = vector.load %arg6[%c0_46, %c0_47] : memref<32x256xbf16, #tpu.memory_space<vmem>>, vector<4x144xbf16>
    %c0_48 = arith.constant 0 : index
    %c0_49 = arith.constant 0 : index
    %50 = vector.load %arg7[%c0_48, %c0_49] : memref<128x256xbf16, #tpu.memory_space<vmem>>, vector<4x144xbf16>
    tpu.vector_store %arg7[%c0_48, %c0_49], %49 {strides = array<i32>} : memref<128x256xbf16, #tpu.memory_space<vmem>>, vector<4x144xbf16>,
    %c0_50 = arith.constant 0 : index
    %c1_51 = arith.constant 1 : index
    %51 = vector.load %arg6[%c0_50, %c1_51] : memref<32x256xbf16, #tpu.memory_space<vmem>>, vector<4x144xbf16>
    %c8_52 = arith.constant 8 : index
    %c0_53 = arith.constant 0 : index
    %52 = vector.load %arg7[%c8_52, %c0_53] : memref<128x256xbf16, #tpu.memory_space<vmem>>, vector<4x144xbf16>
    tpu.vector_store %arg7[%c8_52, %c0_53], %51 {strides = array<i32>} : memref<128x256xbf16, #tpu.memory_space<vmem>>, vector<4x144xbf16>,
    %c0_54 = arith.constant 0 : index
    %c2_55 = arith.constant 2 : index
    %53 = vector.load %arg6[%c0_54, %c2_55] : memref<32x256xbf16, #tpu.memory_space<vmem>>, vector<4x144xbf16>
    %c16_56 = arith.constant 16 : index
    %c0_57 = arith.constant 0 : index
    %54 = vector.load %arg7[%c16_56, %c0_57] : memref<128x256xbf16, #tpu.memory_space<vmem>>, vector<4x144xbf16>
    tpu.vector_store %arg7[%c16_56, %c0_57], %53 {strides = array<i32>} : memref<128x256xbf16, #tpu.memory_space<vmem>>, vector<4x144xbf16>,
    %c0_58 = arith.constant 0 : index
    %c18_59 = arith.constant 18 : index
    %55 = vector.load %arg6[%c0_58, %c18_59] : memref<32x256xbf16, #tpu.memory_space<vmem>>, vector<4x144xbf16>
    %c24_60 = arith.constant 24 : index
    %c0_61 = arith.constant 0 : index
    %56 = vector.load %arg7[%c24_60, %c0_61] : memref<128x256xbf16, #tpu.memory_space<vmem>>, vector<4x144xbf16>
    tpu.vector_store %arg7[%c24_60, %c0_61], %55 {strides = array<i32>} : memref<128x256xbf16, #tpu.memory_space<vmem>>, vector<4x144xbf16>,
    %c0_62 = arith.constant 0 : index
    %c19_63 = arith.constant 19 : index
    %57 = vector.load %arg6[%c0_62, %c19_63] : memref<32x256xbf16, #tpu.memory_space<vmem>>, vector<4x144xbf16>
    %c32_64 = arith.constant 32 : index
    %c0_65 = arith.constant 0 : index
    %58 = vector.load %arg7[%c32_64, %c0_65] : memref<128x256xbf16, #tpu.memory_space<vmem>>, vector<4x144xbf16>
    tpu.vector_store %arg7[%c32_64, %c0_65], %57 {strides = array<i32>} : memref<128x256xbf16, #tpu.memory_space<vmem>>, vector<4x144xbf16>,
    %c0_66 = arith.constant 0 : index
    %c20_67 = arith.constant 20 : index
    %59 = vector.load %arg6[%c0_66, %c20_67] : memref<32x256xbf16, #tpu.memory_space<vmem>>, vector<4x144xbf16>
    %c40_68 = arith.constant 40 : index
    %c0_69 = arith.constant 0 : index
    %60 = vector.load %arg7[%c40_68, %c0_69] : memref<128x256xbf16, #tpu.memory_space<vmem>>, vector<4x144xbf16>
    tpu.vector_store %arg7[%c40_68, %c0_69], %59 {strides = array<i32>} : memref<128x256xbf16, #tpu.memory_space<vmem>>, vector<4x144xbf16>,
    %c0_70 = arith.constant 0 : index
    %c36_71 = arith.constant 36 : index
    %61 = vector.load %arg6[%c0_70, %c36_71] : memref<32x256xbf16, #tpu.memory_space<vmem>>, vector<4x144xbf16>
    %c48_72 = arith.constant 48 : index
    %c0_73 = arith.constant 0 : index
    %62 = vector.load %arg7[%c48_72, %c0_73] : memref<128x256xbf16, #tpu.memory_space<vmem>>, vector<4x144xbf16>
    tpu.vector_store %arg7[%c48_72, %c0_73], %61 {strides = array<i32>} : memref<128x256xbf16, #tpu.memory_space<vmem>>, vector<4x144xbf16>,
    %c0_74 = arith.constant 0 : index
    %c37_75 = arith.constant 37 : index
    %63 = vector.load %arg6[%c0_74, %c37_75] : memref<32x256xbf16, #tpu.memory_space<vmem>>, vector<4x144xbf16>
    %c56_76 = arith.constant 56 : index
    %c0_77 = arith.constant 0 : index
    %64 = vector.load %arg7[%c56_76, %c0_77] : memref<128x256xbf16, #tpu.memory_space<vmem>>, vector<4x144xbf16>
    tpu.vector_store %arg7[%c56_76, %c0_77], %63 {strides = array<i32>} : memref<128x256xbf16, #tpu.memory_space<vmem>>, vector<4x144xbf16>,
    %c0_78 = arith.constant 0 : index
    %c38_79 = arith.constant 38 : index
    %65 = vector.load %arg6[%c0_78, %c38_79] : memref<32x256xbf16, #tpu.memory_space<vmem>>, vector<4x144xbf16>
    %c64_80 = arith.constant 64 : index
    %c0_81 = arith.constant 0 : index
    %66 = vector.load %arg7[%c64_80, %c0_81] : memref<128x256xbf16, #tpu.memory_space<vmem>>, vector<4x144xbf16>
    tpu.vector_store %arg7[%c64_80, %c0_81], %65 {strides = array<i32>} : memref<128x256xbf16, #tpu.memory_space<vmem>>, vector<4x144xbf16>,
    %c16_82 = arith.constant 16 : index
    %c0_83 = arith.constant 0 : index
    %67 = vector.load %arg2[%c16_82, %c0_83] : memref<144x128xbf16, #tpu.memory_space<vmem>>, vector<2x72xbf16>
    %c0_84 = arith.constant 0 : index
    %c0_85 = arith.constant 0 : index
    %68 = vector.load %arg7[%c0_84, %c0_85] : memref<128x256xbf16, #tpu.memory_space<vmem>>, vector<72x144xbf16>
    %cst_86 = arith.constant dense<0.000000e+00> : vector<2x144xf32>
    %69 = tpu.matmul %67, %68, %cst_86 {dimension_numbers = #tpu.dot_dimension_numbers<[1], [0], [0], [1], [0, 0, 1, 1], [], []>} : vector<2x72xbf16>, vector<72x144xbf16>, vector<2x144xf32> -> vector<2x144xf32>
    %c8_87 = arith.constant 8 : index
    %c0_88 = arith.constant 0 : index
    %70 = vector.load %arg3[%c8_87, %c0_88] : memref<96x1xf32, #tpu.memory_space<vmem>>, vector<2x1xf32>
    %71 = vector.broadcast %70 : vector<2x1xf32> to vector<2x144xf32>
    %72 = arith.addf %69, %71 : vector<2x144xf32>
    %cst_89 = arith.constant 0.000000e+00 : f32
    %73 = vector.broadcast %cst_89 : f32 to vector<2x144xf32>
    %74 = arith.cmpf ogt, %72, %73 : vector<2x144xf32>
    %cst_90 = arith.constant 0.000000e+00 : f32
    %75 = vector.broadcast %cst_90 : f32 to vector<2x144xf32>
    %76 = arith.minimumf %72, %75 : vector<2x144xf32>
    %77 = math.exp %76 : vector<2x144xf32>
    %cst_91 = arith.constant 1.000000e+00 : f32
    %78 = vector.broadcast %cst_91 : f32 to vector<2x144xf32>
    %79 = arith.subf %77, %78 : vector<2x144xf32>
    %cst_92 = arith.constant 1.000000e+00 : f32
    %80 = vector.broadcast %cst_92 : f32 to vector<2x144xf32>
    %81 = arith.mulf %80, %79 : vector<2x144xf32>
    %82 = arith.select %74, %72, %81 : vector<2x144xi1>, vector<2x144xf32>
    %83 = arith.truncf %82 : vector<2x144xf32> to vector<2x144xbf16>
    %c32_93 = arith.constant 32 : index
    %c0_94 = arith.constant 0 : index
    %84 = vector.load %arg2[%c32_93, %c0_94] : memref<144x128xbf16, #tpu.memory_space<vmem>>, vector<4x2xbf16>
    %cst_95 = arith.constant dense<0.000000e+00> : vector<4x144xf32>
    %85 = tpu.matmul %84, %83, %cst_95 {dimension_numbers = #tpu.dot_dimension_numbers<[1], [0], [0], [1], [0, 0, 1, 1], [], []>} : vector<4x2xbf16>, vector<2x144xbf16>, vector<4x144xf32> -> vector<4x144xf32>
    %c16_96 = arith.constant 16 : index
    %c0_97 = arith.constant 0 : index
    %86 = vector.load %arg3[%c16_96, %c0_97] : memref<96x1xf32, #tpu.memory_space<vmem>>, vector<4x1xf32>
    %87 = vector.broadcast %86 : vector<4x1xf32> to vector<4x144xf32>
    %88 = arith.addf %85, %87 : vector<4x144xf32>
    %c0_98 = arith.constant 0 : index
    %c19_99 = arith.constant 19 : index
    %89 = vector.load %arg8[%c0_98, %c19_99] : memref<8x256xf32, #tpu.memory_space<vmem>>, vector<4x144xf32>
    %90 = arith.addf %88, %89 : vector<4x144xf32>
    %91 = arith.truncf %90 : vector<4x144xf32> to vector<4x144xbf16>
    %c0_100 = arith.constant 0 : index
    %c512 = arith.constant 512 : index
    %92 = vector.load %arg4[%c0_100, %c512] : memref<144x1408xbf16, #tpu.memory_space<vmem>>, vector<144x181xbf16>
    %cst_101 = arith.constant dense<0.000000e+00> : vector<4x181xf32>
    %93 = tpu.matmul %91, %92, %cst_101 {dimension_numbers = #tpu.dot_dimension_numbers<[1], [0], [0], [1], [0, 0, 1, 1], [], []>} : vector<4x144xbf16>, vector<144x181xbf16>, vector<4x181xf32> -> vector<4x181xf32>
    %cst_102 = arith.constant 0.000000e+00 : f32
    %94 = vector.broadcast %cst_102 : f32 to vector<4x181xf32>
    %95 = arith.cmpf ogt, %93, %94 : vector<4x181xf32>
    %cst_103 = arith.constant 0.000000e+00 : f32
    %96 = vector.broadcast %cst_103 : f32 to vector<4x181xf32>
    %97 = arith.minimumf %93, %96 : vector<4x181xf32>
    %98 = math.exp %97 : vector<4x181xf32>
    %cst_104 = arith.constant 1.000000e+00 : f32
    %99 = vector.broadcast %cst_104 : f32 to vector<4x181xf32>
    %100 = arith.subf %98, %99 : vector<4x181xf32>
    %cst_105 = arith.constant 1.000000e+00 : f32
    %101 = vector.broadcast %cst_105 : f32 to vector<4x181xf32>
    %102 = arith.mulf %101, %100 : vector<4x181xf32>
    %103 = arith.select %95, %93, %102 : vector<4x181xi1>, vector<4x181xf32>
    %104 = arith.truncf %103 : vector<4x181xf32> to vector<4x181xbf16>
    %c0_106 = arith.constant 0 : index
    %c0_107 = arith.constant 0 : index
    %105 = vector.load %arg6[%c0_106, %c0_107] : memref<32x256xbf16, #tpu.memory_space<vmem>>, vector<4x181xbf16>
    tpu.vector_store %arg6[%c0_106, %c0_107], %104 {strides = array<i32>} : memref<32x256xbf16, #tpu.memory_space<vmem>>, vector<4x181xbf16>,
    %c0_108 = arith.constant 0 : index
    %c0_109 = arith.constant 0 : index
    %106 = vector.load %arg6[%c0_108, %c0_109] : memref<32x256xbf16, #tpu.memory_space<vmem>>, vector<4x36xbf16>
    %c0_110 = arith.constant 0 : index
    %c0_111 = arith.constant 0 : index
    %107 = vector.load %arg7[%c0_110, %c0_111] : memref<128x256xbf16, #tpu.memory_space<vmem>>, vector<4x36xbf16>
    tpu.vector_store %arg7[%c0_110, %c0_111], %106 {strides = array<i32>} : memref<128x256xbf16, #tpu.memory_space<vmem>>, vector<4x36xbf16>,
    %c0_112 = arith.constant 0 : index
    %c45 = arith.constant 45 : index
    %108 = vector.load %arg6[%c0_112, %c45] : memref<32x256xbf16, #tpu.memory_space<vmem>>, vector<4x36xbf16>
    %c8_113 = arith.constant 8 : index
    %c0_114 = arith.constant 0 : index
    %109 = vector.load %arg7[%c8_113, %c0_114] : memref<128x256xbf16, #tpu.memory_space<vmem>>, vector<4x36xbf16>
    tpu.vector_store %arg7[%c8_113, %c0_114], %108 {strides = array<i32>} : memref<128x256xbf16, #tpu.memory_space<vmem>>, vector<4x36xbf16>,
    %c0_115 = arith.constant 0 : index
    %c1_116 = arith.constant 1 : index
    %110 = vector.load %arg6[%c0_115, %c1_116] : memref<32x256xbf16, #tpu.memory_space<vmem>>, vector<4x36xbf16>
    %c16_117 = arith.constant 16 : index
    %c0_118 = arith.constant 0 : index
    %111 = vector.load %arg7[%c16_117, %c0_118] : memref<128x256xbf16, #tpu.memory_space<vmem>>, vector<4x36xbf16>
    tpu.vector_store %arg7[%c16_117, %c0_118], %110 {strides = array<i32>} : memref<128x256xbf16, #tpu.memory_space<vmem>>, vector<4x36xbf16>,
    %c0_119 = arith.constant 0 : index
    %c46 = arith.constant 46 : index
    %112 = vector.load %arg6[%c0_119, %c46] : memref<32x256xbf16, #tpu.memory_space<vmem>>, vector<4x36xbf16>
    %c24_120 = arith.constant 24 : index
    %c0_121 = arith.constant 0 : index
    %113 = vector.load %arg7[%c24_120, %c0_121] : memref<128x256xbf16, #tpu.memory_space<vmem>>, vector<4x36xbf16>
    tpu.vector_store %arg7[%c24_120, %c0_121], %112 {strides = array<i32>} : memref<128x256xbf16, #tpu.memory_space<vmem>>, vector<4x36xbf16>,
    %c0_122 = arith.constant 0 : index
    %c90 = arith.constant 90 : index
    %114 = vector.load %arg6[%c0_122, %c90] : memref<32x256xbf16, #tpu.memory_space<vmem>>, vector<4x36xbf16>
    %c32_123 = arith.constant 32 : index
    %c0_124 = arith.constant 0 : index
    %115 = vector.load %arg7[%c32_123, %c0_124] : memref<128x256xbf16, #tpu.memory_space<vmem>>, vector<4x36xbf16>
    tpu.vector_store %arg7[%c32_123, %c0_124], %114 {strides = array<i32>} : memref<128x256xbf16, #tpu.memory_space<vmem>>, vector<4x36xbf16>,
    %c0_125 = arith.constant 0 : index
    %c135 = arith.constant 135 : index
    %116 = vector.load %arg6[%c0_125, %c135] : memref<32x256xbf16, #tpu.memory_space<vmem>>, vector<4x36xbf16>
    %c40_126 = arith.constant 40 : index
    %c0_127 = arith.constant 0 : index
    %117 = vector.load %arg7[%c40_126, %c0_127] : memref<128x256xbf16, #tpu.memory_space<vmem>>, vector<4x36xbf16>
    tpu.vector_store %arg7[%c40_126, %c0_127], %116 {strides = array<i32>} : memref<128x256xbf16, #tpu.memory_space<vmem>>, vector<4x36xbf16>,
    %c0_128 = arith.constant 0 : index
    %c91 = arith.constant 91 : index
    %118 = vector.load %arg6[%c0_128, %c91] : memref<32x256xbf16, #tpu.memory_space<vmem>>, vector<4x36xbf16>
    %c48_129 = arith.constant 48 : index
    %c0_130 = arith.constant 0 : index
    %119 = vector.load %arg7[%c48_129, %c0_130] : memref<128x256xbf16, #tpu.memory_space<vmem>>, vector<4x36xbf16>
    tpu.vector_store %arg7[%c48_129, %c0_130], %118 {strides = array<i32>} : memref<128x256xbf16, #tpu.memory_space<vmem>>, vector<4x36xbf16>,
    %c0_131 = arith.constant 0 : index
    %c136 = arith.constant 136 : index
    %120 = vector.load %arg6[%c0_131, %c136] : memref<32x256xbf16, #tpu.memory_space<vmem>>, vector<4x36xbf16>
    %c56_132 = arith.constant 56 : index
    %c0_133 = arith.constant 0 : index
    %121 = vector.load %arg7[%c56_132, %c0_133] : memref<128x256xbf16, #tpu.memory_space<vmem>>, vector<4x36xbf16>
    tpu.vector_store %arg7[%c56_132, %c0_133], %120 {strides = array<i32>} : memref<128x256xbf16, #tpu.memory_space<vmem>>, vector<4x36xbf16>,
    %c0_134 = arith.constant 0 : index
    %c9 = arith.constant 9 : index
    %122 = vector.load %arg6[%c0_134, %c9] : memref<32x256xbf16, #tpu.memory_space<vmem>>, vector<4x36xbf16>
    %c64_135 = arith.constant 64 : index
    %c0_136 = arith.constant 0 : index
    %123 = vector.load %arg7[%c64_135, %c0_136] : memref<128x256xbf16, #tpu.memory_space<vmem>>, vector<4x36xbf16>
    tpu.vector_store %arg7[%c64_135, %c0_136], %122 {strides = array<i32>} : memref<128x256xbf16, #tpu.memory_space<vmem>>, vector<4x36xbf16>,
    %c0_137 = arith.constant 0 : index
    %c54 = arith.constant 54 : index
    %124 = vector.load %arg6[%c0_137, %c54] : memref<32x256xbf16, #tpu.memory_space<vmem>>, vector<4x36xbf16>
    %c72 = arith.constant 72 : index
    %c0_138 = arith.constant 0 : index
    %125 = vector.load %arg7[%c72, %c0_138] : memref<128x256xbf16, #tpu.memory_space<vmem>>, vector<4x36xbf16>
    tpu.vector_store %arg7[%c72, %c0_138], %124 {strides = array<i32>} : memref<128x256xbf16, #tpu.memory_space<vmem>>, vector<4x36xbf16>,
    %c0_139 = arith.constant 0 : index
    %c10 = arith.constant 10 : index
    %126 = vector.load %arg6[%c0_139, %c10] : memref<32x256xbf16, #tpu.memory_space<vmem>>, vector<4x36xbf16>
    %c80 = arith.constant 80 : index
    %c0_140 = arith.constant 0 : index
    %127 = vector.load %arg7[%c80, %c0_140] : memref<128x256xbf16, #tpu.memory_space<vmem>>, vector<4x36xbf16>
    tpu.vector_store %arg7[%c80, %c0_140], %126 {strides = array<i32>} : memref<128x256xbf16, #tpu.memory_space<vmem>>, vector<4x36xbf16>,
    %c0_141 = arith.constant 0 : index
    %c55 = arith.constant 55 : index
    %128 = vector.load %arg6[%c0_141, %c55] : memref<32x256xbf16, #tpu.memory_space<vmem>>, vector<4x36xbf16>
    %c88 = arith.constant 88 : index
    %c0_142 = arith.constant 0 : index
    %129 = vector.load %arg7[%c88, %c0_142] : memref<128x256xbf16, #tpu.memory_space<vmem>>, vector<4x36xbf16>
    tpu.vector_store %arg7[%c88, %c0_142], %128 {strides = array<i32>} : memref<128x256xbf16, #tpu.memory_space<vmem>>, vector<4x36xbf16>,
    %c0_143 = arith.constant 0 : index
    %c99 = arith.constant 99 : index
    %130 = vector.load %arg6[%c0_143, %c99] : memref<32x256xbf16, #tpu.memory_space<vmem>>, vector<4x36xbf16>
    %c96 = arith.constant 96 : index
    %c0_144 = arith.constant 0 : index
    %131 = vector.load %arg7[%c96, %c0_144] : memref<128x256xbf16, #tpu.memory_space<vmem>>, vector<4x36xbf16>
    tpu.vector_store %arg7[%c96, %c0_144], %130 {strides = array<i32>} : memref<128x256xbf16, #tpu.memory_space<vmem>>, vector<4x36xbf16>,
    %c0_145 = arith.constant 0 : index
    %c144 = arith.constant 144 : index
    %132 = vector.load %arg6[%c0_145, %c144] : memref<32x256xbf16, #tpu.memory_space<vmem>>, vector<4x36xbf16>
    %c104 = arith.constant 104 : index
    %c0_146 = arith.constant 0 : index
    %133 = vector.load %arg7[%c104, %c0_146] : memref<128x256xbf16, #tpu.memory_space<vmem>>, vector<4x36xbf16>
    tpu.vector_store %arg7[%c104, %c0_146], %132 {strides = array<i32>} : memref<128x256xbf16, #tpu.memory_space<vmem>>, vector<4x36xbf16>,
    %c0_147 = arith.constant 0 : index
    %c100 = arith.constant 100 : index
    %134 = vector.load %arg6[%c0_147, %c100] : memref<32x256xbf16, #tpu.memory_space<vmem>>, vector<4x36xbf16>
    %c112 = arith.constant 112 : index
    %c0_148 = arith.constant 0 : index
    %135 = vector.load %arg7[%c112, %c0_148] : memref<128x256xbf16, #tpu.memory_space<vmem>>, vector<4x36xbf16>
    tpu.vector_store %arg7[%c112, %c0_148], %134 {strides = array<i32>} : memref<128x256xbf16, #tpu.memory_space<vmem>>, vector<4x36xbf16>,
    %c0_149 = arith.constant 0 : index
    %c145 = arith.constant 145 : index
    %136 = vector.load %arg6[%c0_149, %c145] : memref<32x256xbf16, #tpu.memory_space<vmem>>, vector<4x36xbf16>
    %c120 = arith.constant 120 : index
    %c0_150 = arith.constant 0 : index
    %137 = vector.load %arg7[%c120, %c0_150] : memref<128x256xbf16, #tpu.memory_space<vmem>>, vector<4x36xbf16>
    tpu.vector_store %arg7[%c120, %c0_150], %136 {strides = array<i32>} : memref<128x256xbf16, #tpu.memory_space<vmem>>, vector<4x36xbf16>,
    %c48_151 = arith.constant 48 : index
    %c0_152 = arith.constant 0 : index
    %138 = vector.load %arg2[%c48_151, %c0_152] : memref<144x128xbf16, #tpu.memory_space<vmem>>, vector<8x128xbf16>
    %c0_153 = arith.constant 0 : index
    %c0_154 = arith.constant 0 : index
    %139 = vector.load %arg7[%c0_153, %c0_154] : memref<128x256xbf16, #tpu.memory_space<vmem>>, vector<128x36xbf16>
    %cst_155 = arith.constant dense<0.000000e+00> : vector<8x36xf32>
    %140 = tpu.matmul %138, %139, %cst_155 {dimension_numbers = #tpu.dot_dimension_numbers<[1], [0], [0], [1], [0, 0, 1, 1], [], []>} : vector<8x128xbf16>, vector<128x36xbf16>, vector<8x36xf32> -> vector<8x36xf32>
    %c24_156 = arith.constant 24 : index
    %c0_157 = arith.constant 0 : index
    %141 = vector.load %arg3[%c24_156, %c0_157] : memref<96x1xf32, #tpu.memory_space<vmem>>, vector<8x1xf32>
    %142 = vector.broadcast %141 : vector<8x1xf32> to vector<8x36xf32>
    %143 = arith.addf %140, %142 : vector<8x36xf32>
    %144 = arith.truncf %143 : vector<8x36xf32> to vector<8x36xbf16>
    %c0_158 = arith.constant 0 : index
    %c768 = arith.constant 768 : index
    %145 = vector.load %arg4[%c0_158, %c768] : memref<144x1408xbf16, #tpu.memory_space<vmem>>, vector<36x62xbf16>
    %cst_159 = arith.constant dense<0.000000e+00> : vector<8x62xf32>
    %146 = tpu.matmul %144, %145, %cst_159 {dimension_numbers = #tpu.dot_dimension_numbers<[1], [0], [0], [1], [0, 0, 1, 1], [], []>} : vector<8x36xbf16>, vector<36x62xbf16>, vector<8x62xf32> -> vector<8x62xf32>
    %c0_160 = arith.constant 0 : index
    %c0_161 = arith.constant 0 : index
    %147 = vector.load %arg8[%c0_160, %c0_161] : memref<8x256xf32, #tpu.memory_space<vmem>>, vector<8x62xf32>
    tpu.vector_store %arg8[%c0_160, %c0_161], %146 {strides = array<i32>} : memref<8x256xf32, #tpu.memory_space<vmem>>, vector<8x62xf32>,
    %cst_162 = arith.constant 0.000000e+00 : f32
    %148 = vector.broadcast %cst_162 : f32 to vector<8x62xf32>
    %149 = arith.cmpf ogt, %146, %148 : vector<8x62xf32>
    %cst_163 = arith.constant 0.000000e+00 : f32
    %150 = vector.broadcast %cst_163 : f32 to vector<8x62xf32>
    %151 = arith.minimumf %146, %150 : vector<8x62xf32>
    %152 = math.exp %151 : vector<8x62xf32>
    %cst_164 = arith.constant 1.000000e+00 : f32
    %153 = vector.broadcast %cst_164 : f32 to vector<8x62xf32>
    %154 = arith.subf %152, %153 : vector<8x62xf32>
    %cst_165 = arith.constant 1.000000e+00 : f32
    %155 = vector.broadcast %cst_165 : f32 to vector<8x62xf32>
    %156 = arith.mulf %155, %154 : vector<8x62xf32>
    %157 = arith.select %149, %146, %156 : vector<8x62xi1>, vector<8x62xf32>
    %158 = arith.truncf %157 : vector<8x62xf32> to vector<8x62xbf16>
    %c0_166 = arith.constant 0 : index
    %c0_167 = arith.constant 0 : index
    %159 = vector.load %arg6[%c0_166, %c0_167] : memref<32x256xbf16, #tpu.memory_space<vmem>>, vector<8x62xbf16>
    tpu.vector_store %arg6[%c0_166, %c0_167], %158 {strides = array<i32>} : memref<32x256xbf16, #tpu.memory_space<vmem>>, vector<8x62xbf16>,
    %c0_168 = arith.constant 0 : index
    %c0_169 = arith.constant 0 : index
    %160 = vector.load %arg6[%c0_168, %c0_169] : memref<32x256xbf16, #tpu.memory_space<vmem>>, vector<8x40xbf16>
    %c0_170 = arith.constant 0 : index
    %c0_171 = arith.constant 0 : index
    %161 = vector.load %arg7[%c0_170, %c0_171] : memref<128x256xbf16, #tpu.memory_space<vmem>>, vector<8x40xbf16>
    tpu.vector_store %arg7[%c0_170, %c0_171], %160 {strides = array<i32>} : memref<128x256xbf16, #tpu.memory_space<vmem>>, vector<8x40xbf16>,
    %c0_172 = arith.constant 0 : index
    %c1_173 = arith.constant 1 : index
    %162 = vector.load %arg6[%c0_172, %c1_173] : memref<32x256xbf16, #tpu.memory_space<vmem>>, vector<8x40xbf16>
    %c8_174 = arith.constant 8 : index
    %c0_175 = arith.constant 0 : index
    %163 = vector.load %arg7[%c8_174, %c0_175] : memref<128x256xbf16, #tpu.memory_space<vmem>>, vector<8x40xbf16>
    tpu.vector_store %arg7[%c8_174, %c0_175], %162 {strides = array<i32>} : memref<128x256xbf16, #tpu.memory_space<vmem>>, vector<8x40xbf16>,
    %c0_176 = arith.constant 0 : index
    %c2_177 = arith.constant 2 : index
    %164 = vector.load %arg6[%c0_176, %c2_177] : memref<32x256xbf16, #tpu.memory_space<vmem>>, vector<8x40xbf16>
    %c16_178 = arith.constant 16 : index
    %c0_179 = arith.constant 0 : index
    %165 = vector.load %arg7[%c16_178, %c0_179] : memref<128x256xbf16, #tpu.memory_space<vmem>>, vector<8x40xbf16>
    tpu.vector_store %arg7[%c16_178, %c0_179], %164 {strides = array<i32>} : memref<128x256xbf16, #tpu.memory_space<vmem>>, vector<8x40xbf16>,
    %c0_180 = arith.constant 0 : index
    %c10_181 = arith.constant 10 : index
    %166 = vector.load %arg6[%c0_180, %c10_181] : memref<32x256xbf16, #tpu.memory_space<vmem>>, vector<8x40xbf16>
    %c24_182 = arith.constant 24 : index
    %c0_183 = arith.constant 0 : index
    %167 = vector.load %arg7[%c24_182, %c0_183] : memref<128x256xbf16, #tpu.memory_space<vmem>>, vector<8x40xbf16>
    tpu.vector_store %arg7[%c24_182, %c0_183], %166 {strides = array<i32>} : memref<128x256xbf16, #tpu.memory_space<vmem>>, vector<8x40xbf16>,
    %c0_184 = arith.constant 0 : index
    %c11 = arith.constant 11 : index
    %168 = vector.load %arg6[%c0_184, %c11] : memref<32x256xbf16, #tpu.memory_space<vmem>>, vector<8x40xbf16>
    %c32_185 = arith.constant 32 : index
    %c0_186 = arith.constant 0 : index
    %169 = vector.load %arg7[%c32_185, %c0_186] : memref<128x256xbf16, #tpu.memory_space<vmem>>, vector<8x40xbf16>
    tpu.vector_store %arg7[%c32_185, %c0_186], %168 {strides = array<i32>} : memref<128x256xbf16, #tpu.memory_space<vmem>>, vector<8x40xbf16>,
    %c0_187 = arith.constant 0 : index
    %c12 = arith.constant 12 : index
    %170 = vector.load %arg6[%c0_187, %c12] : memref<32x256xbf16, #tpu.memory_space<vmem>>, vector<8x40xbf16>
    %c40_188 = arith.constant 40 : index
    %c0_189 = arith.constant 0 : index
    %171 = vector.load %arg7[%c40_188, %c0_189] : memref<128x256xbf16, #tpu.memory_space<vmem>>, vector<8x40xbf16>
    tpu.vector_store %arg7[%c40_188, %c0_189], %170 {strides = array<i32>} : memref<128x256xbf16, #tpu.memory_space<vmem>>, vector<8x40xbf16>,
    %c0_190 = arith.constant 0 : index
    %c20_191 = arith.constant 20 : index
    %172 = vector.load %arg6[%c0_190, %c20_191] : memref<32x256xbf16, #tpu.memory_space<vmem>>, vector<8x40xbf16>
    %c48_192 = arith.constant 48 : index
    %c0_193 = arith.constant 0 : index
    %173 = vector.load %arg7[%c48_192, %c0_193] : memref<128x256xbf16, #tpu.memory_space<vmem>>, vector<8x40xbf16>
    tpu.vector_store %arg7[%c48_192, %c0_193], %172 {strides = array<i32>} : memref<128x256xbf16, #tpu.memory_space<vmem>>, vector<8x40xbf16>,
    %c0_194 = arith.constant 0 : index
    %c21 = arith.constant 21 : index
    %174 = vector.load %arg6[%c0_194, %c21] : memref<32x256xbf16, #tpu.memory_space<vmem>>, vector<8x40xbf16>
    %c56_195 = arith.constant 56 : index
    %c0_196 = arith.constant 0 : index
    %175 = vector.load %arg7[%c56_195, %c0_196] : memref<128x256xbf16, #tpu.memory_space<vmem>>, vector<8x40xbf16>
    tpu.vector_store %arg7[%c56_195, %c0_196], %174 {strides = array<i32>} : memref<128x256xbf16, #tpu.memory_space<vmem>>, vector<8x40xbf16>,
    %c0_197 = arith.constant 0 : index
    %c22 = arith.constant 22 : index
    %176 = vector.load %arg6[%c0_197, %c22] : memref<32x256xbf16, #tpu.memory_space<vmem>>, vector<8x40xbf16>
    %c64_198 = arith.constant 64 : index
    %c0_199 = arith.constant 0 : index
    %177 = vector.load %arg7[%c64_198, %c0_199] : memref<128x256xbf16, #tpu.memory_space<vmem>>, vector<8x40xbf16>
    tpu.vector_store %arg7[%c64_198, %c0_199], %176 {strides = array<i32>} : memref<128x256xbf16, #tpu.memory_space<vmem>>, vector<8x40xbf16>,
    %c64_200 = arith.constant 64 : index
    %c0_201 = arith.constant 0 : index
    %178 = vector.load %arg2[%c64_200, %c0_201] : memref<144x128xbf16, #tpu.memory_space<vmem>>, vector<4x72xbf16>
    %c0_202 = arith.constant 0 : index
    %c0_203 = arith.constant 0 : index
    %179 = vector.load %arg7[%c0_202, %c0_203] : memref<128x256xbf16, #tpu.memory_space<vmem>>, vector<72x40xbf16>
    %cst_204 = arith.constant dense<0.000000e+00> : vector<4x40xf32>
    %180 = tpu.matmul %178, %179, %cst_204 {dimension_numbers = #tpu.dot_dimension_numbers<[1], [0], [0], [1], [0, 0, 1, 1], [], []>} : vector<4x72xbf16>, vector<72x40xbf16>, vector<4x40xf32> -> vector<4x40xf32>
    %c32_205 = arith.constant 32 : index
    %c0_206 = arith.constant 0 : index
    %181 = vector.load %arg3[%c32_205, %c0_206] : memref<96x1xf32, #tpu.memory_space<vmem>>, vector<4x1xf32>
    %182 = vector.broadcast %181 : vector<4x1xf32> to vector<4x40xf32>
    %183 = arith.addf %180, %182 : vector<4x40xf32>
    %cst_207 = arith.constant 0.000000e+00 : f32
    %184 = vector.broadcast %cst_207 : f32 to vector<4x40xf32>
    %185 = arith.cmpf ogt, %183, %184 : vector<4x40xf32>
    %cst_208 = arith.constant 0.000000e+00 : f32
    %186 = vector.broadcast %cst_208 : f32 to vector<4x40xf32>
    %187 = arith.minimumf %183, %186 : vector<4x40xf32>
    %188 = math.exp %187 : vector<4x40xf32>
    %cst_209 = arith.constant 1.000000e+00 : f32
    %189 = vector.broadcast %cst_209 : f32 to vector<4x40xf32>
    %190 = arith.subf %188, %189 : vector<4x40xf32>
    %cst_210 = arith.constant 1.000000e+00 : f32
    %191 = vector.broadcast %cst_210 : f32 to vector<4x40xf32>
    %192 = arith.mulf %191, %190 : vector<4x40xf32>
    %193 = arith.select %185, %183, %192 : vector<4x40xi1>, vector<4x40xf32>
    %194 = arith.truncf %193 : vector<4x40xf32> to vector<4x40xbf16>
    %c80_211 = arith.constant 80 : index
    %c0_212 = arith.constant 0 : index
    %195 = vector.load %arg2[%c80_211, %c0_212] : memref<144x128xbf16, #tpu.memory_space<vmem>>, vector<8x4xbf16>
    %cst_213 = arith.constant dense<0.000000e+00> : vector<8x40xf32>
    %196 = tpu.matmul %195, %194, %cst_213 {dimension_numbers = #tpu.dot_dimension_numbers<[1], [0], [0], [1], [0, 0, 1, 1], [], []>} : vector<8x4xbf16>, vector<4x40xbf16>, vector<8x40xf32> -> vector<8x40xf32>
    %c40_214 = arith.constant 40 : index
    %c0_215 = arith.constant 0 : index
    %197 = vector.load %arg3[%c40_214, %c0_215] : memref<96x1xf32, #tpu.memory_space<vmem>>, vector<8x1xf32>
    %198 = vector.broadcast %197 : vector<8x1xf32> to vector<8x40xf32>
    %199 = arith.addf %196, %198 : vector<8x40xf32>
    %c0_216 = arith.constant 0 : index
    %c11_217 = arith.constant 11 : index
    %200 = vector.load %arg8[%c0_216, %c11_217] : memref<8x256xf32, #tpu.memory_space<vmem>>, vector<8x40xf32>
    %201 = arith.addf %199, %200 : vector<8x40xf32>
    %202 = arith.truncf %201 : vector<8x40xf32> to vector<8x40xbf16>
    %c0_218 = arith.constant 0 : index
    %c896 = arith.constant 896 : index
    %203 = vector.load %arg4[%c0_218, %c896] : memref<144x1408xbf16, #tpu.memory_space<vmem>>, vector<40x61xbf16>
    %cst_219 = arith.constant dense<0.000000e+00> : vector<8x61xf32>
    %204 = tpu.matmul %202, %203, %cst_219 {dimension_numbers = #tpu.dot_dimension_numbers<[1], [0], [0], [1], [0, 0, 1, 1], [], []>} : vector<8x40xbf16>, vector<40x61xbf16>, vector<8x61xf32> -> vector<8x61xf32>
    %cst_220 = arith.constant 0.000000e+00 : f32
    %205 = vector.broadcast %cst_220 : f32 to vector<8x61xf32>
    %206 = arith.cmpf ogt, %204, %205 : vector<8x61xf32>
    %cst_221 = arith.constant 0.000000e+00 : f32
    %207 = vector.broadcast %cst_221 : f32 to vector<8x61xf32>
    %208 = arith.minimumf %204, %207 : vector<8x61xf32>
    %209 = math.exp %208 : vector<8x61xf32>
    %cst_222 = arith.constant 1.000000e+00 : f32
    %210 = vector.broadcast %cst_222 : f32 to vector<8x61xf32>
    %211 = arith.subf %209, %210 : vector<8x61xf32>
    %cst_223 = arith.constant 1.000000e+00 : f32
    %212 = vector.broadcast %cst_223 : f32 to vector<8x61xf32>
    %213 = arith.mulf %212, %211 : vector<8x61xf32>
    %214 = arith.select %206, %204, %213 : vector<8x61xi1>, vector<8x61xf32>
    %215 = arith.truncf %214 : vector<8x61xf32> to vector<8x61xbf16>
    %c0_224 = arith.constant 0 : index
    %c0_225 = arith.constant 0 : index
    %216 = vector.load %arg6[%c0_224, %c0_225] : memref<32x256xbf16, #tpu.memory_space<vmem>>, vector<8x61xbf16>
    tpu.vector_store %arg6[%c0_224, %c0_225], %215 {strides = array<i32>} : memref<32x256xbf16, #tpu.memory_space<vmem>>, vector<8x61xbf16>,
    %c0_226 = arith.constant 0 : index
    %c0_227 = arith.constant 0 : index
    %217 = vector.load %arg6[%c0_226, %c0_227] : memref<32x256xbf16, #tpu.memory_space<vmem>>, vector<8x10xbf16>
    %c0_228 = arith.constant 0 : index
    %c0_229 = arith.constant 0 : index
    %218 = vector.load %arg7[%c0_228, %c0_229] : memref<128x256xbf16, #tpu.memory_space<vmem>>, vector<8x10xbf16>
    tpu.vector_store %arg7[%c0_228, %c0_229], %217 {strides = array<i32>} : memref<128x256xbf16, #tpu.memory_space<vmem>>, vector<8x10xbf16>,
    %c0_230 = arith.constant 0 : index
    %c15 = arith.constant 15 : index
    %219 = vector.load %arg6[%c0_230, %c15] : memref<32x256xbf16, #tpu.memory_space<vmem>>, vector<8x10xbf16>
    %c8_231 = arith.constant 8 : index
    %c0_232 = arith.constant 0 : index
    %220 = vector.load %arg7[%c8_231, %c0_232] : memref<128x256xbf16, #tpu.memory_space<vmem>>, vector<8x10xbf16>
    tpu.vector_store %arg7[%c8_231, %c0_232], %219 {strides = array<i32>} : memref<128x256xbf16, #tpu.memory_space<vmem>>, vector<8x10xbf16>,
    %c0_233 = arith.constant 0 : index
    %c1_234 = arith.constant 1 : index
    %221 = vector.load %arg6[%c0_233, %c1_234] : memref<32x256xbf16, #tpu.memory_space<vmem>>, vector<8x10xbf16>
    %c16_235 = arith.constant 16 : index
    %c0_236 = arith.constant 0 : index
    %222 = vector.load %arg7[%c16_235, %c0_236] : memref<128x256xbf16, #tpu.memory_space<vmem>>, vector<8x10xbf16>
    tpu.vector_store %arg7[%c16_235, %c0_236], %221 {strides = array<i32>} : memref<128x256xbf16, #tpu.memory_space<vmem>>, vector<8x10xbf16>,
    %c0_237 = arith.constant 0 : index
    %c16_238 = arith.constant 16 : index
    %223 = vector.load %arg6[%c0_237, %c16_238] : memref<32x256xbf16, #tpu.memory_space<vmem>>, vector<8x10xbf16>
    %c24_239 = arith.constant 24 : index
    %c0_240 = arith.constant 0 : index
    %224 = vector.load %arg7[%c24_239, %c0_240] : memref<128x256xbf16, #tpu.memory_space<vmem>>, vector<8x10xbf16>
    tpu.vector_store %arg7[%c24_239, %c0_240], %223 {strides = array<i32>} : memref<128x256xbf16, #tpu.memory_space<vmem>>, vector<8x10xbf16>,
    %c0_241 = arith.constant 0 : index
    %c30 = arith.constant 30 : index
    %225 = vector.load %arg6[%c0_241, %c30] : memref<32x256xbf16, #tpu.memory_space<vmem>>, vector<8x10xbf16>
    %c32_242 = arith.constant 32 : index
    %c0_243 = arith.constant 0 : index
    %226 = vector.load %arg7[%c32_242, %c0_243] : memref<128x256xbf16, #tpu.memory_space<vmem>>, vector<8x10xbf16>
    tpu.vector_store %arg7[%c32_242, %c0_243], %225 {strides = array<i32>} : memref<128x256xbf16, #tpu.memory_space<vmem>>, vector<8x10xbf16>,
    %c0_244 = arith.constant 0 : index
    %c45_245 = arith.constant 45 : index
    %227 = vector.load %arg6[%c0_244, %c45_245] : memref<32x256xbf16, #tpu.memory_space<vmem>>, vector<8x10xbf16>
    %c40_246 = arith.constant 40 : index
    %c0_247 = arith.constant 0 : index
    %228 = vector.load %arg7[%c40_246, %c0_247] : memref<128x256xbf16, #tpu.memory_space<vmem>>, vector<8x10xbf16>
    tpu.vector_store %arg7[%c40_246, %c0_247], %227 {strides = array<i32>} : memref<128x256xbf16, #tpu.memory_space<vmem>>, vector<8x10xbf16>,
    %c0_248 = arith.constant 0 : index
    %c31 = arith.constant 31 : index
    %229 = vector.load %arg6[%c0_248, %c31] : memref<32x256xbf16, #tpu.memory_space<vmem>>, vector<8x10xbf16>
    %c48_249 = arith.constant 48 : index
    %c0_250 = arith.constant 0 : index
    %230 = vector.load %arg7[%c48_249, %c0_250] : memref<128x256xbf16, #tpu.memory_space<vmem>>, vector<8x10xbf16>
    tpu.vector_store %arg7[%c48_249, %c0_250], %229 {strides = array<i32>} : memref<128x256xbf16, #tpu.memory_space<vmem>>, vector<8x10xbf16>,
    %c0_251 = arith.constant 0 : index
    %c46_252 = arith.constant 46 : index
    %231 = vector.load %arg6[%c0_251, %c46_252] : memref<32x256xbf16, #tpu.memory_space<vmem>>, vector<8x10xbf16>
    %c56_253 = arith.constant 56 : index
    %c0_254 = arith.constant 0 : index
    %232 = vector.load %arg7[%c56_253, %c0_254] : memref<128x256xbf16, #tpu.memory_space<vmem>>, vector<8x10xbf16>
    tpu.vector_store %arg7[%c56_253, %c0_254], %231 {strides = array<i32>} : memref<128x256xbf16, #tpu.memory_space<vmem>>, vector<8x10xbf16>,
    %c0_255 = arith.constant 0 : index
    %c5 = arith.constant 5 : index
    %233 = vector.load %arg6[%c0_255, %c5] : memref<32x256xbf16, #tpu.memory_space<vmem>>, vector<8x10xbf16>
    %c64_256 = arith.constant 64 : index
    %c0_257 = arith.constant 0 : index
    %234 = vector.load %arg7[%c64_256, %c0_257] : memref<128x256xbf16, #tpu.memory_space<vmem>>, vector<8x10xbf16>
    tpu.vector_store %arg7[%c64_256, %c0_257], %233 {strides = array<i32>} : memref<128x256xbf16, #tpu.memory_space<vmem>>, vector<8x10xbf16>,
    %c0_258 = arith.constant 0 : index
    %c20_259 = arith.constant 20 : index
    %235 = vector.load %arg6[%c0_258, %c20_259] : memref<32x256xbf16, #tpu.memory_space<vmem>>, vector<8x10xbf16>
    %c72_260 = arith.constant 72 : index
    %c0_261 = arith.constant 0 : index
    %236 = vector.load %arg7[%c72_260, %c0_261] : memref<128x256xbf16, #tpu.memory_space<vmem>>, vector<8x10xbf16>
    tpu.vector_store %arg7[%c72_260, %c0_261], %235 {strides = array<i32>} : memref<128x256xbf16, #tpu.memory_space<vmem>>, vector<8x10xbf16>,
    %c0_262 = arith.constant 0 : index
    %c6 = arith.constant 6 : index
    %237 = vector.load %arg6[%c0_262, %c6] : memref<32x256xbf16, #tpu.memory_space<vmem>>, vector<8x10xbf16>
    %c80_263 = arith.constant 80 : index
    %c0_264 = arith.constant 0 : index
    %238 = vector.load %arg7[%c80_263, %c0_264] : memref<128x256xbf16, #tpu.memory_space<vmem>>, vector<8x10xbf16>
    tpu.vector_store %arg7[%c80_263, %c0_264], %237 {strides = array<i32>} : memref<128x256xbf16, #tpu.memory_space<vmem>>, vector<8x10xbf16>,
    %c0_265 = arith.constant 0 : index
    %c21_266 = arith.constant 21 : index
    %239 = vector.load %arg6[%c0_265, %c21_266] : memref<32x256xbf16, #tpu.memory_space<vmem>>, vector<8x10xbf16>
    %c88_267 = arith.constant 88 : index
    %c0_268 = arith.constant 0 : index
    %240 = vector.load %arg7[%c88_267, %c0_268] : memref<128x256xbf16, #tpu.memory_space<vmem>>, vector<8x10xbf16>
    tpu.vector_store %arg7[%c88_267, %c0_268], %239 {strides = array<i32>} : memref<128x256xbf16, #tpu.memory_space<vmem>>, vector<8x10xbf16>,
    %c0_269 = arith.constant 0 : index
    %c35 = arith.constant 35 : index
    %241 = vector.load %arg6[%c0_269, %c35] : memref<32x256xbf16, #tpu.memory_space<vmem>>, vector<8x10xbf16>
    %c96_270 = arith.constant 96 : index
    %c0_271 = arith.constant 0 : index
    %242 = vector.load %arg7[%c96_270, %c0_271] : memref<128x256xbf16, #tpu.memory_space<vmem>>, vector<8x10xbf16>
    tpu.vector_store %arg7[%c96_270, %c0_271], %241 {strides = array<i32>} : memref<128x256xbf16, #tpu.memory_space<vmem>>, vector<8x10xbf16>,
    %c0_272 = arith.constant 0 : index
    %c50 = arith.constant 50 : index
    %243 = vector.load %arg6[%c0_272, %c50] : memref<32x256xbf16, #tpu.memory_space<vmem>>, vector<8x10xbf16>
    %c104_273 = arith.constant 104 : index
    %c0_274 = arith.constant 0 : index
    %244 = vector.load %arg7[%c104_273, %c0_274] : memref<128x256xbf16, #tpu.memory_space<vmem>>, vector<8x10xbf16>
    tpu.vector_store %arg7[%c104_273, %c0_274], %243 {strides = array<i32>} : memref<128x256xbf16, #tpu.memory_space<vmem>>, vector<8x10xbf16>,
    %c0_275 = arith.constant 0 : index
    %c36_276 = arith.constant 36 : index
    %245 = vector.load %arg6[%c0_275, %c36_276] : memref<32x256xbf16, #tpu.memory_space<vmem>>, vector<8x10xbf16>
    %c112_277 = arith.constant 112 : index
    %c0_278 = arith.constant 0 : index
    %246 = vector.load %arg7[%c112_277, %c0_278] : memref<128x256xbf16, #tpu.memory_space<vmem>>, vector<8x10xbf16>
    tpu.vector_store %arg7[%c112_277, %c0_278], %245 {strides = array<i32>} : memref<128x256xbf16, #tpu.memory_space<vmem>>, vector<8x10xbf16>,
    %c0_279 = arith.constant 0 : index
    %c51 = arith.constant 51 : index
    %247 = vector.load %arg6[%c0_279, %c51] : memref<32x256xbf16, #tpu.memory_space<vmem>>, vector<8x10xbf16>
    %c120_280 = arith.constant 120 : index
    %c0_281 = arith.constant 0 : index
    %248 = vector.load %arg7[%c120_280, %c0_281] : memref<128x256xbf16, #tpu.memory_space<vmem>>, vector<8x10xbf16>
    tpu.vector_store %arg7[%c120_280, %c0_281], %247 {strides = array<i32>} : memref<128x256xbf16, #tpu.memory_space<vmem>>, vector<8x10xbf16>,
    %c96_282 = arith.constant 96 : index
    %c0_283 = arith.constant 0 : index
    %249 = vector.load %arg2[%c96_282, %c0_283] : memref<144x128xbf16, #tpu.memory_space<vmem>>, vector<16x128xbf16>
    %c0_284 = arith.constant 0 : index
    %c0_285 = arith.constant 0 : index
    %250 = vector.load %arg7[%c0_284, %c0_285] : memref<128x256xbf16, #tpu.memory_space<vmem>>, vector<128x10xbf16>
    %cst_286 = arith.constant dense<0.000000e+00> : vector<16x10xf32>
    %251 = tpu.matmul %249, %250, %cst_286 {dimension_numbers = #tpu.dot_dimension_numbers<[1], [0], [0], [1], [0, 0, 1, 1], [], []>} : vector<16x128xbf16>, vector<128x10xbf16>, vector<16x10xf32> -> vector<16x10xf32>
    %c48_287 = arith.constant 48 : index
    %c0_288 = arith.constant 0 : index
    %252 = vector.load %arg3[%c48_287, %c0_288] : memref<96x1xf32, #tpu.memory_space<vmem>>, vector<16x1xf32>
    %253 = vector.broadcast %252 : vector<16x1xf32> to vector<16x10xf32>
    %254 = arith.addf %251, %253 : vector<16x10xf32>
    %255 = arith.truncf %254 : vector<16x10xf32> to vector<16x10xbf16>
    %c0_289 = arith.constant 0 : index
    %c1024 = arith.constant 1024 : index
    %256 = vector.load %arg4[%c0_289, %c1024] : memref<144x1408xbf16, #tpu.memory_space<vmem>>, vector<10x8xbf16>
    %cst_290 = arith.constant dense<0.000000e+00> : vector<16x8xf32>
    %257 = tpu.matmul %255, %256, %cst_290 {dimension_numbers = #tpu.dot_dimension_numbers<[1], [0], [0], [1], [0, 0, 1, 1], [], []>} : vector<16x10xbf16>, vector<10x8xbf16>, vector<16x8xf32> -> vector<16x8xf32>
    %cst_291 = arith.constant 0.000000e+00 : f32
    %258 = vector.broadcast %cst_291 : f32 to vector<16x8xf32>
    %259 = arith.cmpf ogt, %257, %258 : vector<16x8xf32>
    %cst_292 = arith.constant 0.000000e+00 : f32
    %260 = vector.broadcast %cst_292 : f32 to vector<16x8xf32>
    %261 = arith.minimumf %257, %260 : vector<16x8xf32>
    %262 = math.exp %261 : vector<16x8xf32>
    %cst_293 = arith.constant 1.000000e+00 : f32
    %263 = vector.broadcast %cst_293 : f32 to vector<16x8xf32>
    %264 = arith.subf %262, %263 : vector<16x8xf32>
    %cst_294 = arith.constant 1.000000e+00 : f32
    %265 = vector.broadcast %cst_294 : f32 to vector<16x8xf32>
    %266 = arith.mulf %265, %264 : vector<16x8xf32>
    %267 = arith.select %259, %257, %266 : vector<16x8xi1>, vector<16x8xf32>
    %268 = arith.truncf %267 : vector<16x8xf32> to vector<16x8xbf16>
    %c0_295 = arith.constant 0 : index
    %c0_296 = arith.constant 0 : index
    %269 = vector.load %arg6[%c0_295, %c0_296] : memref<32x256xbf16, #tpu.memory_space<vmem>>, vector<16x8xbf16>
    tpu.vector_store %arg6[%c0_295, %c0_296], %268 {strides = array<i32>} : memref<32x256xbf16, #tpu.memory_space<vmem>>, vector<16x8xbf16>,
    %c0_297 = arith.constant 0 : index
    %c1152 = arith.constant 1152 : index
    %270 = vector.load %arg4[%c0_297, %c1152] : memref<144x1408xbf16, #tpu.memory_space<vmem>>, vector<10x8xbf16>
    %cst_298 = arith.constant dense<0.000000e+00> : vector<16x8xf32>
    %271 = tpu.matmul %255, %270, %cst_298 {dimension_numbers = #tpu.dot_dimension_numbers<[1], [0], [0], [1], [0, 0, 1, 1], [], []>} : vector<16x10xbf16>, vector<10x8xbf16>, vector<16x8xf32> -> vector<16x8xf32>
    %cst_299 = arith.constant 0.000000e+00 : f32
    %272 = vector.broadcast %cst_299 : f32 to vector<16x8xf32>
    %273 = arith.cmpf ogt, %271, %272 : vector<16x8xf32>
    %cst_300 = arith.constant 0.000000e+00 : f32
    %274 = vector.broadcast %cst_300 : f32 to vector<16x8xf32>
    %275 = arith.minimumf %271, %274 : vector<16x8xf32>
    %276 = math.exp %275 : vector<16x8xf32>
    %cst_301 = arith.constant 1.000000e+00 : f32
    %277 = vector.broadcast %cst_301 : f32 to vector<16x8xf32>
    %278 = arith.subf %276, %277 : vector<16x8xf32>
    %cst_302 = arith.constant 1.000000e+00 : f32
    %279 = vector.broadcast %cst_302 : f32 to vector<16x8xf32>
    %280 = arith.mulf %279, %278 : vector<16x8xf32>
    %281 = arith.select %273, %271, %280 : vector<16x8xi1>, vector<16x8xf32>
    %282 = arith.truncf %281 : vector<16x8xf32> to vector<16x8xbf16>
    %c16_303 = arith.constant 16 : index
    %c0_304 = arith.constant 0 : index
    %283 = vector.load %arg6[%c16_303, %c0_304] : memref<32x256xbf16, #tpu.memory_space<vmem>>, vector<16x8xbf16>
    tpu.vector_store %arg6[%c16_303, %c0_304], %282 {strides = array<i32>} : memref<32x256xbf16, #tpu.memory_space<vmem>>, vector<16x8xbf16>,
    %c0_305 = arith.constant 0 : index
    %c0_306 = arith.constant 0 : index
    %284 = vector.load %arg6[%c0_305, %c0_306] : memref<32x256xbf16, #tpu.memory_space<vmem>>, vector<32x6xbf16>
    %c0_307 = arith.constant 0 : index
    %c0_308 = arith.constant 0 : index
    %285 = vector.load %arg7[%c0_307, %c0_308] : memref<128x256xbf16, #tpu.memory_space<vmem>>, vector<32x6xbf16>
    tpu.vector_store %arg7[%c0_307, %c0_308], %284 {strides = array<i32>} : memref<128x256xbf16, #tpu.memory_space<vmem>>, vector<32x6xbf16>,
    %c0_309 = arith.constant 0 : index
    %c1_310 = arith.constant 1 : index
    %286 = vector.load %arg6[%c0_309, %c1_310] : memref<32x256xbf16, #tpu.memory_space<vmem>>, vector<32x6xbf16>
    %c32_311 = arith.constant 32 : index
    %c0_312 = arith.constant 0 : index
    %287 = vector.load %arg7[%c32_311, %c0_312] : memref<128x256xbf16, #tpu.memory_space<vmem>>, vector<32x6xbf16>
    tpu.vector_store %arg7[%c32_311, %c0_312], %286 {strides = array<i32>} : memref<128x256xbf16, #tpu.memory_space<vmem>>, vector<32x6xbf16>,
    %c0_313 = arith.constant 0 : index
    %c2_314 = arith.constant 2 : index
    %288 = vector.load %arg6[%c0_313, %c2_314] : memref<32x256xbf16, #tpu.memory_space<vmem>>, vector<32x6xbf16>
    %c64_315 = arith.constant 64 : index
    %c0_316 = arith.constant 0 : index
    %289 = vector.load %arg7[%c64_315, %c0_316] : memref<128x256xbf16, #tpu.memory_space<vmem>>, vector<32x6xbf16>
    tpu.vector_store %arg7[%c64_315, %c0_316], %288 {strides = array<i32>} : memref<128x256xbf16, #tpu.memory_space<vmem>>, vector<32x6xbf16>,
    %c112_317 = arith.constant 112 : index
    %c0_318 = arith.constant 0 : index
    %290 = vector.load %arg2[%c112_317, %c0_318] : memref<144x128xbf16, #tpu.memory_space<vmem>>, vector<16x96xbf16>
    %c0_319 = arith.constant 0 : index
    %c0_320 = arith.constant 0 : index
    %291 = vector.load %arg7[%c0_319, %c0_320] : memref<128x256xbf16, #tpu.memory_space<vmem>>, vector<96x6xbf16>
    %cst_321 = arith.constant dense<0.000000e+00> : vector<16x6xf32>
    %292 = tpu.matmul %290, %291, %cst_321 {dimension_numbers = #tpu.dot_dimension_numbers<[1], [0], [0], [1], [0, 0, 1, 1], [], []>} : vector<16x96xbf16>, vector<96x6xbf16>, vector<16x6xf32> -> vector<16x6xf32>
    %c64_322 = arith.constant 64 : index
    %c0_323 = arith.constant 0 : index
    %293 = vector.load %arg3[%c64_322, %c0_323] : memref<96x1xf32, #tpu.memory_space<vmem>>, vector<16x1xf32>
    %294 = vector.broadcast %293 : vector<16x1xf32> to vector<16x6xf32>
    %295 = arith.addf %292, %294 : vector<16x6xf32>
    %296 = arith.truncf %295 : vector<16x6xf32> to vector<16x6xbf16>
    %c0_324 = arith.constant 0 : index
    %c1280 = arith.constant 1280 : index
    %297 = vector.load %arg4[%c0_324, %c1280] : memref<144x1408xbf16, #tpu.memory_space<vmem>>, vector<6x8xbf16>
    %cst_325 = arith.constant dense<0.000000e+00> : vector<16x8xf32>
    %298 = tpu.matmul %296, %297, %cst_325 {dimension_numbers = #tpu.dot_dimension_numbers<[1], [0], [0], [1], [0, 0, 1, 1], [], []>} : vector<16x6xbf16>, vector<6x8xbf16>, vector<16x8xf32> -> vector<16x8xf32>
    %cst_326 = arith.constant 0.000000e+00 : f32
    %299 = vector.broadcast %cst_326 : f32 to vector<16x8xf32>
    %300 = arith.cmpf ogt, %298, %299 : vector<16x8xf32>
    %cst_327 = arith.constant 0.000000e+00 : f32
    %301 = vector.broadcast %cst_327 : f32 to vector<16x8xf32>
    %302 = arith.minimumf %298, %301 : vector<16x8xf32>
    %303 = math.exp %302 : vector<16x8xf32>
    %cst_328 = arith.constant 1.000000e+00 : f32
    %304 = vector.broadcast %cst_328 : f32 to vector<16x8xf32>
    %305 = arith.subf %303, %304 : vector<16x8xf32>
    %cst_329 = arith.constant 1.000000e+00 : f32
    %306 = vector.broadcast %cst_329 : f32 to vector<16x8xf32>
    %307 = arith.mulf %306, %305 : vector<16x8xf32>
    %308 = arith.select %300, %298, %307 : vector<16x8xi1>, vector<16x8xf32>
    %309 = arith.truncf %308 : vector<16x8xf32> to vector<16x8xbf16>
    %c0_330 = arith.constant 0 : index
    %c0_331 = arith.constant 0 : index
    %310 = vector.load %arg6[%c0_330, %c0_331] : memref<32x256xbf16, #tpu.memory_space<vmem>>, vector<16x8xbf16>
    tpu.vector_store %arg6[%c0_330, %c0_331], %309 {strides = array<i32>} : memref<32x256xbf16, #tpu.memory_space<vmem>>, vector<16x8xbf16>,
    %c0_332 = arith.constant 0 : index
    %c0_333 = arith.constant 0 : index
    %311 = vector.load %arg6[%c0_332, %c0_333] : memref<32x256xbf16, #tpu.memory_space<vmem>>, vector<16x6xbf16>
    %c0_334 = arith.constant 0 : index
    %c0_335 = arith.constant 0 : index
    %312 = vector.load %arg7[%c0_334, %c0_335] : memref<128x256xbf16, #tpu.memory_space<vmem>>, vector<16x6xbf16>
    tpu.vector_store %arg7[%c0_334, %c0_335], %311 {strides = array<i32>} : memref<128x256xbf16, #tpu.memory_space<vmem>>, vector<16x6xbf16>,
    %c0_336 = arith.constant 0 : index
    %c1_337 = arith.constant 1 : index
    %313 = vector.load %arg6[%c0_336, %c1_337] : memref<32x256xbf16, #tpu.memory_space<vmem>>, vector<16x6xbf16>
    %c16_338 = arith.constant 16 : index
    %c0_339 = arith.constant 0 : index
    %314 = vector.load %arg7[%c16_338, %c0_339] : memref<128x256xbf16, #tpu.memory_space<vmem>>, vector<16x6xbf16>
    tpu.vector_store %arg7[%c16_338, %c0_339], %313 {strides = array<i32>} : memref<128x256xbf16, #tpu.memory_space<vmem>>, vector<16x6xbf16>,
    %c0_340 = arith.constant 0 : index
    %c2_341 = arith.constant 2 : index
    %315 = vector.load %arg6[%c0_340, %c2_341] : memref<32x256xbf16, #tpu.memory_space<vmem>>, vector<16x6xbf16>
    %c32_342 = arith.constant 32 : index
    %c0_343 = arith.constant 0 : index
    %316 = vector.load %arg7[%c32_342, %c0_343] : memref<128x256xbf16, #tpu.memory_space<vmem>>, vector<16x6xbf16>
    tpu.vector_store %arg7[%c32_342, %c0_343], %315 {strides = array<i32>} : memref<128x256xbf16, #tpu.memory_space<vmem>>, vector<16x6xbf16>,
    %c128 = arith.constant 128 : index
    %c0_344 = arith.constant 0 : index
    %317 = vector.load %arg2[%c128, %c0_344] : memref<144x128xbf16, #tpu.memory_space<vmem>>, vector<16x48xbf16>
    %c0_345 = arith.constant 0 : index
    %c0_346 = arith.constant 0 : index
    %318 = vector.load %arg7[%c0_345, %c0_346] : memref<128x256xbf16, #tpu.memory_space<vmem>>, vector<48x6xbf16>
    %cst_347 = arith.constant dense<0.000000e+00> : vector<16x6xf32>
    %319 = tpu.matmul %317, %318, %cst_347 {dimension_numbers = #tpu.dot_dimension_numbers<[1], [0], [0], [1], [0, 0, 1, 1], [], []>} : vector<16x48xbf16>, vector<48x6xbf16>, vector<16x6xf32> -> vector<16x6xf32>
    %c80_348 = arith.constant 80 : index
    %c0_349 = arith.constant 0 : index
    %320 = vector.load %arg3[%c80_348, %c0_349] : memref<96x1xf32, #tpu.memory_space<vmem>>, vector<16x1xf32>
    %321 = vector.broadcast %320 : vector<16x1xf32> to vector<16x6xf32>
    %322 = arith.addf %319, %321 : vector<16x6xf32>
    %323 = vector.extract_strided_slice %322 {offsets = [0, 0], sizes = [16, 4], strides = [1, 1]} : vector<16x6xf32> to vector<16x4xf32>
    %c0_350 = arith.constant 0 : index
    %c0_351 = arith.constant 0 : index
    %c0_352 = arith.constant 0 : index
    %324 = vector.load %arg5[%c0_350, %c0_351, %c0_352] : memref<1x16x4xf32, #tpu.memory_space<vmem>>, vector<1x16x4xf32>
    %325 = vector.shape_cast %324 : vector<1x16x4xf32> to vector<16x4xf32>
    %326 = vector.shape_cast %323 : vector<16x4xf32> to vector<1x16x4xf32>
    tpu.vector_store %arg5[%c0_350, %c0_351, %c0_352], %326 {strides = array<i32>} : memref<1x16x4xf32, #tpu.memory_space<vmem>>, vector<1x16x4xf32>,
    return
  }
  func.func @transform_0(%arg0: i32) -> (i32, i32, i32) {
    %c0_i32 = arith.constant 0 : i32
    %c0_i32_0 = arith.constant 0 : i32
    %c0_i32_1 = arith.constant 0 : i32
    return %arg0, %c0_i32, %c0_i32_0 : i32, i32, i32
  }
  func.func @transform_1(%arg0: i32) -> (i32, i32) {
    %c0_i32 = arith.constant 0 : i32
    %c0_i32_0 = arith.constant 0 : i32
    %c0_i32_1 = arith.constant 0 : i32
    return %c0_i32, %c0_i32_0 : i32, i32
  }
  func.func @transform_2(%arg0: i32) -> (i32, i32) {
    %c0_i32 = arith.constant 0 : i32
    %c0_i32_0 = arith.constant 0 : i32
    %c0_i32_1 = arith.constant 0 : i32
    return %c0_i32, %c0_i32_0 : i32, i32
  }
  func.func @transform_3(%arg0: i32) -> (i32, i32) {
    %c0_i32 = arith.constant 0 : i32
    %c0_i32_0 = arith.constant 0 : i32
    %c0_i32_1 = arith.constant 0 : i32
    return %c0_i32, %c0_i32_0 : i32, i32
  }
  func.func @transform_4(%arg0: i32) -> (i32, i32, i32) {
    %c0_i32 = arith.constant 0 : i32
    %c0_i32_0 = arith.constant 0 : i32
    %c0_i32_1 = arith.constant 0 : i32
    return %arg0, %c0_i32, %c0_i32_0 : i32, i32, i32
  }
}

</mosaic_0001>

<llo_original>
// kernel: forward.1
$region0: #{forward.1}
  #allocation0 [shape = 'u32[]', space=smem, size = 0x4, offset = 0x4, fixed_abs, tag = 'smem constant byte address 0x4 - core index']
  #allocation1 [shape = 'u32[144,128]{1,0:T(1,128)}', space=vmem, size = 0x12000, scoped, tag = 'internal scratch']
  #allocation2 [shape = 'bf16[32,256]{1,0:T(16,128)(2,1)}', space=vmem, size = 0x4000, scoped, tag = 'scratch operand']
  #allocation3 [shape = 'bf16[128,256]{1,0:T(16,128)(2,1)}', space=vmem, size = 0x10000, scoped, tag = 'scratch operand']
  #allocation4 [shape = 'f32[8,256]{1,0:T(8,128)}', space=vmem, size = 0x2000, scoped, tag = 'scratch operand']
  %s0 = inlined_call_operand.vmem [shape: f32[2,2,128], index: 0, kind: input, shape index: {}]
  %s1 = inlined_call_operand.vmem [shape: bf16[144,128], index: 1, kind: input, shape index: {}]
  %s2 = inlined_call_operand.vmem [shape: f32[96,1], index: 2, kind: input, shape index: {}]
  %s3 = inlined_call_operand.vmem [shape: bf16[144,1408], index: 3, kind: input, shape index: {}]
  %s4 = inlined_call_operand.vmem [shape: f32[2,16,4], index: 4, kind: output, shape index: {}]
  %s5 = sld [smem:[#allocation0]]
  $region49: #{forward.1} parent=0
    _
  %s7 = ssub.s32 1, %s5
  %s8 = scalar_select 0, %s7, %s5
  loop: start=0, step=1, limit=4
  $region2: #{forward.1} parent=0 // loop_pre_header
    _
  $region3: #{forward.1} parent=0 // loop_header
    %s10 = sphi 0, %s14
    %p11 = scmp.ge.s32.totalorder %s10, 4
    %s20 = sphi 0, %s22
    %s23 = sphi 0, %s20
    %s24 = sphi 0, %s23
    %s40 = sphi 0, %s24
    %s44 = sphi 0, %s44
    %s46 = sphi 0, %s44
    %s47 = sphi 0, %s46
    %s61 = sphi 0, %s47
    %s65 = sphi 0, %s65
    %s67 = sphi 0, %s65
    %s68 = sphi 0, %s67
    %s82 = sphi 0, %s68
    %s86 = sphi 0, %s86
    %s88 = sphi 0, %s86
    %s89 = sphi 0, %s88
    %s103 = sphi 0, %s89
    %s109 = sphi 0, %s111
    %s112 = sphi 0, %s109
    %s113 = sphi 0, %s112
    %s129 = sphi 0, %s113
  $region4: #{forward.1} parent=0 // loop_header_branch
    %13 = sbr.rel (%p11) target = $region8
  $region5: #{forward.1} parent=0 // loop_body
    %s15 = ssub.s32 %s10, 1
    %s16 = ssub.s32 %s10, 2
    %s17 = sadd.s32 %s10, 1
    %s18 = ssub.s32 %s10, %s17
    %p19 = scmp.eq.s32.totalorder %s18, 0
    %s21 = sadd.s32 %s20, 1
    %s22 = scalar_select %p19, %s20, %s21
    %p25 = pneg %p19
    %p26 = scmp.eq.s32.totalorder %s10, 1
    %p27 = por %p25, %p26
    %p28 = scmp.ne.s32.totalorder %s20, %s23
    %p29 = scmp.eq.s32.totalorder %s10, 0
    %p30 = por %p28, %p29
    %p31 = scmp.ne.s32.totalorder %s20, %s23
    %p32 = scmp.eq.s32.totalorder %s15, 1
    %p33 = por %p31, %p32
    %p34 = scmp.ne.s32.totalorder %s23, %s24
    %p35 = scmp.eq.s32.totalorder %s15, 0
    %p36 = por %p34, %p35
    %p37 = scmp.ne.s32.totalorder %s23, %s24
    %p38 = scmp.eq.s32.totalorder %s16, 1
    %p39 = por %p37, %p38
    %p41 = scmp.ne.s32.totalorder %s24, %s40
    %p42 = scmp.eq.s32.totalorder %s16, 0
    %p43 = por %p41, %p42
    %s45 = sadd.s32 %s44, 1
    %p48 = scmp.eq.s32.totalorder %s10, 1
    %p49 = scmp.ne.s32.totalorder %s44, %s46
    %p50 = scmp.eq.s32.totalorder %s10, 0
    %p51 = por %p49, %p50
    %p52 = scmp.ne.s32.totalorder %s44, %s46
    %p53 = scmp.eq.s32.totalorder %s15, 1
    %p54 = por %p52, %p53
    %p55 = scmp.ne.s32.totalorder %s46, %s47
    %p56 = scmp.eq.s32.totalorder %s15, 0
    %p57 = por %p55, %p56
    %p58 = scmp.ne.s32.totalorder %s46, %s47
    %p59 = scmp.eq.s32.totalorder %s16, 1
    %p60 = por %p58, %p59
    %p62 = scmp.ne.s32.totalorder %s47, %s61
    %p63 = scmp.eq.s32.totalorder %s16, 0
    %p64 = por %p62, %p63
    %s66 = sadd.s32 %s65, 1
    %p69 = scmp.eq.s32.totalorder %s10, 1
    %p70 = scmp.ne.s32.totalorder %s65, %s67
    %p71 = scmp.eq.s32.totalorder %s10, 0
    %p72 = por %p70, %p71
    %p73 = scmp.ne.s32.totalorder %s65, %s67
    %p74 = scmp.eq.s32.totalorder %s15, 1
    %p75 = por %p73, %p74
    %p76 = scmp.ne.s32.totalorder %s67, %s68
    %p77 = scmp.eq.s32.totalorder %s15, 0
    %p78 = por %p76, %p77
    %p79 = scmp.ne.s32.totalorder %s67, %s68
    %p80 = scmp.eq.s32.totalorder %s16, 1
    %p81 = por %p79, %p80
    %p83 = scmp.ne.s32.totalorder %s68, %s82
    %p84 = scmp.eq.s32.totalorder %s16, 0
    %p85 = por %p83, %p84
    %s87 = sadd.s32 %s86, 1
    %p90 = scmp.eq.s32.totalorder %s10, 1
    %p91 = scmp.ne.s32.totalorder %s86, %s88
    %p92 = scmp.eq.s32.totalorder %s10, 0
    %p93 = por %p91, %p92
    %p94 = scmp.ne.s32.totalorder %s86, %s88
    %p95 = scmp.eq.s32.totalorder %s15, 1
    %p96 = por %p94, %p95
    %p97 = scmp.ne.s32.totalorder %s88, %s89
    %p98 = scmp.eq.s32.totalorder %s15, 0
    %p99 = por %p97, %p98
    %p100 = scmp.ne.s32.totalorder %s88, %s89
    %p101 = scmp.eq.s32.totalorder %s16, 1
    %p102 = por %p100, %p101
    %p104 = scmp.ne.s32.totalorder %s89, %s103
    %p105 = scmp.eq.s32.totalorder %s16, 0
    %p106 = por %p104, %p105
    %s107 = ssub.s32 %s10, %s17
    %p108 = scmp.eq.s32.totalorder %s107, 0
    %s110 = sadd.s32 %s109, 1
    %s111 = scalar_select %p108, %s109, %s110
    %p114 = pneg %p108
    %p115 = scmp.eq.s32.totalorder %s10, 1
    %p116 = por %p114, %p115
    %p117 = scmp.ne.s32.totalorder %s109, %s112
    %p118 = scmp.eq.s32.totalorder %s10, 0
    %p119 = por %p117, %p118
    %p120 = scmp.ne.s32.totalorder %s109, %s112
    %p121 = scmp.eq.s32.totalorder %s15, 1
    %p122 = por %p120, %p121
    %p123 = scmp.ne.s32.totalorder %s112, %s113
    %p124 = scmp.eq.s32.totalorder %s15, 0
    %p125 = por %p123, %p124
    %p126 = scmp.ne.s32.totalorder %s112, %s113
    %p127 = scmp.eq.s32.totalorder %s16, 1
    %p128 = por %p126, %p127
    %p130 = scmp.ne.s32.totalorder %s113, %s129
    %p131 = scmp.eq.s32.totalorder %s16, 0
    %p132 = por %p130, %p131
    %p133 = scmp.le.s32.totalorder 1, %s10
    %p134 = scmp.lt.s32.totalorder %s10, 3
    %p135 = pnand %p133, %p134
    %p136 = pneg %p135
    // Predicated region
    $region9: #{forward.1} parent=5 // pred_check
      _
    $region10: #{forward.1} parent=5 // pred_check_branch
      %138 = sbr.rel (%p135) target = $region12
    $region11: #{forward.1} parent=5 // pred_region
      %s139 = ssub.s32 %s10, 1
      // Predicated region
      $region13: #{forward.1} parent=11 // pred_check
        %p140 = pneg %p57
      $region14: #{forward.1} parent=11 // pred_check_branch
        %142 = sbr.rel (%p140) target = $region16
      $region15: #{forward.1} parent=11 // pred_region
        _
      $region16: #{forward.1} parent=11 // pred_fallthru
        _
      // Predicated region
      $region17: #{forward.1} parent=11 // pred_check
        %p143 = pneg %p78
      $region18: #{forward.1} parent=11 // pred_check_branch
        %145 = sbr.rel (%p143) target = $region20
      $region19: #{forward.1} parent=11 // pred_region
        _
      $region20: #{forward.1} parent=11 // pred_fallthru
        _
      // Predicated region
      $region21: #{forward.1} parent=11 // pred_check
        %p146 = pneg %p99
      $region22: #{forward.1} parent=11 // pred_check_branch
        %148 = sbr.rel (%p146) target = $region24
      $region23: #{forward.1} parent=11 // pred_region
        _
      $region24: #{forward.1} parent=11 // pred_fallthru
        _
    $region12: #{forward.1} parent=5 // pred_fallthru
      _
    %p149 = scmp.lt.s32.totalorder %s10, 2
    // Predicated region
    $region25: #{forward.1} parent=5 // pred_check
      %p150 = pneg %p149
    $region26: #{forward.1} parent=5 // pred_check_branch
      %152 = sbr.rel (%p150) target = $region28
    $region27: #{forward.1} parent=5 // pred_region
      // Predicated region
      $region29: #{forward.1} parent=27 // pred_check
        %p153 = pneg %p30
      $region30: #{forward.1} parent=27 // pred_check_branch
        %155 = sbr.rel (%p153) target = $region32
      $region31: #{forward.1} parent=27 // pred_region
        %p156 = scmp.lt.s32.totalorder %s10, 1
        %s157 = scalar_select %p156, %s10, 1
        %s158 = smul.addr %s157, 2
        %s159 = scalar_lea.vmem %s0, %s158
      $region32: #{forward.1} parent=27 // pred_fallthru
        _
    $region28: #{forward.1} parent=5 // pred_fallthru
      _
    %p160 = scmp.le.s32.totalorder 1, %s10
    %p161 = scmp.lt.s32.totalorder %s10, 3
    %p162 = pnand %p160, %p161
    %p163 = pneg %p162
    // Predicated region
    $region33: #{forward.1} parent=5 // pred_check
      _
    $region34: #{forward.1} parent=5 // pred_check_branch
      %165 = sbr.rel (%p162) target = $region36
    $region35: #{forward.1} parent=5 // pred_region
      %s166 = ssub.s32 %s10, 1
      %p167 = scmp.lt.s32.totalorder %s15, 1
      %s168 = scalar_select %p167, %s15, 1
      %s169 = smul.addr %s168, 2
      %s170 = scalar_lea.vmem %s0, %s169
      %p171 = pneg %p36
      %p172 = pneg %p33
      %p173 = pneg %p57
      %p174 = pneg %p54
      %p175 = pneg %p78
      %p176 = pneg %p75
      %p177 = pneg %p99
      %p178 = pneg %p96
      %p179 = pneg %p125
      %p180 = pneg %p122
      %p181 = scmp.lt.s32.totalorder %s15, 1
      %s182 = scalar_select %p181, %s15, 1
      %s183 = smul.addr %s182, 2
      %s184 = smul.addr %s183, 8
      %s185 = scalar_lea.vmem %s4, %s184
      %p186 = scmp.lt.s32.totalorder %s15, 1
      %s187 = scalar_select %p186, %s15, 1
      %s188 = smul.addr %s187, 2
      %s189 = scalar_lea.vmem %s0, %s188
      %p190 = scmp.lt.s32.totalorder %s15, 1
      %s191 = scalar_select %p190, %s15, 1
      %s192 = smul.addr %s191, 2
      %s193 = smul.addr %s192, 8
      %s194 = scalar_lea.vmem %s4, %s193
      %196 = vst [vmem:[#allocation3] sm:$0xff] 0
      %197 = vst [vmem:[#allocation3 + $0x8] sm:$0xff] 0
      %198 = vst [vmem:[#allocation3 + $0x10] sm:$0xff] 0
      %199 = vst [vmem:[#allocation3 + $0x18] sm:$0xff] 0
      %200 = vst [vmem:[#allocation3 + $0x20] sm:$0xff] 0
      %201 = vst [vmem:[#allocation3 + $0x28] sm:$0xff] 0
      %202 = vst [vmem:[#allocation3 + $0x30] sm:$0xff] 0
      %203 = vst [vmem:[#allocation3 + $0x38] sm:$0xff] 0
      %204 = vst [vmem:[#allocation3 + $0x40] sm:$0xff] 0
      %205 = vst [vmem:[#allocation3 + $0x48] sm:$0xff] 0
      %206 = vst [vmem:[#allocation3 + $0x50] sm:$0xff] 0
      %207 = vst [vmem:[#allocation3 + $0x58] sm:$0xff] 0
      %208 = vst [vmem:[#allocation3 + $0x60] sm:$0xff] 0
      %209 = vst [vmem:[#allocation3 + $0x68] sm:$0xff] 0
      %210 = vst [vmem:[#allocation3 + $0x70] sm:$0xff] 0
      %211 = vst [vmem:[#allocation3 + $0x78] sm:$0xff] 0
      %v212 = vld [vmem:[%s189] sm:$0x3]
      %v213 = vpack.c.bf16 %v212, %v212
      %v214 = vld [vmem:[%s3] sm:$0xff]
      %v215 = vld [vmem:[%s3 + $0x2c] sm:$0xff]
      %v216 = vld [vmem:[%s3 + $0x58] sm:$0xff]
      %v217 = vld [vmem:[%s3 + $0x84] sm:$0xff]
      %v218 = vld [vmem:[%s3 + $0xb0] sm:$0xff]
      %v219 = vld [vmem:[%s3 + $0xdc] sm:$0xff]
      %v220 = vld [vmem:[%s3 + $0x108] sm:$0xff]
      %v221 = vld [vmem:[%s3 + $0x134] sm:$0xff]
      %v222 = vld [vmem:[%s3 + $0x160] sm:$0xff]
      %v223 = vld [vmem:[%s3 + $0x18c] sm:$0xff]
      %v224 = vld [vmem:[%s3 + $0x1b8] sm:$0xff]
      %v225 = vld [vmem:[%s3 + $0x1e4] sm:$0xff]
      %v226 = vld [vmem:[%s3 + $0x210] sm:$0xff]
      %v227 = vld [vmem:[%s3 + $0x23c] sm:$0xff]
      %v228 = vld [vmem:[%s3 + $0x268] sm:$0xff]
      %v229 = vld [vmem:[%s3 + $0x294] sm:$0xff]
      %v246 = vunpack.c.l.b16 %v214
      %v247 = vunpack.c.h.b16 %v214
      %v248 = vunpack.c.l.b16 %v215
      %v249 = vunpack.c.h.b16 %v215
      %v250 = vunpack.c.l.b16 %v216
      %v251 = vunpack.c.h.b16 %v216
      %v252 = vunpack.c.l.b16 %v217
      %v253 = vunpack.c.h.b16 %v217
      %v254 = vunpack.c.l.b16 %v218
      %v255 = vunpack.c.h.b16 %v218
      %v256 = vunpack.c.l.b16 %v219
      %v257 = vunpack.c.h.b16 %v219
      %v258 = vunpack.c.l.b16 %v220
      %v259 = vunpack.c.h.b16 %v220
      %v260 = vunpack.c.l.b16 %v221
      %v261 = vunpack.c.h.b16 %v221
      %v262 = vunpack.c.l.b16 %v222
      %v263 = vunpack.c.h.b16 %v222
      %v264 = vunpack.c.l.b16 %v223
      %v265 = vunpack.c.h.b16 %v223
      %v266 = vunpack.c.l.b16 %v224
      %v267 = vunpack.c.h.b16 %v224
      %v268 = vunpack.c.l.b16 %v225
      %v269 = vunpack.c.h.b16 %v225
      %v270 = vunpack.c.l.b16 %v226
      %v271 = vunpack.c.h.b16 %v226
      %v272 = vunpack.c.l.b16 %v227
      %v273 = vunpack.c.h.b16 %v227
      %v274 = vunpack.c.l.b16 %v228
      %v275 = vunpack.c.h.b16 %v228
      %v276 = vunpack.c.l.b16 %v229
      %v277 = vunpack.c.h.b16 %v229
      %v278 = vpack.c.b16 %v248, %v246
      %v279 = vpack.c.b16 %v249, %v247
      %v280 = vpack.c.b16 %v252, %v250
      %v281 = vpack.c.b16 %v253, %v251
      %v282 = vpack.c.b16 %v256, %v254
      %v283 = vpack.c.b16 %v257, %v255
      %v284 = vpack.c.b16 %v260, %v258
      %v285 = vpack.c.b16 %v261, %v259
      %v286 = vpack.c.b16 %v264, %v262
      %v287 = vpack.c.b16 %v265, %v263
      %v288 = vpack.c.b16 %v268, %v266
      %v289 = vpack.c.b16 %v269, %v267
      %v290 = vpack.c.b16 %v272, %v270
      %v291 = vpack.c.b16 %v273, %v271
      %v292 = vpack.c.b16 %v276, %v274
      %v293 = vpack.c.b16 %v277, %v275
      %310 = vmatprep.subr.bf16.mxu0 %v279
      %311 = vmatpush1.bf16.msra.mxu0 %v278
      %312 = vmatprep.subr.bf16.mxu0 %v281
      %313 = vmatpush1.bf16.msra.mxu0 %v280
      %314 = vmatprep.subr.bf16.mxu0 %v283
      %315 = vmatpush1.bf16.msra.mxu0 %v282
      %316 = vmatprep.subr.bf16.mxu0 %v285
      %317 = vmatpush1.bf16.msra.mxu0 %v284
      %318 = vmatprep.subr.bf16.mxu0 %v287
      %319 = vmatpush1.bf16.msra.mxu0 %v286
      %320 = vmatprep.subr.bf16.mxu0 %v289
      %321 = vmatpush1.bf16.msra.mxu0 %v288
      %322 = vmatprep.subr.bf16.mxu0 %v291
      %323 = vmatpush1.bf16.msra.mxu0 %v290
      %324 = vmatprep.subr.bf16.mxu0 %v293
      %325 = vmatpush1.bf16.msra.mxu0 %v292
      %326 = vmatprep.subr.bf16.mxu0 0
      %327 = vmatpush1.bf16.msra.mxu0 0
      %328 = vmatprep.subr.bf16.mxu0 0
      %329 = vmatpush1.bf16.msra.mxu0 0
      %330 = vmatprep.subr.bf16.mxu0 0
      %331 = vmatpush1.bf16.msra.mxu0 0
      %332 = vmatprep.subr.bf16.mxu0 0
      %333 = vmatpush1.bf16.msra.mxu0 0
      %334 = vmatprep.subr.bf16.mxu0 0
      %335 = vmatpush1.bf16.msra.mxu0 0
      %336 = vmatprep.subr.bf16.mxu0 0
      %337 = vmatpush1.bf16.msra.mxu0 0
      %338 = vmatprep.subr.bf16.mxu0 0
      %339 = vmatpush1.bf16.msra.mxu0 0
      %340 = vmatprep.subr.bf16.mxu0 0
      %341 = vmatpush1.bf16.msra.mxu0 0
      %342 = vmatprep.mubr.bf16.mxu0 0
      %343 = vmatmul.mubr.bf16.gmra.mrb[0].mxu0 %v213
      %v344 = vpop.f32.mrb[0].mxu0
      %v345 = vadd.f32 0.0, %v344
      %v346 = vpop.f32.mrb[0].mxu0
      %v347 = vadd.f32 0.0, %v346
      %v348 = vpop.f32.mrb[0].mxu0
      %v349 = vpop.f32.mrb[0].mxu0
      %350 = vdwg.mxu0
      %v351 = vpack.c.bf16 %v345, %v345
      %v352 = vpack.c.bf16 %v347, %v347
      %353 = vst [vmem:[#allocation2] sm:$0x1] %v351
      %vm354 = vcmask 434176
      %355 = vst.msk [vmem:[#allocation2 + $0x8] sm:$0x1] %vm354, %v352
      %v356 = vld [vmem:[#allocation2] sm:$0x1]
      %v357 = vld [vmem:[#allocation2 + $0x8] sm:$0x1]
      %358 = vst [vmem:[#allocation3] sm:$0x1] %v356
      %vm359 = vcmask 122880
      %360 = vst.msk [vmem:[#allocation3 + $0x8] sm:$0x1] %vm359, %v357
      %v361 = vld [vmem:[#allocation2] sm:$0x1]
      %v362 = vld [vmem:[#allocation2 + $0x8] sm:$0x1]
      %v365 = vrot.slane %v361, 4
      %v366 = vrot.slane %v362, 4
      %367 = vrot.lane.b32.xlu0 %v365, 127
      %v368 = vpop.permute.xlu0 %367
      %369 = vrot.lane.b32.xlu0 %v366, 127
      %v370 = vpop.permute.xlu0 %369
      %vm371 = vcmask 1039360
      %v372 = vsel %vm371, %v368, %v370
      %375 = vst [vmem:[#allocation3] sm:$0x10] %v372
      %vm376 = vcmask 126980
      %377 = vst.msk [vmem:[#allocation3 + $0x8] sm:$0x10] %vm376, %v370
      %v378 = vld [vmem:[#allocation2] sm:$0x1]
      %v379 = vld [vmem:[#allocation2 + $0x8] sm:$0x1]
      %382 = vrot.lane.b32.xlu0 %v378, 126
      %v383 = vpop.permute.xlu0 %382
      %384 = vrot.lane.b32.xlu0 %v379, 126
      %v385 = vpop.permute.xlu0 %384
      %vm386 = vcmask 1031168
      %v387 = vsel %vm386, %v383, %v385
      %390 = vst [vmem:[#allocation3 + $0x10] sm:$0x1] %v387
      %391 = vst.msk [vmem:[#allocation3 + $0x18] sm:$0x1] %vm359, %v385
      %v392 = vld [vmem:[#allocation2] sm:$0x1]
      %v393 = vld [vmem:[#allocation2 + $0x8] sm:$0x1]
      %v396 = vrot.slane %v392, 4
      %v397 = vrot.slane %v393, 4
      %398 = vrot.lane.b32.xlu0 %v396, 110
      %v399 = vpop.permute.xlu0 %398
      %400 = vrot.lane.b32.xlu0 %v397, 110
      %v401 = vpop.permute.xlu0 %400
      %vm402 = vcmask 900096
      %v403 = vsel %vm402, %v399, %v401
      %406 = vst [vmem:[#allocation3 + $0x10] sm:$0x10] %v403
      %407 = vst.msk [vmem:[#allocation3 + $0x18] sm:$0x10] %vm376, %v401
      %v408 = vld [vmem:[#allocation2] sm:$0x1]
      %v409 = vld [vmem:[#allocation2 + $0x8] sm:$0x1]
      %412 = vrot.lane.b32.xlu0 %v408, 109
      %v413 = vpop.permute.xlu0 %412
      %414 = vrot.lane.b32.xlu0 %v409, 109
      %v415 = vpop.permute.xlu0 %414
      %vm416 = vcmask 891904
      %v417 = vsel %vm416, %v413, %v415
      %420 = vst [vmem:[#allocation3 + $0x20] sm:$0x1] %v417
      %421 = vst.msk [vmem:[#allocation3 + $0x28] sm:$0x1] %vm359, %v415
      %v422 = vld [vmem:[#allocation2] sm:$0x1]
      %v423 = vld [vmem:[#allocation2 + $0x8] sm:$0x1]
      %v426 = vrot.slane %v422, 4
      %v427 = vrot.slane %v423, 4
      %428 = vrot.lane.b32.xlu0 %v426, 108
      %v429 = vpop.permute.xlu0 %428
      %430 = vrot.lane.b32.xlu0 %v427, 108
      %v431 = vpop.permute.xlu0 %430
      %vm432 = vcmask 883712
      %v433 = vsel %vm432, %v429, %v431
      %436 = vst [vmem:[#allocation3 + $0x20] sm:$0x10] %v433
      %437 = vst.msk [vmem:[#allocation3 + $0x28] sm:$0x10] %vm376, %v431
      %v438 = vld [vmem:[#allocation2] sm:$0x1]
      %v439 = vld [vmem:[#allocation2 + $0x8] sm:$0x1]
      %442 = vrot.lane.b32.xlu0 %v438, 92
      %v443 = vpop.permute.xlu0 %442
      %444 = vrot.lane.b32.xlu0 %v439, 92
      %v445 = vpop.permute.xlu0 %444
      %vm446 = vcmask 752640
      %v447 = vsel %vm446, %v443, %v445
      %450 = vst [vmem:[#allocation3 + $0x30] sm:$0x1] %v447
      %451 = vst.msk [vmem:[#allocation3 + $0x38] sm:$0x1] %vm359, %v445
      %v452 = vld [vmem:[#allocation2] sm:$0x1]
      %v453 = vld [vmem:[#allocation2 + $0x8] sm:$0x1]
      %v456 = vrot.slane %v452, 4
      %v457 = vrot.slane %v453, 4
      %458 = vrot.lane.b32.xlu0 %v456, 91
      %v459 = vpop.permute.xlu0 %458
      %460 = vrot.lane.b32.xlu0 %v457, 91
      %v461 = vpop.permute.xlu0 %460
      %vm462 = vcmask 744448
      %v463 = vsel %vm462, %v459, %v461
      %466 = vst [vmem:[#allocation3 + $0x30] sm:$0x10] %v463
      %467 = vst.msk [vmem:[#allocation3 + $0x38] sm:$0x10] %vm376, %v461
      %v468 = vld [vmem:[#allocation2] sm:$0x1]
      %v469 = vld [vmem:[#allocation2 + $0x8] sm:$0x1]
      %472 = vrot.lane.b32.xlu0 %v468, 90
      %v473 = vpop.permute.xlu0 %472
      %474 = vrot.lane.b32.xlu0 %v469, 90
      %v475 = vpop.permute.xlu0 %474
      %vm476 = vcmask 736256
      %v477 = vsel %vm476, %v473, %v475
      %480 = vst [vmem:[#allocation3 + $0x40] sm:$0x1] %v477
      %481 = vst.msk [vmem:[#allocation3 + $0x48] sm:$0x1] %vm359, %v475
      %v482 = vld [vmem:[%s1] sm:$0x3]
      %v483 = vld [vmem:[#allocation3] sm:$0xff]
      %v484 = vld [vmem:[#allocation3 + $0x8] sm:$0xff]
      %v485 = vld [vmem:[#allocation3 + $0x10] sm:$0xff]
      %v486 = vld [vmem:[#allocation3 + $0x18] sm:$0xff]
      %v487 = vld [vmem:[#allocation3 + $0x20] sm:$0xff]
      %v488 = vld [vmem:[#allocation3 + $0x28] sm:$0xff]
      %v489 = vld [vmem:[#allocation3 + $0x30] sm:$0xff]
      %v490 = vld [vmem:[#allocation3 + $0x38] sm:$0xff]
      %v491 = vld [vmem:[#allocation3 + $0x40] sm:$0xf]
      %v492 = vld [vmem:[#allocation3 + $0x48] sm:$0xf]
      %v493 = vld [vmem:[%s2] sm:$0xf]
      %495 = vset.pattern.permute.xlu0 0
      %496 = vperm.xlu0 %495, %v493
      %v497 = vpop.permute.xlu0 %496
      %vm499 = vcmask 588800
      %v501 = vsel %vm499, %v482, 0
      %vm503 = vcmask 1043456
      %v505 = vsel %vm503, %v491, 0
      %v508 = vsel %vm503, %v492, 0
      %510 = vmatprep.subr.bf16.mxu0 %v484
      %511 = vmatpush1.bf16.msra.mxu0 %v483
      %512 = vmatprep.subr.bf16.mxu0 %v486
      %513 = vmatpush1.bf16.msra.mxu0 %v485
      %514 = vmatprep.subr.bf16.mxu0 %v488
      %515 = vmatpush1.bf16.msra.mxu0 %v487
      %516 = vmatprep.subr.bf16.mxu0 %v490
      %517 = vmatpush1.bf16.msra.mxu0 %v489
      %518 = vmatprep.subr.bf16.mxu0 %v508
      %519 = vmatpush1.bf16.msra.mxu0 %v505
      %520 = vmatprep.subr.bf16.mxu0 0
      %521 = vmatpush1.bf16.msra.mxu0 0
      %522 = vmatprep.subr.bf16.mxu0 0
      %523 = vmatpush1.bf16.msra.mxu0 0
      %524 = vmatprep.subr.bf16.mxu0 0
      %525 = vmatpush1.bf16.msra.mxu0 0
      %526 = vmatprep.subr.bf16.mxu0 0
      %527 = vmatpush1.bf16.msra.mxu0 0
      %528 = vmatprep.subr.bf16.mxu0 0
      %529 = vmatpush1.bf16.msra.mxu0 0
      %530 = vmatprep.subr.bf16.mxu0 0
      %531 = vmatpush1.bf16.msra.mxu0 0
      %532 = vmatprep.subr.bf16.mxu0 0
      %533 = vmatpush1.bf16.msra.mxu0 0
      %534 = vmatprep.subr.bf16.mxu0 0
      %535 = vmatpush1.bf16.msra.mxu0 0
      %536 = vmatprep.subr.bf16.mxu0 0
      %537 = vmatpush1.bf16.msra.mxu0 0
      %538 = vmatprep.subr.bf16.mxu0 0
      %539 = vmatpush1.bf16.msra.mxu0 0
      %540 = vmatprep.subr.bf16.mxu0 0
      %541 = vmatpush1.bf16.msra.mxu0 0
      %542 = vmatprep.mubr.bf16.mxu0 0
      %543 = vmatmul.mubr.bf16.gmra.mrb[0].mxu0 %v501
      %v544 = vpop.f32.mrb[0].mxu0
      %v545 = vadd.f32 %v497, %v544
      %v546 = vpop.f32.mrb[0].mxu0
      %v547 = vadd.f32 %v497, %v546
      %v548 = vpop.f32.mrb[0].mxu0
      %v549 = vpop.f32.mrb[0].mxu0
      %550 = vdwg.mxu0
      %v551 = vpack.c.bf16 %v545, %v545
      %v552 = vpack.c.bf16 %v547, %v547
      %v553 = vld [vmem:[%s3 + $0x8] sm:$0xff]
      %v554 = vld [vmem:[%s3 + $0x34] sm:$0xff]
      %v555 = vld [vmem:[%s3 + $0x60] sm:$0xff]
      %v556 = vld [vmem:[%s3 + $0x8c] sm:$0xff]
      %v557 = vld [vmem:[%s3 + $0xb8] sm:$0xff]
      %v558 = vld [vmem:[%s3 + $0xe4] sm:$0xff]
      %v559 = vld [vmem:[%s3 + $0x110] sm:$0xff]
      %v560 = vld [vmem:[%s3 + $0x13c] sm:$0xff]
      %v561 = vld [vmem:[%s3 + $0x168] sm:$0xff]
      %v562 = vld [vmem:[%s3 + $0x194] sm:$0xff]
      %v563 = vld [vmem:[%s3 + $0x1c0] sm:$0xff]
      %v564 = vld [vmem:[%s3 + $0x1ec] sm:$0xff]
      %v565 = vld [vmem:[%s3 + $0x218] sm:$0xff]
      %v566 = vld [vmem:[%s3 + $0x244] sm:$0xff]
      %v567 = vld [vmem:[%s3 + $0x270] sm:$0xff]
      %v568 = vld [vmem:[%s3 + $0x29c] sm:$0xff]
      %v569 = vld [vmem:[%s3 + $0x2c8] sm:$0xff]
      %v570 = vld [vmem:[%s3 + $0x2f4] sm:$0xff]
      %v589 = vunpack.c.l.b16 %v553
      %v590 = vunpack.c.h.b16 %v553
      %v591 = vunpack.c.l.b16 %v554
      %v592 = vunpack.c.h.b16 %v554
      %v593 = vunpack.c.l.b16 %v555
      %v594 = vunpack.c.h.b16 %v555
      %v595 = vunpack.c.l.b16 %v556
      %v596 = vunpack.c.h.b16 %v556
      %v597 = vunpack.c.l.b16 %v557
      %v598 = vunpack.c.h.b16 %v557
      %v599 = vunpack.c.l.b16 %v558
      %v600 = vunpack.c.h.b16 %v558
      %v601 = vunpack.c.l.b16 %v559
      %v602 = vunpack.c.h.b16 %v559
      %v603 = vunpack.c.l.b16 %v560
      %v604 = vunpack.c.h.b16 %v560
      %v605 = vunpack.c.l.b16 %v561
      %v606 = vunpack.c.h.b16 %v561
      %v607 = vunpack.c.l.b16 %v562
      %v608 = vunpack.c.h.b16 %v562
      %v609 = vunpack.c.l.b16 %v563
      %v610 = vunpack.c.h.b16 %v563
      %v611 = vunpack.c.l.b16 %v564
      %v612 = vunpack.c.h.b16 %v564
      %v613 = vunpack.c.l.b16 %v565
      %v614 = vunpack.c.h.b16 %v565
      %v615 = vunpack.c.l.b16 %v566
      %v616 = vunpack.c.h.b16 %v566
      %v617 = vunpack.c.l.b16 %v567
      %v618 = vunpack.c.h.b16 %v567
      %v619 = vunpack.c.l.b16 %v568
      %v620 = vunpack.c.h.b16 %v568
      %v621 = vunpack.c.l.b16 %v569
      %v622 = vunpack.c.h.b16 %v569
      %v623 = vunpack.c.l.b16 %v570
      %v624 = vunpack.c.h.b16 %v570
      %v625 = vpack.c.b16 %v591, %v589
      %v626 = vpack.c.b16 %v592, %v590
      %v627 = vpack.c.b16 %v595, %v593
      %v628 = vpack.c.b16 %v596, %v594
      %v629 = vpack.c.b16 %v599, %v597
      %v630 = vpack.c.b16 %v600, %v598
      %v631 = vpack.c.b16 %v603, %v601
      %v632 = vpack.c.b16 %v604, %v602
      %v633 = vpack.c.b16 %v607, %v605
      %v634 = vpack.c.b16 %v608, %v606
      %v635 = vpack.c.b16 %v611, %v609
      %v636 = vpack.c.b16 %v612, %v610
      %v637 = vpack.c.b16 %v615, %v613
      %v638 = vpack.c.b16 %v616, %v614
      %v639 = vpack.c.b16 %v619, %v617
      %v640 = vpack.c.b16 %v620, %v618
      %v641 = vpack.c.b16 %v623, %v621
      %v642 = vpack.c.b16 %v624, %v622
      %vm661 = vcmask 130048
      %v663 = vsel %vm661, %v552, 0
      %665 = vmatprep.subr.bf16.mxu0 %v626
      %666 = vmatpush1.bf16.msra.mxu0 %v625
      %667 = vmatprep.subr.bf16.mxu0 %v628
      %668 = vmatpush1.bf16.msra.mxu0 %v627
      %669 = vmatprep.subr.bf16.mxu0 %v630
      %670 = vmatpush1.bf16.msra.mxu0 %v629
      %671 = vmatprep.subr.bf16.mxu0 %v632
      %672 = vmatpush1.bf16.msra.mxu0 %v631
      %673 = vmatprep.subr.bf16.mxu0 %v634
      %674 = vmatpush1.bf16.msra.mxu0 %v633
      %675 = vmatprep.subr.bf16.mxu0 %v636
      %676 = vmatpush1.bf16.msra.mxu0 %v635
      %677 = vmatprep.subr.bf16.mxu0 %v638
      %678 = vmatpush1.bf16.msra.mxu0 %v637
      %679 = vmatprep.subr.bf16.mxu0 %v640
      %680 = vmatpush1.bf16.msra.mxu0 %v639
      %681 = vmatprep.subr.bf16.mxu0 %v642
      %682 = vmatpush1.bf16.msra.mxu0 %v641
      %683 = vmatprep.subr.bf16.mxu0 0
      %684 = vmatpush1.bf16.msra.mxu0 0
      %685 = vmatprep.subr.bf16.mxu0 0
      %686 = vmatpush1.bf16.msra.mxu0 0
      %687 = vmatprep.subr.bf16.mxu0 0
      %688 = vmatpush1.bf16.msra.mxu0 0
      %689 = vmatprep.subr.bf16.mxu0 0
      %690 = vmatpush1.bf16.msra.mxu0 0
      %691 = vmatprep.subr.bf16.mxu0 0
      %692 = vmatpush1.bf16.msra.mxu0 0
      %693 = vmatprep.subr.bf16.mxu0 0
      %694 = vmatpush1.bf16.msra.mxu0 0
      %695 = vmatprep.subr.bf16.mxu0 0
      %696 = vmatpush1.bf16.msra.mxu0 0
      %697 = vmatprep.mubr.bf16.mxu0 %v663
      %698 = vmatmul.mubr.bf16.gmra.mrb[0].mxu0 %v551
      %v699 = vpop.f32.mrb[0].mxu0
      %v700 = vadd.f32 0.0, %v699
      %v701 = vpop.f32.mrb[0].mxu0
      %v702 = vadd.f32 0.0, %v701
      %v703 = vpop.f32.mrb[0].mxu0
      %v704 = vpop.f32.mrb[0].mxu0
      %705 = vdwg.mxu0
      %706 = vst [vmem:[#allocation4] sm:$0xf] %v700
      %vm707 = vcmask 437248
      %708 = vst.msk [vmem:[#allocation4 + $0x8] sm:$0xf] %vm707, %v702
      %vm709 = vcmp.gt.f32.partialorder %v700, 0.0
      %vm710 = vcmp.gt.f32.partialorder %v702, 0.0
      %v711 = vmin.f32 %v700, 0.0
      %v712 = vmin.f32 %v702, 0.0
      %v713 = vmul.f32 %v711, 1.442695
      %v714 = vpow.pop %v713
      %v715 = vmul.f32 %v712, 1.442695
      %v716 = vpow.pop %v715
      %v717 = vsub.f32 %v714, 1.0
      %v718 = vsub.f32 %v716, 1.0
      %v719 = vsel %vm709, %v700, %v717
      %v720 = vsel %vm710, %v702, %v718
      %v721 = vpack.c.bf16 %v719, %v719
      %v722 = vpack.c.bf16 %v720, %v720
      %723 = vst [vmem:[#allocation2] sm:$0x3] %v721
      %vm724 = vcmask 435200
      %725 = vst.msk [vmem:[#allocation2 + $0x8] sm:$0x3] %vm724, %v722
      %v726 = vld [vmem:[#allocation2] sm:$0x3]
      %v727 = vld [vmem:[#allocation2 + $0x8] sm:$0x3]
      %728 = vst [vmem:[#allocation3] sm:$0x3] %v726
      %vm729 = vcmask 123904
      %730 = vst.msk [vmem:[#allocation3 + $0x8] sm:$0x3] %vm729, %v727
      %v731 = vld [vmem:[#allocation2] sm:$0x3]
      %v732 = vld [vmem:[#allocation2 + $0x8] sm:$0x3]
      %v735 = vrot.slane %v731, 4
      %v736 = vrot.slane %v732, 4
      %737 = vrot.lane.b32.xlu0 %v735, 127
      %v738 = vpop.permute.xlu0 %737
      %739 = vrot.lane.b32.xlu0 %v736, 127
      %v740 = vpop.permute.xlu0 %739
      %v741 = vsel %vm371, %v738, %v740
      %744 = vst [vmem:[#allocation3] sm:$0x30] %v741
      %vm745 = vcmask 128004
      %746 = vst.msk [vmem:[#allocation3 + $0x8] sm:$0x30] %vm745, %v740
      %v747 = vld [vmem:[#allocation2] sm:$0x3]
      %v748 = vld [vmem:[#allocation2 + $0x8] sm:$0x3]
      %751 = vrot.lane.b32.xlu0 %v747, 126
      %v752 = vpop.permute.xlu0 %751
      %753 = vrot.lane.b32.xlu0 %v748, 126
      %v754 = vpop.permute.xlu0 %753
      %v755 = vsel %vm386, %v752, %v754
      %758 = vst [vmem:[#allocation3 + $0x10] sm:$0x3] %v755
      %759 = vst.msk [vmem:[#allocation3 + $0x18] sm:$0x3] %vm729, %v754
      %v760 = vld [vmem:[#allocation2] sm:$0x3]
      %v761 = vld [vmem:[#allocation2 + $0x8] sm:$0x3]
      %v764 = vrot.slane %v760, 4
      %v765 = vrot.slane %v761, 4
      %766 = vrot.lane.b32.xlu0 %v764, 110
      %v767 = vpop.permute.xlu0 %766
      %768 = vrot.lane.b32.xlu0 %v765, 110
      %v769 = vpop.permute.xlu0 %768
      %v770 = vsel %vm402, %v767, %v769
      %773 = vst [vmem:[#allocation3 + $0x10] sm:$0x30] %v770
      %774 = vst.msk [vmem:[#allocation3 + $0x18] sm:$0x30] %vm745, %v769
      %v775 = vld [vmem:[#allocation2] sm:$0x3]
      %v776 = vld [vmem:[#allocation2 + $0x8] sm:$0x3]
      %779 = vrot.lane.b32.xlu0 %v775, 109
      %v780 = vpop.permute.xlu0 %779
      %781 = vrot.lane.b32.xlu0 %v776, 109
      %v782 = vpop.permute.xlu0 %781
      %v783 = vsel %vm416, %v780, %v782
      %786 = vst [vmem:[#allocation3 + $0x20] sm:$0x3] %v783
      %787 = vst.msk [vmem:[#allocation3 + $0x28] sm:$0x3] %vm729, %v782
      %v788 = vld [vmem:[#allocation2] sm:$0x3]
      %v789 = vld [vmem:[#allocation2 + $0x8] sm:$0x3]
      %v792 = vrot.slane %v788, 4
      %v793 = vrot.slane %v789, 4
      %794 = vrot.lane.b32.xlu0 %v792, 108
      %v795 = vpop.permute.xlu0 %794
      %796 = vrot.lane.b32.xlu0 %v793, 108
      %v797 = vpop.permute.xlu0 %796
      %v798 = vsel %vm432, %v795, %v797
      %801 = vst [vmem:[#allocation3 + $0x20] sm:$0x30] %v798
      %802 = vst.msk [vmem:[#allocation3 + $0x28] sm:$0x30] %vm745, %v797
      %v803 = vld [vmem:[#allocation2] sm:$0x3]
      %v804 = vld [vmem:[#allocation2 + $0x8] sm:$0x3]
      %807 = vrot.lane.b32.xlu0 %v803, 92
      %v808 = vpop.permute.xlu0 %807
      %809 = vrot.lane.b32.xlu0 %v804, 92
      %v810 = vpop.permute.xlu0 %809
      %v811 = vsel %vm446, %v808, %v810
      %814 = vst [vmem:[#allocation3 + $0x30] sm:$0x3] %v811
      %815 = vst.msk [vmem:[#allocation3 + $0x38] sm:$0x3] %vm729, %v810
      %v816 = vld [vmem:[#allocation2] sm:$0x3]
      %v817 = vld [vmem:[#allocation2 + $0x8] sm:$0x3]
      %v820 = vrot.slane %v816, 4
      %v821 = vrot.slane %v817, 4
      %822 = vrot.lane.b32.xlu0 %v820, 91
      %v823 = vpop.permute.xlu0 %822
      %824 = vrot.lane.b32.xlu0 %v821, 91
      %v825 = vpop.permute.xlu0 %824
      %v826 = vsel %vm462, %v823, %v825
      %829 = vst [vmem:[#allocation3 + $0x30] sm:$0x30] %v826
      %830 = vst.msk [vmem:[#allocation3 + $0x38] sm:$0x30] %vm745, %v825
      %v831 = vld [vmem:[#allocation2] sm:$0x3]
      %v832 = vld [vmem:[#allocation2 + $0x8] sm:$0x3]
      %835 = vrot.lane.b32.xlu0 %v831, 90
      %v836 = vpop.permute.xlu0 %835
      %837 = vrot.lane.b32.xlu0 %v832, 90
      %v838 = vpop.permute.xlu0 %837
      %v839 = vsel %vm476, %v836, %v838
      %842 = vst [vmem:[#allocation3 + $0x40] sm:$0x3] %v839
      %843 = vst.msk [vmem:[#allocation3 + $0x48] sm:$0x3] %vm729, %v838
      %v844 = vld [vmem:[%s1 + $0x8] sm:$0x1]
      %v845 = vld [vmem:[#allocation3] sm:$0xff]
      %v846 = vld [vmem:[#allocation3 + $0x8] sm:$0xff]
      %v847 = vld [vmem:[#allocation3 + $0x10] sm:$0xff]
      %v848 = vld [vmem:[#allocation3 + $0x18] sm:$0xff]
      %v849 = vld [vmem:[#allocation3 + $0x20] sm:$0xff]
      %v850 = vld [vmem:[#allocation3 + $0x28] sm:$0xff]
      %v851 = vld [vmem:[#allocation3 + $0x30] sm:$0xff]
      %v852 = vld [vmem:[#allocation3 + $0x38] sm:$0xff]
      %v853 = vld [vmem:[#allocation3 + $0x40] sm:$0xf]
      %v854 = vld [vmem:[#allocation3 + $0x48] sm:$0xf]
      %v855 = vld [vmem:[%s2 + $0x8] sm:$0x3]
      %857 = vset.pattern.permute.xlu0 0
      %858 = vperm.xlu0 %857, %v855
      %v859 = vpop.permute.xlu0 %858
      %v862 = vsel %vm499, %v844, 0
      %v865 = vsel %vm503, %v853, 0
      %v868 = vsel %vm503, %v854, 0
      %870 = vmatprep.subr.bf16.mxu0 %v846
      %871 = vmatpush1.bf16.msra.mxu0 %v845
      %872 = vmatprep.subr.bf16.mxu0 %v848
      %873 = vmatpush1.bf16.msra.mxu0 %v847
      %874 = vmatprep.subr.bf16.mxu0 %v850
      %875 = vmatpush1.bf16.msra.mxu0 %v849
      %876 = vmatprep.subr.bf16.mxu0 %v852
      %877 = vmatpush1.bf16.msra.mxu0 %v851
      %878 = vmatprep.subr.bf16.mxu0 %v868
      %879 = vmatpush1.bf16.msra.mxu0 %v865
      %880 = vmatprep.subr.bf16.mxu0 0
      %881 = vmatpush1.bf16.msra.mxu0 0
      %882 = vmatprep.subr.bf16.mxu0 0
      %883 = vmatpush1.bf16.msra.mxu0 0
      %884 = vmatprep.subr.bf16.mxu0 0
      %885 = vmatpush1.bf16.msra.mxu0 0
      %886 = vmatprep.subr.bf16.mxu0 0
      %887 = vmatpush1.bf16.msra.mxu0 0
      %888 = vmatprep.subr.bf16.mxu0 0
      %889 = vmatpush1.bf16.msra.mxu0 0
      %890 = vmatprep.subr.bf16.mxu0 0
      %891 = vmatpush1.bf16.msra.mxu0 0
      %892 = vmatprep.subr.bf16.mxu0 0
      %893 = vmatpush1.bf16.msra.mxu0 0
      %894 = vmatprep.subr.bf16.mxu0 0
      %895 = vmatpush1.bf16.msra.mxu0 0
      %896 = vmatprep.subr.bf16.mxu0 0
      %897 = vmatpush1.bf16.msra.mxu0 0
      %898 = vmatprep.subr.bf16.mxu0 0
      %899 = vmatpush1.bf16.msra.mxu0 0
      %900 = vmatprep.subr.bf16.mxu0 0
      %901 = vmatpush1.bf16.msra.mxu0 0
      %902 = vmatprep.mubr.bf16.mxu0 0
      %903 = vmatmul.mubr.bf16.gmra.mrb[0].mxu0 %v862
      %v904 = vpop.f32.mrb[0].mxu0
      %v905 = vadd.f32 %v859, %v904
      %v906 = vpop.f32.mrb[0].mxu0
      %v907 = vadd.f32 %v859, %v906
      %v908 = vpop.f32.mrb[0].mxu0
      %v909 = vpop.f32.mrb[0].mxu0
      %910 = vdwg.mxu0
      %vm911 = vcmp.gt.f32.partialorder %v905, 0.0
      %vm912 = vcmp.gt.f32.partialorder %v907, 0.0
      %v913 = vmin.f32 %v905, 0.0
      %v914 = vmin.f32 %v907, 0.0
      %v915 = vmul.f32 %v913, 1.442695
      %v916 = vpow.pop %v915
      %v917 = vmul.f32 %v914, 1.442695
      %v918 = vpow.pop %v917
      %v919 = vsub.f32 %v916, 1.0
      %v920 = vsub.f32 %v918, 1.0
      %v921 = vsel %vm911, %v905, %v919
      %v922 = vsel %vm912, %v907, %v920
      %v923 = vpack.c.bf16 %v921, %v921
      %v924 = vpack.c.bf16 %v922, %v922
      %v925 = vld [vmem:[%s1 + $0x10] sm:$0x3]
      %v926 = vld [vmem:[%s2 + $0x10] sm:$0xf]
      %928 = vset.pattern.permute.xlu0 0
      %929 = vperm.xlu0 %928, %v926
      %v930 = vpop.permute.xlu0 %929
      %vm932 = vcmask 15360
      %v934 = vsel %vm932, %v925, 0
      %vm936 = vcmask 1040384
      %v938 = vsel %vm936, %v923, 0
      %v941 = vsel %vm936, %v924, 0
      %943 = vmatprep.subr.bf16.mxu0 %v941
      %944 = vmatpush1.bf16.msra.mxu0 %v938
      %945 = vmatprep.subr.bf16.mxu0 0
      %946 = vmatpush1.bf16.msra.mxu0 0
      %947 = vmatprep.subr.bf16.mxu0 0
      %948 = vmatpush1.bf16.msra.mxu0 0
      %949 = vmatprep.subr.bf16.mxu0 0
      %950 = vmatpush1.bf16.msra.mxu0 0
      %951 = vmatprep.subr.bf16.mxu0 0
      %952 = vmatpush1.bf16.msra.mxu0 0
      %953 = vmatprep.subr.bf16.mxu0 0
      %954 = vmatpush1.bf16.msra.mxu0 0
      %955 = vmatprep.subr.bf16.mxu0 0
      %956 = vmatpush1.bf16.msra.mxu0 0
      %957 = vmatprep.subr.bf16.mxu0 0
      %958 = vmatpush1.bf16.msra.mxu0 0
      %959 = vmatprep.subr.bf16.mxu0 0
      %960 = vmatpush1.bf16.msra.mxu0 0
      %961 = vmatprep.subr.bf16.mxu0 0
      %962 = vmatpush1.bf16.msra.mxu0 0
      %963 = vmatprep.subr.bf16.mxu0 0
      %964 = vmatpush1.bf16.msra.mxu0 0
      %965 = vmatprep.subr.bf16.mxu0 0
      %966 = vmatpush1.bf16.msra.mxu0 0
      %967 = vmatprep.subr.bf16.mxu0 0
      %968 = vmatpush1.bf16.msra.mxu0 0
      %969 = vmatprep.subr.bf16.mxu0 0
      %970 = vmatpush1.bf16.msra.mxu0 0
      %971 = vmatprep.subr.bf16.mxu0 0
      %972 = vmatpush1.bf16.msra.mxu0 0
      %973 = vmatprep.subr.bf16.mxu0 0
      %974 = vmatpush1.bf16.msra.mxu0 0
      %975 = vmatprep.mubr.bf16.mxu0 0
      %976 = vmatmul.mubr.bf16.gmra.mrb[0].mxu0 %v934
      %v977 = vpop.f32.mrb[0].mxu0
      %v978 = vadd.f32 %v930, %v977
      %v979 = vpop.f32.mrb[0].mxu0
      %v980 = vadd.f32 %v930, %v979
      %v981 = vpop.f32.mrb[0].mxu0
      %v982 = vpop.f32.mrb[0].mxu0
      %983 = vdwg.mxu0
      %v984 = vld [vmem:[#allocation4] sm:$0xf]
      %v985 = vld [vmem:[#allocation4 + $0x8] sm:$0xf]
      %988 = vrot.lane.b32.xlu0 %v984, 109
      %v989 = vpop.permute.xlu0 %988
      %990 = vrot.lane.b32.xlu0 %v985, 109
      %v991 = vpop.permute.xlu0 %990
      %vm992 = vcmask 891904
      %v993 = vsel %vm992, %v989, %v991
      %v996 = vadd.f32 %v978, %v993
      %v997 = vadd.f32 %v980, %v991
      %v998 = vpack.c.bf16 %v996, %v996
      %v999 = vpack.c.bf16 %v997, %v997
      %v1000 = vld [vmem:[%s3 + $0x10] sm:$0xff]
      %v1001 = vld [vmem:[%s3 + $0x3c] sm:$0xff]
      %v1002 = vld [vmem:[%s3 + $0x68] sm:$0xff]
      %v1003 = vld [vmem:[%s3 + $0x94] sm:$0xff]
      %v1004 = vld [vmem:[%s3 + $0xc0] sm:$0xff]
      %v1005 = vld [vmem:[%s3 + $0xec] sm:$0xff]
      %v1006 = vld [vmem:[%s3 + $0x118] sm:$0xff]
      %v1007 = vld [vmem:[%s3 + $0x144] sm:$0xff]
      %v1008 = vld [vmem:[%s3 + $0x170] sm:$0xff]
      %v1009 = vld [vmem:[%s3 + $0x19c] sm:$0xff]
      %v1010 = vld [vmem:[%s3 + $0x1c8] sm:$0xff]
      %v1011 = vld [vmem:[%s3 + $0x1f4] sm:$0xff]
      %v1012 = vld [vmem:[%s3 + $0x220] sm:$0xff]
      %v1013 = vld [vmem:[%s3 + $0x24c] sm:$0xff]
      %v1014 = vld [vmem:[%s3 + $0x278] sm:$0xff]
      %v1015 = vld [vmem:[%s3 + $0x2a4] sm:$0xff]
      %v1016 = vld [vmem:[%s3 + $0x2d0] sm:$0xff]
      %v1017 = vld [vmem:[%s3 + $0x2fc] sm:$0xff]
      %v1036 = vunpack.c.l.b16 %v1000
      %v1037 = vunpack.c.h.b16 %v1000
      %v1038 = vunpack.c.l.b16 %v1001
      %v1039 = vunpack.c.h.b16 %v1001
      %v1040 = vunpack.c.l.b16 %v1002
      %v1041 = vunpack.c.h.b16 %v1002
      %v1042 = vunpack.c.l.b16 %v1003
      %v1043 = vunpack.c.h.b16 %v1003
      %v1044 = vunpack.c.l.b16 %v1004
      %v1045 = vunpack.c.h.b16 %v1004
      %v1046 = vunpack.c.l.b16 %v1005
      %v1047 = vunpack.c.h.b16 %v1005
      %v1048 = vunpack.c.l.b16 %v1006
      %v1049 = vunpack.c.h.b16 %v1006
      %v1050 = vunpack.c.l.b16 %v1007
      %v1051 = vunpack.c.h.b16 %v1007
      %v1052 = vunpack.c.l.b16 %v1008
      %v1053 = vunpack.c.h.b16 %v1008
      %v1054 = vunpack.c.l.b16 %v1009
      %v1055 = vunpack.c.h.b16 %v1009
      %v1056 = vunpack.c.l.b16 %v1010
      %v1057 = vunpack.c.h.b16 %v1010
      %v1058 = vunpack.c.l.b16 %v1011
      %v1059 = vunpack.c.h.b16 %v1011
      %v1060 = vunpack.c.l.b16 %v1012
      %v1061 = vunpack.c.h.b16 %v1012
      %v1062 = vunpack.c.l.b16 %v1013
      %v1063 = vunpack.c.h.b16 %v1013
      %v1064 = vunpack.c.l.b16 %v1014
      %v1065 = vunpack.c.h.b16 %v1014
      %v1066 = vunpack.c.l.b16 %v1015
      %v1067 = vunpack.c.h.b16 %v1015
      %v1068 = vunpack.c.l.b16 %v1016
      %v1069 = vunpack.c.h.b16 %v1016
      %v1070 = vunpack.c.l.b16 %v1017
      %v1071 = vunpack.c.h.b16 %v1017
      %v1072 = vpack.c.b16 %v1038, %v1036
      %v1073 = vpack.c.b16 %v1039, %v1037
      %v1074 = vpack.c.b16 %v1042, %v1040
      %v1075 = vpack.c.b16 %v1043, %v1041
      %v1076 = vpack.c.b16 %v1046, %v1044
      %v1077 = vpack.c.b16 %v1047, %v1045
      %v1078 = vpack.c.b16 %v1050, %v1048
      %v1079 = vpack.c.b16 %v1051, %v1049
      %v1080 = vpack.c.b16 %v1054, %v1052
      %v1081 = vpack.c.b16 %v1055, %v1053
      %v1082 = vpack.c.b16 %v1058, %v1056
      %v1083 = vpack.c.b16 %v1059, %v1057
      %v1084 = vpack.c.b16 %v1062, %v1060
      %v1085 = vpack.c.b16 %v1063, %v1061
      %v1086 = vpack.c.b16 %v1066, %v1064
      %v1087 = vpack.c.b16 %v1067, %v1065
      %v1088 = vpack.c.b16 %v1070, %v1068
      %v1089 = vpack.c.b16 %v1071, %v1069
      %v1109 = vsel %vm661, %v999, 0
      %1111 = vmatprep.subr.bf16.mxu0 %v1073
      %1112 = vmatpush1.bf16.msra.mxu0 %v1072
      %1113 = vmatprep.subr.bf16.mxu0 %v1075
      %1114 = vmatpush1.bf16.msra.mxu0 %v1074
      %1115 = vmatprep.subr.bf16.mxu0 %v1077
      %1116 = vmatpush1.bf16.msra.mxu0 %v1076
      %1117 = vmatprep.subr.bf16.mxu0 %v1079
      %1118 = vmatpush1.bf16.msra.mxu0 %v1078
      %1119 = vmatprep.subr.bf16.mxu0 %v1081
      %1120 = vmatpush1.bf16.msra.mxu0 %v1080
      %1121 = vmatprep.subr.bf16.mxu0 %v1083
      %1122 = vmatpush1.bf16.msra.mxu0 %v1082
      %1123 = vmatprep.subr.bf16.mxu0 %v1085
      %1124 = vmatpush1.bf16.msra.mxu0 %v1084
      %1125 = vmatprep.subr.bf16.mxu0 %v1087
      %1126 = vmatpush1.bf16.msra.mxu0 %v1086
      %1127 = vmatprep.subr.bf16.mxu0 %v1089
      %1128 = vmatpush1.bf16.msra.mxu0 %v1088
      %1129 = vmatprep.subr.bf16.mxu0 0
      %1130 = vmatpush1.bf16.msra.mxu0 0
      %1131 = vmatprep.subr.bf16.mxu0 0
      %1132 = vmatpush1.bf16.msra.mxu0 0
      %1133 = vmatprep.subr.bf16.mxu0 0
      %1134 = vmatpush1.bf16.msra.mxu0 0
      %1135 = vmatprep.subr.bf16.mxu0 0
      %1136 = vmatpush1.bf16.msra.mxu0 0
      %1137 = vmatprep.subr.bf16.mxu0 0
      %1138 = vmatpush1.bf16.msra.mxu0 0
      %1139 = vmatprep.subr.bf16.mxu0 0
      %1140 = vmatpush1.bf16.msra.mxu0 0
      %1141 = vmatprep.subr.bf16.mxu0 0
      %1142 = vmatpush1.bf16.msra.mxu0 0
      %1143 = vmatprep.mubr.bf16.mxu0 %v1109
      %1144 = vmatmul.mubr.bf16.gmra.mrb[0].mxu0 %v998
      %v1145 = vpop.f32.mrb[0].mxu0
      %v1146 = vadd.f32 0.0, %v1145
      %v1147 = vpop.f32.mrb[0].mxu0
      %v1148 = vadd.f32 0.0, %v1147
      %v1149 = vpop.f32.mrb[0].mxu0
      %v1150 = vpop.f32.mrb[0].mxu0
      %1151 = vdwg.mxu0
      %vm1152 = vcmp.gt.f32.partialorder %v1146, 0.0
      %vm1153 = vcmp.gt.f32.partialorder %v1148, 0.0
      %v1154 = vmin.f32 %v1146, 0.0
      %v1155 = vmin.f32 %v1148, 0.0
      %v1156 = vmul.f32 %v1154, 1.442695
      %v1157 = vpow.pop %v1156
      %v1158 = vmul.f32 %v1155, 1.442695
      %v1159 = vpow.pop %v1158
      %v1160 = vsub.f32 %v1157, 1.0
      %v1161 = vsub.f32 %v1159, 1.0
      %v1162 = vsel %vm1152, %v1146, %v1160
      %v1163 = vsel %vm1153, %v1148, %v1161
      %v1164 = vpack.c.bf16 %v1162, %v1162
      %v1165 = vpack.c.bf16 %v1163, %v1163
      %1166 = vst [vmem:[#allocation2] sm:$0x3] %v1164
      %vm1167 = vcmask 427008
      %1168 = vst.msk [vmem:[#allocation2 + $0x8] sm:$0x3] %vm1167, %v1165
      %v1169 = vld [vmem:[#allocation2] sm:$0x3]
      %vm1170 = vcmask 287744
      %1171 = vst.msk [vmem:[#allocation3] sm:$0x3] %vm1170, %v1169
      %v1172 = vld [vmem:[#allocation2] sm:$0x3]
      %v1174 = vrot.slane %v1172, 4
      %1175 = vrot.lane.b32.xlu0 %v1174, 83
      %v1176 = vpop.permute.xlu0 %1175
      %vm1178 = vcmask 291844
      %1179 = vst.msk [vmem:[#allocation3] sm:$0x30] %vm1178, %v1176
      %v1180 = vld [vmem:[#allocation2] sm:$0x3]
      %1182 = vrot.lane.b32.xlu0 %v1180, 127
      %v1183 = vpop.permute.xlu0 %1182
      %1185 = vst.msk [vmem:[#allocation3 + $0x10] sm:$0x3] %vm1170, %v1183
      %v1186 = vld [vmem:[#allocation2] sm:$0x3]
      %v1188 = vrot.slane %v1186, 4
      %1189 = vrot.lane.b32.xlu0 %v1188, 82
      %v1190 = vpop.permute.xlu0 %1189
      %1192 = vst.msk [vmem:[#allocation3 + $0x10] sm:$0x30] %vm1178, %v1190
      %v1193 = vld [vmem:[#allocation2] sm:$0x3]
      %1195 = vrot.lane.b32.xlu0 %v1193, 38
      %v1196 = vpop.permute.xlu0 %1195
      %1198 = vst.msk [vmem:[#allocation3 + $0x20] sm:$0x3] %vm1170, %v1196
      %v1199 = vld [vmem:[#allocation2 + $0x8] sm:$0x3]
      %v1201 = vrot.slane %v1199, 4
      %1202 = vrot.lane.b32.xlu0 %v1201, 121
      %v1203 = vpop.permute.xlu0 %1202
      %1205 = vst.msk [vmem:[#allocation3 + $0x20] sm:$0x30] %vm1178, %v1203
      %v1206 = vld [vmem:[#allocation2] sm:$0x3]
      %1208 = vrot.lane.b32.xlu0 %v1206, 37
      %v1209 = vpop.permute.xlu0 %1208
      %1211 = vst.msk [vmem:[#allocation3 + $0x30] sm:$0x3] %vm1170, %v1209
      %v1212 = vld [vmem:[#allocation2 + $0x8] sm:$0x3]
      %v1214 = vrot.slane %v1212, 4
      %1215 = vrot.lane.b32.xlu0 %v1214, 120
      %v1216 = vpop.permute.xlu0 %1215
      %1218 = vst.msk [vmem:[#allocation3 + $0x30] sm:$0x30] %vm1178, %v1216
      %v1219 = vld [vmem:[#allocation2] sm:$0x3]
      %1221 = vrot.lane.b32.xlu0 %v1219, 119
      %v1222 = vpop.permute.xlu0 %1221
      %1224 = vst.msk [vmem:[#allocation3 + $0x40] sm:$0x3] %vm1170, %v1222
      %v1225 = vld [vmem:[#allocation2] sm:$0x3]
      %v1227 = vrot.slane %v1225, 4
      %1228 = vrot.lane.b32.xlu0 %v1227, 74
      %v1229 = vpop.permute.xlu0 %1228
      %1231 = vst.msk [vmem:[#allocation3 + $0x40] sm:$0x30] %vm1178, %v1229
      %v1232 = vld [vmem:[#allocation2] sm:$0x3]
      %1234 = vrot.lane.b32.xlu0 %v1232, 118
      %v1235 = vpop.permute.xlu0 %1234
      %1237 = vst.msk [vmem:[#allocation3 + $0x50] sm:$0x3] %vm1170, %v1235
      %v1238 = vld [vmem:[#allocation2] sm:$0x3]
      %v1240 = vrot.slane %v1238, 4
      %1241 = vrot.lane.b32.xlu0 %v1240, 73
      %v1242 = vpop.permute.xlu0 %1241
      %1244 = vst.msk [vmem:[#allocation3 + $0x50] sm:$0x30] %vm1178, %v1242
      %v1245 = vld [vmem:[#allocation2] sm:$0x3]
      %v1246 = vld [vmem:[#allocation2 + $0x8] sm:$0x3]
      %1249 = vrot.lane.b32.xlu0 %v1245, 29
      %v1250 = vpop.permute.xlu0 %1249
      %1251 = vrot.lane.b32.xlu0 %v1246, 29
      %v1252 = vpop.permute.xlu0 %1251
      %vm1253 = vcmask 236544
      %v1254 = vsel %vm1253, %v1250, %v1252
      %1256 = vst.msk [vmem:[#allocation3 + $0x60] sm:$0x3] %vm1170, %v1254
      %v1257 = vld [vmem:[#allocation2 + $0x8] sm:$0x3]
      %v1259 = vrot.slane %v1257, 4
      %1260 = vrot.lane.b32.xlu0 %v1259, 112
      %v1261 = vpop.permute.xlu0 %1260
      %1263 = vst.msk [vmem:[#allocation3 + $0x60] sm:$0x30] %vm1178, %v1261
      %v1264 = vld [vmem:[#allocation2] sm:$0x3]
      %v1265 = vld [vmem:[#allocation2 + $0x8] sm:$0x3]
      %1268 = vrot.lane.b32.xlu0 %v1264, 28
      %v1269 = vpop.permute.xlu0 %1268
      %1270 = vrot.lane.b32.xlu0 %v1265, 28
      %v1271 = vpop.permute.xlu0 %1270
      %vm1272 = vcmask 228352
      %v1273 = vsel %vm1272, %v1269, %v1271
      %1275 = vst.msk [vmem:[#allocation3 + $0x70] sm:$0x3] %vm1170, %v1273
      %v1276 = vld [vmem:[#allocation2 + $0x8] sm:$0x3]
      %v1278 = vrot.slane %v1276, 4
      %1279 = vrot.lane.b32.xlu0 %v1278, 111
      %v1280 = vpop.permute.xlu0 %1279
      %1282 = vst.msk [vmem:[#allocation3 + $0x70] sm:$0x30] %vm1178, %v1280
      %v1283 = vld [vmem:[%s1 + $0x18] sm:$0xf]
      %v1284 = vld [vmem:[#allocation3] sm:$0xff]
      %v1285 = vld [vmem:[#allocation3 + $0x10] sm:$0xff]
      %v1286 = vld [vmem:[#allocation3 + $0x20] sm:$0xff]
      %v1287 = vld [vmem:[#allocation3 + $0x30] sm:$0xff]
      %v1288 = vld [vmem:[#allocation3 + $0x40] sm:$0xff]
      %v1289 = vld [vmem:[#allocation3 + $0x50] sm:$0xff]
      %v1290 = vld [vmem:[#allocation3 + $0x60] sm:$0xff]
      %v1291 = vld [vmem:[#allocation3 + $0x70] sm:$0xff]
      %v1292 = vld [vmem:[%s2 + $0x18] sm:$0xff]
      %1294 = vset.pattern.permute.xlu0 0
      %1295 = vperm.xlu0 %1294, %v1292
      %v1296 = vpop.permute.xlu0 %1295
      %1298 = vmatprep.subr.bf16.mxu0 0
      %1299 = vmatpush1.bf16.msra.mxu0 %v1284
      %1300 = vmatprep.subr.bf16.mxu0 0
      %1301 = vmatpush1.bf16.msra.mxu0 %v1285
      %1302 = vmatprep.subr.bf16.mxu0 0
      %1303 = vmatpush1.bf16.msra.mxu0 %v1286
      %1304 = vmatprep.subr.bf16.mxu0 0
      %1305 = vmatpush1.bf16.msra.mxu0 %v1287
      %1306 = vmatprep.subr.bf16.mxu0 0
      %1307 = vmatpush1.bf16.msra.mxu0 %v1288
      %1308 = vmatprep.subr.bf16.mxu0 0
      %1309 = vmatpush1.bf16.msra.mxu0 %v1289
      %1310 = vmatprep.subr.bf16.mxu0 0
      %1311 = vmatpush1.bf16.msra.mxu0 %v1290
      %1312 = vmatprep.subr.bf16.mxu0 0
      %1313 = vmatpush1.bf16.msra.mxu0 %v1291
      %1314 = vmatprep.subr.bf16.mxu0 0
      %1315 = vmatpush1.bf16.msra.mxu0 0
      %1316 = vmatprep.subr.bf16.mxu0 0
      %1317 = vmatpush1.bf16.msra.mxu0 0
      %1318 = vmatprep.subr.bf16.mxu0 0
      %1319 = vmatpush1.bf16.msra.mxu0 0
      %1320 = vmatprep.subr.bf16.mxu0 0
      %1321 = vmatpush1.bf16.msra.mxu0 0
      %1322 = vmatprep.subr.bf16.mxu0 0
      %1323 = vmatpush1.bf16.msra.mxu0 0
      %1324 = vmatprep.subr.bf16.mxu0 0
      %1325 = vmatpush1.bf16.msra.mxu0 0
      %1326 = vmatprep.subr.bf16.mxu0 0
      %1327 = vmatpush1.bf16.msra.mxu0 0
      %1328 = vmatprep.subr.bf16.mxu0 0
      %1329 = vmatpush1.bf16.msra.mxu0 0
      %1330 = vmatprep.mubr.bf16.mxu0 0
      %1331 = vmatmul.mubr.bf16.gmra.mrb[0].mxu0 %v1283
      %v1332 = vpop.f32.mrb[0].mxu0
      %v1333 = vadd.f32 %v1296, %v1332
      %v1334 = vpop.f32.mrb[0].mxu0
      %v1335 = vpop.f32.mrb[0].mxu0
      %v1336 = vpop.f32.mrb[0].mxu0
      %1337 = vdwg.mxu0
      %v1338 = vpack.c.bf16 %v1333, %v1333
      %v1339 = vld [vmem:[%s3 + $0x18] sm:$0xf]
      %v1340 = vld [vmem:[%s3 + $0x44] sm:$0xf]
      %v1341 = vld [vmem:[%s3 + $0x70] sm:$0xf]
      %v1342 = vld [vmem:[%s3 + $0x9c] sm:$0xf]
      %v1343 = vld [vmem:[%s3 + $0xc8] sm:$0x3]
      %v1349 = vunpack.c.l.b16 %v1339
      %v1350 = vunpack.c.l.b16 %v1340
      %v1351 = vunpack.c.l.b16 %v1341
      %v1352 = vunpack.c.l.b16 %v1342
      %v1353 = vunpack.c.l.b16 %v1343
      %v1354 = vpack.c.b16 %v1350, %v1349
      %v1355 = vpack.c.b16 %v1352, %v1351
      %v1356 = vpack.c.b16 %v1353, %v1353
      %vm1359 = vcmask 293888
      %v1361 = vsel %vm1359, %v1338, 0
      %vm1363 = vcmask 1041408
      %v1365 = vsel %vm1363, %v1356, 0
      %1367 = vmatprep.subr.bf16.mxu0 0
      %1368 = vmatpush1.bf16.msra.mxu0 %v1354
      %1369 = vmatprep.subr.bf16.mxu0 0
      %1370 = vmatpush1.bf16.msra.mxu0 %v1355
      %1371 = vmatprep.subr.bf16.mxu0 0
      %1372 = vmatpush1.bf16.msra.mxu0 %v1365
      %1373 = vmatprep.subr.bf16.mxu0 0
      %1374 = vmatpush1.bf16.msra.mxu0 0
      %1375 = vmatprep.subr.bf16.mxu0 0
      %1376 = vmatpush1.bf16.msra.mxu0 0
      %1377 = vmatprep.subr.bf16.mxu0 0
      %1378 = vmatpush1.bf16.msra.mxu0 0
      %1379 = vmatprep.subr.bf16.mxu0 0
      %1380 = vmatpush1.bf16.msra.mxu0 0
      %1381 = vmatprep.subr.bf16.mxu0 0
      %1382 = vmatpush1.bf16.msra.mxu0 0
      %1383 = vmatprep.subr.bf16.mxu0 0
      %1384 = vmatpush1.bf16.msra.mxu0 0
      %1385 = vmatprep.subr.bf16.mxu0 0
      %1386 = vmatpush1.bf16.msra.mxu0 0
      %1387 = vmatprep.subr.bf16.mxu0 0
      %1388 = vmatpush1.bf16.msra.mxu0 0
      %1389 = vmatprep.subr.bf16.mxu0 0
      %1390 = vmatpush1.bf16.msra.mxu0 0
      %1391 = vmatprep.subr.bf16.mxu0 0
      %1392 = vmatpush1.bf16.msra.mxu0 0
      %1393 = vmatprep.subr.bf16.mxu0 0
      %1394 = vmatpush1.bf16.msra.mxu0 0
      %1395 = vmatprep.subr.bf16.mxu0 0
      %1396 = vmatpush1.bf16.msra.mxu0 0
      %1397 = vmatprep.subr.bf16.mxu0 0
      %1398 = vmatpush1.bf16.msra.mxu0 0
      %1399 = vmatprep.mubr.bf16.mxu0 0
      %1400 = vmatmul.mubr.bf16.gmra.mrb[0].mxu0 %v1361
      %v1401 = vpop.f32.mrb[0].mxu0
      %v1402 = vadd.f32 0.0, %v1401
      %v1403 = vpop.f32.mrb[0].mxu0
      %v1404 = vpop.f32.mrb[0].mxu0
      %v1405 = vpop.f32.mrb[0].mxu0
      %1406 = vdwg.mxu0
      %vm1407 = vcmask 506880
      %1408 = vst.msk [vmem:[#allocation4] sm:$0xff] %vm1407, %v1402
      %vm1409 = vcmp.gt.f32.partialorder %v1402, 0.0
      %v1410 = vmin.f32 %v1402, 0.0
      %v1411 = vmul.f32 %v1410, 1.442695
      %v1412 = vpow.pop %v1411
      %v1413 = vsub.f32 %v1412, 1.0
      %v1414 = vsel %vm1409, %v1402, %v1413
      %v1415 = vpack.c.bf16 %v1414, %v1414
      %vm1416 = vcmask 502784
      %1417 = vst.msk [vmem:[#allocation2] sm:$0xf] %vm1416, %v1415
      %v1418 = vld [vmem:[#allocation2] sm:$0xf]
      %vm1419 = vcmask 322560
      %1420 = vst.msk [vmem:[#allocation3] sm:$0xf] %vm1419, %v1418
      %v1421 = vld [vmem:[#allocation2] sm:$0xf]
      %v1423 = vrot.slane %v1421, 4
      %1424 = vrot.lane.b32.xlu0 %v1423, 127
      %v1425 = vpop.permute.xlu0 %1424
      %vm1427 = vcmask 326660
      %1428 = vst.msk [vmem:[#allocation3] sm:$0xf0] %vm1427, %v1425
      %v1429 = vld [vmem:[#allocation2] sm:$0xf]
      %1431 = vrot.lane.b32.xlu0 %v1429, 126
      %v1432 = vpop.permute.xlu0 %1431
      %1434 = vst.msk [vmem:[#allocation3 + $0x10] sm:$0xf] %vm1419, %v1432
      %v1435 = vld [vmem:[#allocation2] sm:$0xf]
      %v1437 = vrot.slane %v1435, 4
      %1438 = vrot.lane.b32.xlu0 %v1437, 118
      %v1439 = vpop.permute.xlu0 %1438
      %1441 = vst.msk [vmem:[#allocation3 + $0x10] sm:$0xf0] %vm1427, %v1439
      %v1442 = vld [vmem:[#allocation2] sm:$0xf]
      %1444 = vrot.lane.b32.xlu0 %v1442, 117
      %v1445 = vpop.permute.xlu0 %1444
      %1447 = vst.msk [vmem:[#allocation3 + $0x20] sm:$0xf] %vm1419, %v1445
      %v1448 = vld [vmem:[#allocation2] sm:$0xf]
      %v1450 = vrot.slane %v1448, 4
      %1451 = vrot.lane.b32.xlu0 %v1450, 116
      %v1452 = vpop.permute.xlu0 %1451
      %1454 = vst.msk [vmem:[#allocation3 + $0x20] sm:$0xf0] %vm1427, %v1452
      %v1455 = vld [vmem:[#allocation2] sm:$0xf]
      %1457 = vrot.lane.b32.xlu0 %v1455, 108
      %v1458 = vpop.permute.xlu0 %1457
      %1460 = vst.msk [vmem:[#allocation3 + $0x30] sm:$0xf] %vm1419, %v1458
      %v1461 = vld [vmem:[#allocation2] sm:$0xf]
      %v1463 = vrot.slane %v1461, 4
      %1464 = vrot.lane.b32.xlu0 %v1463, 107
      %v1465 = vpop.permute.xlu0 %1464
      %1467 = vst.msk [vmem:[#allocation3 + $0x30] sm:$0xf0] %vm1427, %v1465
      %v1468 = vld [vmem:[#allocation2] sm:$0xf]
      %1470 = vrot.lane.b32.xlu0 %v1468, 106
      %v1471 = vpop.permute.xlu0 %1470
      %1473 = vst.msk [vmem:[#allocation3 + $0x40] sm:$0xf] %vm1419, %v1471
      %v1474 = vld [vmem:[%s1 + $0x20] sm:$0x3]
      %v1475 = vld [vmem:[#allocation3] sm:$0xff]
      %v1476 = vld [vmem:[#allocation3 + $0x10] sm:$0xff]
      %v1477 = vld [vmem:[#allocation3 + $0x20] sm:$0xff]
      %v1478 = vld [vmem:[#allocation3 + $0x30] sm:$0xff]
      %v1479 = vld [vmem:[#allocation3 + $0x40] sm:$0xf]
      %v1480 = vld [vmem:[%s2 + $0x20] sm:$0xf]
      %1482 = vset.pattern.permute.xlu0 0
      %1483 = vperm.xlu0 %1482, %v1480
      %v1484 = vpop.permute.xlu0 %1483
      %v1487 = vsel %vm499, %v1474, 0
      %v1490 = vsel %vm503, %v1479, 0
      %1492 = vmatprep.subr.bf16.mxu0 0
      %1493 = vmatpush1.bf16.msra.mxu0 %v1475
      %1494 = vmatprep.subr.bf16.mxu0 0
      %1495 = vmatpush1.bf16.msra.mxu0 %v1476
      %1496 = vmatprep.subr.bf16.mxu0 0
      %1497 = vmatpush1.bf16.msra.mxu0 %v1477
      %1498 = vmatprep.subr.bf16.mxu0 0
      %1499 = vmatpush1.bf16.msra.mxu0 %v1478
      %1500 = vmatprep.subr.bf16.mxu0 0
      %1501 = vmatpush1.bf16.msra.mxu0 %v1490
      %1502 = vmatprep.subr.bf16.mxu0 0
      %1503 = vmatpush1.bf16.msra.mxu0 0
      %1504 = vmatprep.subr.bf16.mxu0 0
      %1505 = vmatpush1.bf16.msra.mxu0 0
      %1506 = vmatprep.subr.bf16.mxu0 0
      %1507 = vmatpush1.bf16.msra.mxu0 0
      %1508 = vmatprep.subr.bf16.mxu0 0
      %1509 = vmatpush1.bf16.msra.mxu0 0
      %1510 = vmatprep.subr.bf16.mxu0 0
      %1511 = vmatpush1.bf16.msra.mxu0 0
      %1512 = vmatprep.subr.bf16.mxu0 0
      %1513 = vmatpush1.bf16.msra.mxu0 0
      %1514 = vmatprep.subr.bf16.mxu0 0
      %1515 = vmatpush1.bf16.msra.mxu0 0
      %1516 = vmatprep.subr.bf16.mxu0 0
      %1517 = vmatpush1.bf16.msra.mxu0 0
      %1518 = vmatprep.subr.bf16.mxu0 0
      %1519 = vmatpush1.bf16.msra.mxu0 0
      %1520 = vmatprep.subr.bf16.mxu0 0
      %1521 = vmatpush1.bf16.msra.mxu0 0
      %1522 = vmatprep.subr.bf16.mxu0 0
      %1523 = vmatpush1.bf16.msra.mxu0 0
      %1524 = vmatprep.mubr.bf16.mxu0 0
      %1525 = vmatmul.mubr.bf16.gmra.mrb[0].mxu0 %v1487
      %v1526 = vpop.f32.mrb[0].mxu0
      %v1527 = vadd.f32 %v1484, %v1526
      %v1528 = vpop.f32.mrb[0].mxu0
      %v1529 = vpop.f32.mrb[0].mxu0
      %v1530 = vpop.f32.mrb[0].mxu0
      %1531 = vdwg.mxu0
      %vm1532 = vcmp.gt.f32.partialorder %v1527, 0.0
      %v1533 = vmin.f32 %v1527, 0.0
      %v1534 = vmul.f32 %v1533, 1.442695
      %v1535 = vpow.pop %v1534
      %v1536 = vsub.f32 %v1535, 1.0
      %v1537 = vsel %vm1532, %v1527, %v1536
      %v1538 = vpack.c.bf16 %v1537, %v1537
      %v1539 = vld [vmem:[%s1 + $0x28] sm:$0xf]
      %v1540 = vld [vmem:[%s2 + $0x28] sm:$0xff]
      %1542 = vset.pattern.permute.xlu0 0
      %1543 = vperm.xlu0 %1542, %v1540
      %v1544 = vpop.permute.xlu0 %1543
      %vm1546 = vcmask 31744
      %v1548 = vsel %vm1546, %v1539, 0
      %v1551 = vsel %vm1363, %v1538, 0
      %1553 = vmatprep.subr.bf16.mxu0 0
      %1554 = vmatpush1.bf16.msra.mxu0 %v1551
      %1555 = vmatprep.subr.bf16.mxu0 0
      %1556 = vmatpush1.bf16.msra.mxu0 0
      %1557 = vmatprep.subr.bf16.mxu0 0
      %1558 = vmatpush1.bf16.msra.mxu0 0
      %1559 = vmatprep.subr.bf16.mxu0 0
      %1560 = vmatpush1.bf16.msra.mxu0 0
      %1561 = vmatprep.subr.bf16.mxu0 0
      %1562 = vmatpush1.bf16.msra.mxu0 0
      %1563 = vmatprep.subr.bf16.mxu0 0
      %1564 = vmatpush1.bf16.msra.mxu0 0
      %1565 = vmatprep.subr.bf16.mxu0 0
      %1566 = vmatpush1.bf16.msra.mxu0 0
      %1567 = vmatprep.subr.bf16.mxu0 0
      %1568 = vmatpush1.bf16.msra.mxu0 0
      %1569 = vmatprep.subr.bf16.mxu0 0
      %1570 = vmatpush1.bf16.msra.mxu0 0
      %1571 = vmatprep.subr.bf16.mxu0 0
      %1572 = vmatpush1.bf16.msra.mxu0 0
      %1573 = vmatprep.subr.bf16.mxu0 0
      %1574 = vmatpush1.bf16.msra.mxu0 0
      %1575 = vmatprep.subr.bf16.mxu0 0
      %1576 = vmatpush1.bf16.msra.mxu0 0
      %1577 = vmatprep.subr.bf16.mxu0 0
      %1578 = vmatpush1.bf16.msra.mxu0 0
      %1579 = vmatprep.subr.bf16.mxu0 0
      %1580 = vmatpush1.bf16.msra.mxu0 0
      %1581 = vmatprep.subr.bf16.mxu0 0
      %1582 = vmatpush1.bf16.msra.mxu0 0
      %1583 = vmatprep.subr.bf16.mxu0 0
      %1584 = vmatpush1.bf16.msra.mxu0 0
      %1585 = vmatprep.mubr.bf16.mxu0 0
      %1586 = vmatmul.mubr.bf16.gmra.mrb[0].mxu0 %v1548
      %v1587 = vpop.f32.mrb[0].mxu0
      %v1588 = vadd.f32 %v1544, %v1587
      %v1589 = vpop.f32.mrb[0].mxu0
      %v1590 = vpop.f32.mrb[0].mxu0
      %v1591 = vpop.f32.mrb[0].mxu0
      %1592 = vdwg.mxu0
      %v1593 = vld [vmem:[#allocation4] sm:$0xff]
      %1595 = vrot.lane.b32.xlu0 %v1593, 117
      %v1596 = vpop.permute.xlu0 %1595
      %v1598 = vadd.f32 %v1588, %v1596
      %v1599 = vpack.c.bf16 %v1598, %v1598
      %v1600 = vld [vmem:[%s3 + $0x1c] sm:$0xf]
      %v1601 = vld [vmem:[%s3 + $0x48] sm:$0xf]
      %v1602 = vld [vmem:[%s3 + $0x74] sm:$0xf]
      %v1603 = vld [vmem:[%s3 + $0xa0] sm:$0xf]
      %v1604 = vld [vmem:[%s3 + $0xcc] sm:$0xf]
      %v1610 = vunpack.c.l.b16 %v1600
      %v1611 = vunpack.c.l.b16 %v1601
      %v1612 = vunpack.c.l.b16 %v1602
      %v1613 = vunpack.c.l.b16 %v1603
      %v1614 = vunpack.c.l.b16 %v1604
      %v1615 = vpack.c.b16 %v1611, %v1610
      %v1616 = vpack.c.b16 %v1613, %v1612
      %v1617 = vpack.c.b16 %v1614, %v1614
      %vm1620 = vcmask 326656
      %v1622 = vsel %vm1620, %v1599, 0
      %v1625 = vsel %vm503, %v1617, 0
      %1627 = vmatprep.subr.bf16.mxu0 0
      %1628 = vmatpush1.bf16.msra.mxu0 %v1615
      %1629 = vmatprep.subr.bf16.mxu0 0
      %1630 = vmatpush1.bf16.msra.mxu0 %v1616
      %1631 = vmatprep.subr.bf16.mxu0 0
      %1632 = vmatpush1.bf16.msra.mxu0 %v1625
      %1633 = vmatprep.subr.bf16.mxu0 0
      %1634 = vmatpush1.bf16.msra.mxu0 0
      %1635 = vmatprep.subr.bf16.mxu0 0
      %1636 = vmatpush1.bf16.msra.mxu0 0
      %1637 = vmatprep.subr.bf16.mxu0 0
      %1638 = vmatpush1.bf16.msra.mxu0 0
      %1639 = vmatprep.subr.bf16.mxu0 0
      %1640 = vmatpush1.bf16.msra.mxu0 0
      %1641 = vmatprep.subr.bf16.mxu0 0
      %1642 = vmatpush1.bf16.msra.mxu0 0
      %1643 = vmatprep.subr.bf16.mxu0 0
      %1644 = vmatpush1.bf16.msra.mxu0 0
      %1645 = vmatprep.subr.bf16.mxu0 0
      %1646 = vmatpush1.bf16.msra.mxu0 0
      %1647 = vmatprep.subr.bf16.mxu0 0
      %1648 = vmatpush1.bf16.msra.mxu0 0
      %1649 = vmatprep.subr.bf16.mxu0 0
      %1650 = vmatpush1.bf16.msra.mxu0 0
      %1651 = vmatprep.subr.bf16.mxu0 0
      %1652 = vmatpush1.bf16.msra.mxu0 0
      %1653 = vmatprep.subr.bf16.mxu0 0
      %1654 = vmatpush1.bf16.msra.mxu0 0
      %1655 = vmatprep.subr.bf16.mxu0 0
      %1656 = vmatpush1.bf16.msra.mxu0 0
      %1657 = vmatprep.subr.bf16.mxu0 0
      %1658 = vmatpush1.bf16.msra.mxu0 0
      %1659 = vmatprep.mubr.bf16.mxu0 0
      %1660 = vmatmul.mubr.bf16.gmra.mrb[0].mxu0 %v1622
      %v1661 = vpop.f32.mrb[0].mxu0
      %v1662 = vadd.f32 0.0, %v1661
      %v1663 = vpop.f32.mrb[0].mxu0
      %v1664 = vpop.f32.mrb[0].mxu0
      %v1665 = vpop.f32.mrb[0].mxu0
      %1666 = vdwg.mxu0
      %vm1667 = vcmp.gt.f32.partialorder %v1662, 0.0
      %v1668 = vmin.f32 %v1662, 0.0
      %v1669 = vmul.f32 %v1668, 1.442695
      %v1670 = vpow.pop %v1669
      %v1671 = vsub.f32 %v1670, 1.0
      %v1672 = vsel %vm1667, %v1662, %v1671
      %v1673 = vpack.c.bf16 %v1672, %v1672
      %vm1674 = vcmask 494592
      %1675 = vst.msk [vmem:[#allocation2] sm:$0xf] %vm1674, %v1673
      %v1676 = vld [vmem:[#allocation2] sm:$0xf]
      %vm1677 = vcmask 76800
      %1678 = vst.msk [vmem:[#allocation3] sm:$0xf] %vm1677, %v1676
      %v1679 = vld [vmem:[#allocation2] sm:$0xf]
      %v1681 = vrot.slane %v1679, 4
      %1682 = vrot.lane.b32.xlu0 %v1681, 113
      %v1683 = vpop.permute.xlu0 %1682
      %vm1685 = vcmask 80900
      %1686 = vst.msk [vmem:[#allocation3] sm:$0xf0] %vm1685, %v1683
      %v1687 = vld [vmem:[#allocation2] sm:$0xf]
      %1689 = vrot.lane.b32.xlu0 %v1687, 127
      %v1690 = vpop.permute.xlu0 %1689
      %1692 = vst.msk [vmem:[#allocation3 + $0x10] sm:$0xf] %vm1677, %v1690
      %v1693 = vld [vmem:[#allocation2] sm:$0xf]
      %v1695 = vrot.slane %v1693, 4
      %1696 = vrot.lane.b32.xlu0 %v1695, 112
      %v1697 = vpop.permute.xlu0 %1696
      %1699 = vst.msk [vmem:[#allocation3 + $0x10] sm:$0xf0] %vm1685, %v1697
      %v1700 = vld [vmem:[#allocation2] sm:$0xf]
      %1702 = vrot.lane.b32.xlu0 %v1700, 98
      %v1703 = vpop.permute.xlu0 %1702
      %1705 = vst.msk [vmem:[#allocation3 + $0x20] sm:$0xf] %vm1677, %v1703
      %v1706 = vld [vmem:[#allocation2] sm:$0xf]
      %v1708 = vrot.slane %v1706, 4
      %1709 = vrot.lane.b32.xlu0 %v1708, 83
      %v1710 = vpop.permute.xlu0 %1709
      %1712 = vst.msk [vmem:[#allocation3 + $0x20] sm:$0xf0] %vm1685, %v1710
      %v1713 = vld [vmem:[#allocation2] sm:$0xf]
      %1715 = vrot.lane.b32.xlu0 %v1713, 97
      %v1716 = vpop.permute.xlu0 %1715
      %1718 = vst.msk [vmem:[#allocation3 + $0x30] sm:$0xf] %vm1677, %v1716
      %v1719 = vld [vmem:[#allocation2] sm:$0xf]
      %v1721 = vrot.slane %v1719, 4
      %1722 = vrot.lane.b32.xlu0 %v1721, 82
      %v1723 = vpop.permute.xlu0 %1722
      %1725 = vst.msk [vmem:[#allocation3 + $0x30] sm:$0xf0] %vm1685, %v1723
      %v1726 = vld [vmem:[#allocation2] sm:$0xf]
      %1728 = vrot.lane.b32.xlu0 %v1726, 123
      %v1729 = vpop.permute.xlu0 %1728
      %1731 = vst.msk [vmem:[#allocation3 + $0x40] sm:$0xf] %vm1677, %v1729
      %v1732 = vld [vmem:[#allocation2] sm:$0xf]
      %v1734 = vrot.slane %v1732, 4
      %1735 = vrot.lane.b32.xlu0 %v1734, 108
      %v1736 = vpop.permute.xlu0 %1735
      %1738 = vst.msk [vmem:[#allocation3 + $0x40] sm:$0xf0] %vm1685, %v1736
      %v1739 = vld [vmem:[#allocation2] sm:$0xf]
      %1741 = vrot.lane.b32.xlu0 %v1739, 122
      %v1742 = vpop.permute.xlu0 %1741
      %1744 = vst.msk [vmem:[#allocation3 + $0x50] sm:$0xf] %vm1677, %v1742
      %v1745 = vld [vmem:[#allocation2] sm:$0xf]
      %v1747 = vrot.slane %v1745, 4
      %1748 = vrot.lane.b32.xlu0 %v1747, 107
      %v1749 = vpop.permute.xlu0 %1748
      %1751 = vst.msk [vmem:[#allocation3 + $0x50] sm:$0xf0] %vm1685, %v1749
      %v1752 = vld [vmem:[#allocation2] sm:$0xf]
      %1754 = vrot.lane.b32.xlu0 %v1752, 93
      %v1755 = vpop.permute.xlu0 %1754
      %1757 = vst.msk [vmem:[#allocation3 + $0x60] sm:$0xf] %vm1677, %v1755
      %v1758 = vld [vmem:[#allocation2] sm:$0xf]
      %v1760 = vrot.slane %v1758, 4
      %1761 = vrot.lane.b32.xlu0 %v1760, 78
      %v1762 = vpop.permute.xlu0 %1761
      %1764 = vst.msk [vmem:[#allocation3 + $0x60] sm:$0xf0] %vm1685, %v1762
      %v1765 = vld [vmem:[#allocation2] sm:$0xf]
      %1767 = vrot.lane.b32.xlu0 %v1765, 92
      %v1768 = vpop.permute.xlu0 %1767
      %1770 = vst.msk [vmem:[#allocation3 + $0x70] sm:$0xf] %vm1677, %v1768
      %v1771 = vld [vmem:[#allocation2] sm:$0xf]
      %v1773 = vrot.slane %v1771, 4
      %1774 = vrot.lane.b32.xlu0 %v1773, 77
      %v1775 = vpop.permute.xlu0 %1774
      %1777 = vst.msk [vmem:[#allocation3 + $0x70] sm:$0xf0] %vm1685, %v1775
      %v1778 = vld [vmem:[%s1 + $0x30] sm:$0xf]
      %v1779 = vld [vmem:[%s1 + $0x34] sm:$0xf]
      %v1780 = vld [vmem:[#allocation3] sm:$0xff]
      %v1781 = vld [vmem:[#allocation3 + $0x10] sm:$0xff]
      %v1782 = vld [vmem:[#allocation3 + $0x20] sm:$0xff]
      %v1783 = vld [vmem:[#allocation3 + $0x30] sm:$0xff]
      %v1784 = vld [vmem:[#allocation3 + $0x40] sm:$0xff]
      %v1785 = vld [vmem:[#allocation3 + $0x50] sm:$0xff]
      %v1786 = vld [vmem:[#allocation3 + $0x60] sm:$0xff]
      %v1787 = vld [vmem:[#allocation3 + $0x70] sm:$0xff]
      %v1788 = vld [vmem:[%s2 + $0x30] sm:$0xff]
      %v1789 = vld [vmem:[%s2 + $0x38] sm:$0xff]
      %1791 = vset.pattern.permute.xlu0 0
      %1792 = vperm.xlu0 %1791, %v1788
      %v1793 = vpop.permute.xlu0 %1792
      %1796 = vset.pattern.permute.xlu0 0
      %1797 = vperm.xlu0 %1796, %v1789
      %v1798 = vpop.permute.xlu0 %1797
      %v1802 = vunpack.c.l.b16 %v1778
      %v1803 = vunpack.c.l.b16 %v1779
      %v1804 = vpack.c.b16 %v1803, %v1802
      %1806 = vmatprep.subr.bf16.mxu0 0
      %1807 = vmatpush1.bf16.msra.mxu0 %v1780
      %1808 = vmatprep.subr.bf16.mxu0 0
      %1809 = vmatpush1.bf16.msra.mxu0 %v1781
      %1810 = vmatprep.subr.bf16.mxu0 0
      %1811 = vmatpush1.bf16.msra.mxu0 %v1782
      %1812 = vmatprep.subr.bf16.mxu0 0
      %1813 = vmatpush1.bf16.msra.mxu0 %v1783
      %1814 = vmatprep.subr.bf16.mxu0 0
      %1815 = vmatpush1.bf16.msra.mxu0 %v1784
      %1816 = vmatprep.subr.bf16.mxu0 0
      %1817 = vmatpush1.bf16.msra.mxu0 %v1785
      %1818 = vmatprep.subr.bf16.mxu0 0
      %1819 = vmatpush1.bf16.msra.mxu0 %v1786
      %1820 = vmatprep.subr.bf16.mxu0 0
      %1821 = vmatpush1.bf16.msra.mxu0 %v1787
      %1822 = vmatprep.subr.bf16.mxu0 0
      %1823 = vmatpush1.bf16.msra.mxu0 0
      %1824 = vmatprep.subr.bf16.mxu0 0
      %1825 = vmatpush1.bf16.msra.mxu0 0
      %1826 = vmatprep.subr.bf16.mxu0 0
      %1827 = vmatpush1.bf16.msra.mxu0 0
      %1828 = vmatprep.subr.bf16.mxu0 0
      %1829 = vmatpush1.bf16.msra.mxu0 0
      %1830 = vmatprep.subr.bf16.mxu0 0
      %1831 = vmatpush1.bf16.msra.mxu0 0
      %1832 = vmatprep.subr.bf16.mxu0 0
      %1833 = vmatpush1.bf16.msra.mxu0 0
      %1834 = vmatprep.subr.bf16.mxu0 0
      %1835 = vmatpush1.bf16.msra.mxu0 0
      %1836 = vmatprep.subr.bf16.mxu0 0
      %1837 = vmatpush1.bf16.msra.mxu0 0
      %1838 = vmatprep.mubr.bf16.mxu0 0
      %1839 = vmatmul.mubr.bf16.gmra.mrb[0].mxu0 %v1804
      %v1840 = vpop.f32.mrb[0].mxu0
      %v1841 = vadd.f32 %v1793, %v1840
      %v1842 = vpop.f32.mrb[0].mxu0
      %v1843 = vpop.f32.mrb[0].mxu0
      %v1844 = vadd.f32 %v1798, %v1843
      %v1845 = vpop.f32.mrb[0].mxu0
      %1846 = vdwg.mxu0
      %v1847 = vpack.c.bf16 %v1844, %v1841
      %v1848 = vld [vmem:[%s3 + $0x20] sm:$0xf]
      %v1849 = vld [vmem:[%s3 + $0x4c] sm:$0x1]
      %v1852 = vunpack.c.l.b16 %v1848
      %v1853 = vunpack.c.l.b16 %v1849
      %v1854 = vpack.c.b16 %v1853, %v1852
      %vm1855 = vcmask 80896
      %v1857 = vsel %vm1855, %v1847, 0
      %vm1859 = vcmask 1044480
      %v1861 = vsel %vm1859, %v1854, 0
      %1863 = vmatprep.subr.bf16.mxu0 0
      %1864 = vmatpush1.bf16.msra.mxu0 %v1861
      %1865 = vmatprep.subr.bf16.mxu0 0
      %1866 = vmatpush1.bf16.msra.mxu0 0
      %1867 = vmatprep.subr.bf16.mxu0 0
      %1868 = vmatpush1.bf16.msra.mxu0 0
      %1869 = vmatprep.subr.bf16.mxu0 0
      %1870 = vmatpush1.bf16.msra.mxu0 0
      %1871 = vmatprep.subr.bf16.mxu0 0
      %1872 = vmatpush1.bf16.msra.mxu0 0
      %1873 = vmatprep.subr.bf16.mxu0 0
      %1874 = vmatpush1.bf16.msra.mxu0 0
      %1875 = vmatprep.subr.bf16.mxu0 0
      %1876 = vmatpush1.bf16.msra.mxu0 0
      %1877 = vmatprep.subr.bf16.mxu0 0
      %1878 = vmatpush1.bf16.msra.mxu0 0
      %1879 = vmatprep.subr.bf16.mxu0 0
      %1880 = vmatpush1.bf16.msra.mxu0 0
      %1881 = vmatprep.subr.bf16.mxu0 0
      %1882 = vmatpush1.bf16.msra.mxu0 0
      %1883 = vmatprep.subr.bf16.mxu0 0
      %1884 = vmatpush1.bf16.msra.mxu0 0
      %1885 = vmatprep.subr.bf16.mxu0 0
      %1886 = vmatpush1.bf16.msra.mxu0 0
      %1887 = vmatprep.subr.bf16.mxu0 0
      %1888 = vmatpush1.bf16.msra.mxu0 0
      %1889 = vmatprep.subr.bf16.mxu0 0
      %1890 = vmatpush1.bf16.msra.mxu0 0
      %1891 = vmatprep.subr.bf16.mxu0 0
      %1892 = vmatpush1.bf16.msra.mxu0 0
      %1893 = vmatprep.subr.bf16.mxu0 0
      %1894 = vmatpush1.bf16.msra.mxu0 0
      %1895 = vmatprep.mubr.bf16.mxu0 0
      %1896 = vmatmul.mubr.bf16.gmra.mrb[0].mxu0 %v1857
      %v1897 = vpop.f32.mrb[0].mxu0
      %v1898 = vadd.f32 0.0, %v1897
      %v1899 = vpop.f32.mrb[0].mxu0
      %v1900 = vpop.f32.mrb[0].mxu0
      %v1901 = vadd.f32 0.0, %v1900
      %v1902 = vpop.f32.mrb[0].mxu0
      %1903 = vdwg.mxu0
      %vm1904 = vcmp.gt.f32.partialorder %v1898, 0.0
      %vm1905 = vcmp.gt.f32.partialorder %v1901, 0.0
      %v1906 = vmin.f32 %v1898, 0.0
      %v1907 = vmin.f32 %v1901, 0.0
      %v1908 = vmul.f32 %v1906, 1.442695
      %v1909 = vpow.pop %v1908
      %v1910 = vmul.f32 %v1907, 1.442695
      %v1911 = vpow.pop %v1910
      %v1912 = vsub.f32 %v1909, 1.0
      %v1913 = vsub.f32 %v1911, 1.0
      %v1914 = vsel %vm1904, %v1898, %v1912
      %v1915 = vsel %vm1905, %v1901, %v1913
      %v1916 = vpack.c.bf16 %v1915, %v1914
      %vm1917 = vcmask 64512
      %1918 = vst.msk [vmem:[#allocation2] sm:$0xff] %vm1917, %v1916
      %v1919 = vld [vmem:[%s3 + $0x24] sm:$0xf]
      %v1920 = vld [vmem:[%s3 + $0x50] sm:$0x1]
      %v1923 = vunpack.c.l.b16 %v1919
      %v1924 = vunpack.c.l.b16 %v1920
      %v1925 = vpack.c.b16 %v1924, %v1923
      %v1927 = vsel %vm1859, %v1925, 0
      %1929 = vmatprep.subr.bf16.mxu0 0
      %1930 = vmatpush1.bf16.msra.mxu0 %v1927
      %1931 = vmatprep.subr.bf16.mxu0 0
      %1932 = vmatpush1.bf16.msra.mxu0 0
      %1933 = vmatprep.subr.bf16.mxu0 0
      %1934 = vmatpush1.bf16.msra.mxu0 0
      %1935 = vmatprep.subr.bf16.mxu0 0
      %1936 = vmatpush1.bf16.msra.mxu0 0
      %1937 = vmatprep.subr.bf16.mxu0 0
      %1938 = vmatpush1.bf16.msra.mxu0 0
      %1939 = vmatprep.subr.bf16.mxu0 0
      %1940 = vmatpush1.bf16.msra.mxu0 0
      %1941 = vmatprep.subr.bf16.mxu0 0
      %1942 = vmatpush1.bf16.msra.mxu0 0
      %1943 = vmatprep.subr.bf16.mxu0 0
      %1944 = vmatpush1.bf16.msra.mxu0 0
      %1945 = vmatprep.subr.bf16.mxu0 0
      %1946 = vmatpush1.bf16.msra.mxu0 0
      %1947 = vmatprep.subr.bf16.mxu0 0
      %1948 = vmatpush1.bf16.msra.mxu0 0
      %1949 = vmatprep.subr.bf16.mxu0 0
      %1950 = vmatpush1.bf16.msra.mxu0 0
      %1951 = vmatprep.subr.bf16.mxu0 0
      %1952 = vmatpush1.bf16.msra.mxu0 0
      %1953 = vmatprep.subr.bf16.mxu0 0
      %1954 = vmatpush1.bf16.msra.mxu0 0
      %1955 = vmatprep.subr.bf16.mxu0 0
      %1956 = vmatpush1.bf16.msra.mxu0 0
      %1957 = vmatprep.subr.bf16.mxu0 0
      %1958 = vmatpush1.bf16.msra.mxu0 0
      %1959 = vmatprep.subr.bf16.mxu0 0
      %1960 = vmatpush1.bf16.msra.mxu0 0
      %1961 = vmatprep.mubr.bf16.mxu0 0
      %1962 = vmatmul.mubr.bf16.gmra.mrb[0].mxu0 %v1857
      %v1963 = vpop.f32.mrb[0].mxu0
      %v1964 = vadd.f32 0.0, %v1963
      %v1965 = vpop.f32.mrb[0].mxu0
      %v1966 = vpop.f32.mrb[0].mxu0
      %v1967 = vadd.f32 0.0, %v1966
      %v1968 = vpop.f32.mrb[0].mxu0
      %1969 = vdwg.mxu0
      %vm1970 = vcmp.gt.f32.partialorder %v1964, 0.0
      %vm1971 = vcmp.gt.f32.partialorder %v1967, 0.0
      %v1972 = vmin.f32 %v1964, 0.0
      %v1973 = vmin.f32 %v1967, 0.0
      %v1974 = vmul.f32 %v1972, 1.442695
      %v1975 = vpow.pop %v1974
      %v1976 = vmul.f32 %v1973, 1.442695
      %v1977 = vpow.pop %v1976
      %v1978 = vsub.f32 %v1975, 1.0
      %v1979 = vsub.f32 %v1977, 1.0
      %v1980 = vsel %vm1970, %v1964, %v1978
      %v1981 = vsel %vm1971, %v1967, %v1979
      %v1982 = vpack.c.bf16 %v1981, %v1980
      %1983 = vst.msk [vmem:[#allocation2 + $0x10] sm:$0xff] %vm1917, %v1982
      %v1984 = vld [vmem:[#allocation2] sm:$0xff]
      %v1985 = vld [vmem:[#allocation2 + $0x10] sm:$0xff]
      %vm1986 = vcmask 48128
      %1987 = vst.msk [vmem:[#allocation3] sm:$0xff] %vm1986, %v1984
      %1988 = vst.msk [vmem:[#allocation3 + $0x10] sm:$0xff] %vm1986, %v1985
      %v1989 = vld [vmem:[#allocation2] sm:$0xff]
      %v1990 = vld [vmem:[#allocation2 + $0x10] sm:$0xff]
      %1993 = vrot.lane.b32.xlu0 %v1989, 127
      %v1994 = vpop.permute.xlu0 %1993
      %1995 = vrot.lane.b32.xlu0 %v1990, 127
      %v1996 = vpop.permute.xlu0 %1995
      %1999 = vst.msk [vmem:[#allocation3 + $0x20] sm:$0xff] %vm1986, %v1994
      %2000 = vst.msk [vmem:[#allocation3 + $0x30] sm:$0xff] %vm1986, %v1996
      %v2001 = vld [vmem:[#allocation2] sm:$0xff]
      %v2002 = vld [vmem:[#allocation2 + $0x10] sm:$0xff]
      %2005 = vrot.lane.b32.xlu0 %v2001, 126
      %v2006 = vpop.permute.xlu0 %2005
      %2007 = vrot.lane.b32.xlu0 %v2002, 126
      %v2008 = vpop.permute.xlu0 %2007
      %2011 = vst.msk [vmem:[#allocation3 + $0x40] sm:$0xff] %vm1986, %v2006
      %2012 = vst.msk [vmem:[#allocation3 + $0x50] sm:$0xff] %vm1986, %v2008
      %v2013 = vld [vmem:[%s1 + $0x38] sm:$0xf]
      %v2014 = vld [vmem:[%s1 + $0x3c] sm:$0xf]
      %v2015 = vld [vmem:[#allocation3] sm:$0xff]
      %v2016 = vld [vmem:[#allocation3 + $0x10] sm:$0xff]
      %v2017 = vld [vmem:[#allocation3 + $0x20] sm:$0xff]
      %v2018 = vld [vmem:[#allocation3 + $0x30] sm:$0xff]
      %v2019 = vld [vmem:[#allocation3 + $0x40] sm:$0xff]
      %v2020 = vld [vmem:[#allocation3 + $0x50] sm:$0xff]
      %v2021 = vld [vmem:[%s2 + $0x40] sm:$0xff]
      %v2022 = vld [vmem:[%s2 + $0x48] sm:$0xff]
      %2024 = vset.pattern.permute.xlu0 0
      %2025 = vperm.xlu0 %2024, %v2021
      %v2026 = vpop.permute.xlu0 %2025
      %2029 = vset.pattern.permute.xlu0 0
      %2030 = vperm.xlu0 %2029, %v2022
      %v2031 = vpop.permute.xlu0 %2030
      %v2035 = vunpack.c.l.b16 %v2013
      %v2036 = vunpack.c.l.b16 %v2014
      %v2037 = vpack.c.b16 %v2036, %v2035
      %vm2038 = vcmask 785408
      %v2040 = vsel %vm2038, %v2037, 0
      %2042 = vmatprep.subr.bf16.mxu0 0
      %2043 = vmatpush1.bf16.msra.mxu0 %v2015
      %2044 = vmatprep.subr.bf16.mxu0 0
      %2045 = vmatpush1.bf16.msra.mxu0 %v2016
      %2046 = vmatprep.subr.bf16.mxu0 0
      %2047 = vmatpush1.bf16.msra.mxu0 %v2017
      %2048 = vmatprep.subr.bf16.mxu0 0
      %2049 = vmatpush1.bf16.msra.mxu0 %v2018
      %2050 = vmatprep.subr.bf16.mxu0 0
      %2051 = vmatpush1.bf16.msra.mxu0 %v2019
      %2052 = vmatprep.subr.bf16.mxu0 0
      %2053 = vmatpush1.bf16.msra.mxu0 %v2020
      %2054 = vmatprep.subr.bf16.mxu0 0
      %2055 = vmatpush1.bf16.msra.mxu0 0
      %2056 = vmatprep.subr.bf16.mxu0 0
      %2057 = vmatpush1.bf16.msra.mxu0 0
      %2058 = vmatprep.subr.bf16.mxu0 0
      %2059 = vmatpush1.bf16.msra.mxu0 0
      %2060 = vmatprep.subr.bf16.mxu0 0
      %2061 = vmatpush1.bf16.msra.mxu0 0
      %2062 = vmatprep.subr.bf16.mxu0 0
      %2063 = vmatpush1.bf16.msra.mxu0 0
      %2064 = vmatprep.subr.bf16.mxu0 0
      %2065 = vmatpush1.bf16.msra.mxu0 0
      %2066 = vmatprep.subr.bf16.mxu0 0
      %2067 = vmatpush1.bf16.msra.mxu0 0
      %2068 = vmatprep.subr.bf16.mxu0 0
      %2069 = vmatpush1.bf16.msra.mxu0 0
      %2070 = vmatprep.subr.bf16.mxu0 0
      %2071 = vmatpush1.bf16.msra.mxu0 0
      %2072 = vmatprep.subr.bf16.mxu0 0
      %2073 = vmatpush1.bf16.msra.mxu0 0
      %2074 = vmatprep.mubr.bf16.mxu0 0
      %2075 = vmatmul.mubr.bf16.gmra.mrb[0].mxu0 %v2040
      %v2076 = vpop.f32.mrb[0].mxu0
      %v2077 = vadd.f32 %v2026, %v2076
      %v2078 = vpop.f32.mrb[0].mxu0
      %v2079 = vpop.f32.mrb[0].mxu0
      %v2080 = vadd.f32 %v2031, %v2079
      %v2081 = vpop.f32.mrb[0].mxu0
      %2082 = vdwg.mxu0
      %v2083 = vpack.c.bf16 %v2080, %v2077
      %v2084 = vld [vmem:[%s3 + $0x28] sm:$0x7]
      %v2086 = vsel %vm1986, %v2083, 0
      %vm2088 = vcmask 1042432
      %v2090 = vsel %vm2088, %v2084, 0
      %2092 = vmatprep.subr.bf16.mxu0 0
      %2093 = vmatpush1.bf16.msra.mxu0 %v2090
      %2094 = vmatprep.subr.bf16.mxu0 0
      %2095 = vmatpush1.bf16.msra.mxu0 0
      %2096 = vmatprep.subr.bf16.mxu0 0
      %2097 = vmatpush1.bf16.msra.mxu0 0
      %2098 = vmatprep.subr.bf16.mxu0 0
      %2099 = vmatpush1.bf16.msra.mxu0 0
      %2100 = vmatprep.subr.bf16.mxu0 0
      %2101 = vmatpush1.bf16.msra.mxu0 0
      %2102 = vmatprep.subr.bf16.mxu0 0
      %2103 = vmatpush1.bf16.msra.mxu0 0
      %2104 = vmatprep.subr.bf16.mxu0 0
      %2105 = vmatpush1.bf16.msra.mxu0 0
      %2106 = vmatprep.subr.bf16.mxu0 0
      %2107 = vmatpush1.bf16.msra.mxu0 0
      %2108 = vmatprep.subr.bf16.mxu0 0
      %2109 = vmatpush1.bf16.msra.mxu0 0
      %2110 = vmatprep.subr.bf16.mxu0 0
      %2111 = vmatpush1.bf16.msra.mxu0 0
      %2112 = vmatprep.subr.bf16.mxu0 0
      %2113 = vmatpush1.bf16.msra.mxu0 0
      %2114 = vmatprep.subr.bf16.mxu0 0
      %2115 = vmatpush1.bf16.msra.mxu0 0
      %2116 = vmatprep.subr.bf16.mxu0 0
      %2117 = vmatpush1.bf16.msra.mxu0 0
      %2118 = vmatprep.subr.bf16.mxu0 0
      %2119 = vmatpush1.bf16.msra.mxu0 0
      %2120 = vmatprep.subr.bf16.mxu0 0
      %2121 = vmatpush1.bf16.msra.mxu0 0
      %2122 = vmatprep.subr.bf16.mxu0 0
      %2123 = vmatpush1.bf16.msra.mxu0 0
      %2124 = vmatprep.mubr.bf16.mxu0 0
      %2125 = vmatmul.mubr.bf16.gmra.mrb[0].mxu0 %v2086
      %v2126 = vpop.f32.mrb[0].mxu0
      %v2127 = vadd.f32 0.0, %v2126
      %v2128 = vpop.f32.mrb[0].mxu0
      %v2129 = vpop.f32.mrb[0].mxu0
      %v2130 = vadd.f32 0.0, %v2129
      %v2131 = vpop.f32.mrb[0].mxu0
      %2132 = vdwg.mxu0
      %vm2133 = vcmp.gt.f32.partialorder %v2127, 0.0
      %vm2134 = vcmp.gt.f32.partialorder %v2130, 0.0
      %v2135 = vmin.f32 %v2127, 0.0
      %v2136 = vmin.f32 %v2130, 0.0
      %v2137 = vmul.f32 %v2135, 1.442695
      %v2138 = vpow.pop %v2137
      %v2139 = vmul.f32 %v2136, 1.442695
      %v2140 = vpow.pop %v2139
      %v2141 = vsub.f32 %v2138, 1.0
      %v2142 = vsub.f32 %v2140, 1.0
      %v2143 = vsel %vm2133, %v2127, %v2141
      %v2144 = vsel %vm2134, %v2130, %v2142
      %v2145 = vpack.c.bf16 %v2144, %v2143
      %2146 = vst.msk [vmem:[#allocation2] sm:$0xff] %vm1917, %v2145
      %v2147 = vld [vmem:[#allocation2] sm:$0xff]
      %2148 = vst.msk [vmem:[#allocation3] sm:$0xff] %vm1986, %v2147
      %v2149 = vld [vmem:[#allocation2] sm:$0xff]
      %2151 = vrot.lane.b32.xlu0 %v2149, 127
      %v2152 = vpop.permute.xlu0 %2151
      %2154 = vst.msk [vmem:[#allocation3 + $0x10] sm:$0xff] %vm1986, %v2152
      %v2155 = vld [vmem:[#allocation2] sm:$0xff]
      %2157 = vrot.lane.b32.xlu0 %v2155, 126
      %v2158 = vpop.permute.xlu0 %2157
      %2160 = vst.msk [vmem:[#allocation3 + $0x20] sm:$0xff] %vm1986, %v2158
      %v2161 = vld [vmem:[%s1 + $0x40] sm:$0xf]
      %v2162 = vld [vmem:[%s1 + $0x44] sm:$0xf]
      %v2163 = vld [vmem:[#allocation3] sm:$0xff]
      %v2164 = vld [vmem:[#allocation3 + $0x10] sm:$0xff]
      %v2165 = vld [vmem:[#allocation3 + $0x20] sm:$0xff]
      %v2166 = vld [vmem:[%s2 + $0x50] sm:$0xff]
      %v2167 = vld [vmem:[%s2 + $0x58] sm:$0xff]
      %2169 = vset.pattern.permute.xlu0 0
      %2170 = vperm.xlu0 %2169, %v2166
      %v2171 = vpop.permute.xlu0 %2170
      %2174 = vset.pattern.permute.xlu0 0
      %2175 = vperm.xlu0 %2174, %v2167
      %v2176 = vpop.permute.xlu0 %2175
      %v2180 = vunpack.c.l.b16 %v2161
      %v2181 = vunpack.c.l.b16 %v2162
      %v2182 = vpack.c.b16 %v2181, %v2180
      %vm2183 = vcmask 392192
      %v2185 = vsel %vm2183, %v2182, 0
      %2187 = vmatprep.subr.bf16.mxu0 0
      %2188 = vmatpush1.bf16.msra.mxu0 %v2163
      %2189 = vmatprep.subr.bf16.mxu0 0
      %2190 = vmatpush1.bf16.msra.mxu0 %v2164
      %2191 = vmatprep.subr.bf16.mxu0 0
      %2192 = vmatpush1.bf16.msra.mxu0 %v2165
      %2193 = vmatprep.subr.bf16.mxu0 0
      %2194 = vmatpush1.bf16.msra.mxu0 0
      %2195 = vmatprep.subr.bf16.mxu0 0
      %2196 = vmatpush1.bf16.msra.mxu0 0
      %2197 = vmatprep.subr.bf16.mxu0 0
      %2198 = vmatpush1.bf16.msra.mxu0 0
      %2199 = vmatprep.subr.bf16.mxu0 0
      %2200 = vmatpush1.bf16.msra.mxu0 0
      %2201 = vmatprep.subr.bf16.mxu0 0
      %2202 = vmatpush1.bf16.msra.mxu0 0
      %2203 = vmatprep.subr.bf16.mxu0 0
      %2204 = vmatpush1.bf16.msra.mxu0 0
      %2205 = vmatprep.subr.bf16.mxu0 0
      %2206 = vmatpush1.bf16.msra.mxu0 0
      %2207 = vmatprep.subr.bf16.mxu0 0
      %2208 = vmatpush1.bf16.msra.mxu0 0
      %2209 = vmatprep.subr.bf16.mxu0 0
      %2210 = vmatpush1.bf16.msra.mxu0 0
      %2211 = vmatprep.subr.bf16.mxu0 0
      %2212 = vmatpush1.bf16.msra.mxu0 0
      %2213 = vmatprep.subr.bf16.mxu0 0
      %2214 = vmatpush1.bf16.msra.mxu0 0
      %2215 = vmatprep.subr.bf16.mxu0 0
      %2216 = vmatpush1.bf16.msra.mxu0 0
      %2217 = vmatprep.subr.bf16.mxu0 0
      %2218 = vmatpush1.bf16.msra.mxu0 0
      %2219 = vmatprep.mubr.bf16.mxu0 0
      %2220 = vmatmul.mubr.bf16.gmra.mrb[0].mxu0 %v2185
      %v2221 = vpop.f32.mrb[0].mxu0
      %v2222 = vadd.f32 %v2171, %v2221
      %v2223 = vpop.f32.mrb[0].mxu0
      %v2224 = vpop.f32.mrb[0].mxu0
      %v2225 = vadd.f32 %v2176, %v2224
      %v2226 = vpop.f32.mrb[0].mxu0
      %2227 = vdwg.mxu0
      %2228 = vst.msk [vmem:[%s194] sm:$0xff] %vm1546, %v2222
      %2229 = vst.msk [vmem:[%s194 + $0x8] sm:$0xff] %vm1546, %v2225
      %p2230 = scmp.lt.s32.totalorder %s15, 1
      %s2231 = scalar_select %p2230, %s15, 1
      %s2232 = smul.addr %s2231, 2
      %s2233 = smul.addr %s2232, 8
      %s2234 = scalar_lea.vmem %s4, %s2233
      // Predicated region
      $region37: #{forward.1} parent=35 // pred_check
        %p2235 = pneg %p122
      $region38: #{forward.1} parent=35 // pred_check_branch
        %2237 = sbr.rel (%p2235) target = $region40
      $region39: #{forward.1} parent=35 // pred_region
        _
      $region40: #{forward.1} parent=35 // pred_fallthru
        _
    $region36: #{forward.1} parent=5 // pred_fallthru
      _
    %p2238 = scmp.le.s32.totalorder 2, %s10
    // Predicated region
    $region41: #{forward.1} parent=5 // pred_check
      %p2239 = pneg %p2238
    $region42: #{forward.1} parent=5 // pred_check_branch
      %2241 = sbr.rel (%p2239) target = $region44
    $region43: #{forward.1} parent=5 // pred_region
      %s2242 = ssub.s32 %s10, 2
      // Predicated region
      $region45: #{forward.1} parent=43 // pred_check
        %p2243 = pneg %p128
      $region46: #{forward.1} parent=43 // pred_check_branch
        %2245 = sbr.rel (%p2243) target = $region48
      $region47: #{forward.1} parent=43 // pred_region
        %p2246 = scmp.lt.s32.totalorder %s16, 1
        %s2247 = scalar_select %p2246, %s16, 1
        %s2248 = smul.addr %s2247, 2
        %s2249 = smul.addr %s2248, 8
        %s2250 = scalar_lea.vmem %s4, %s2249
      $region48: #{forward.1} parent=43 // pred_fallthru
        _
    $region44: #{forward.1} parent=5 // pred_fallthru
      _
  $region6: #{forward.1} parent=0 // loop_footer
    %s14 = sadd.s32 1, %s10
  $region7: #{forward.1} parent=0 // loop_footer_branch
    %9 = sbr.rel target = $region3
  $region8: #{forward.1} parent=0 // loop_exit
    _

</llo_original>
